<compile_context>
chip_gen: v7x
topology: tpu7x:2x2x1
jax: 0.10.0
libtpu: 0.0.40
codegen_flags: <defaults>
</compile_context>

<pallas_src>
import functools

import jax
import jax.numpy as jnp
from jax.experimental import pallas as pl
from jax.experimental.pallas import tpu as pltpu


def _yolo_fused_kernel(stride, nA, nCp5, emb_dim, emb_chunk, nGw, tHW,
                       anchor_vec, pc_ref, out_ref):
    """Per (batch, HW-tile) step.

    pc_ref:  (C, tHW)            channel block: nA*(nC+5) det rows then emb rows
    out_ref: (nA, tHW, 6+emb)    fused channel-last output block
    """
    det_c = nA * nCp5
    emb_off = 6                      # [bx, by, bw, bh, conf, cls] then embedding
    gw_f = float(nGw)

    # ---- grid_x / grid_y for this HW tile, generated in-kernel ----
    hw0 = pl.program_id(1) * tHW
    idx = hw0 + jax.lax.broadcasted_iota(jnp.int32, (1, tHW), 1)
    idx_f = idx.astype(jnp.float32)
    gy = jnp.floor(idx_f * (1.0 / gw_f))
    gx = idx_f - gy * gw_f
    # exact fix for downward rounding at exact multiples of nGw (HW << 2^23)
    fix = gx >= (gw_f - 0.5)
    gy = jnp.where(fix, gy + 1.0, gy)
    gx = jnp.where(fix, gx - gw_f, gx)

    # ---- detection head: tiny masked store into lanes [0, 6) per anchor ----
    for a in range(nA):
        r = a * nCp5
        aw, ah = anchor_vec[a]                      # compile-time constants
        dx = pc_ref[r + 0:r + 1, :]                 # (1, tHW) contiguous rows
        dy = pc_ref[r + 1:r + 2, :]
        dw = pc_ref[r + 2:r + 3, :]
        dh = pc_ref[r + 3:r + 4, :]
        c0 = pc_ref[r + 4:r + 5, :]
        c1 = pc_ref[r + 5:r + 6, :]

        # decode_delta_map followed by "* stride"
        bx = (aw * dx + gx) * stride
        by = (ah * dy + gy) * stride
        bw = (aw * jnp.exp(dw)) * stride
        bh = (ah * jnp.exp(dh)) * stride
        # torch.softmax([c0, c1], dim=1)[:, 1] == sigmoid(c1 - c0)
        conf = 1.0 / (1.0 + jnp.exp(c0 - c1))
        zero = jnp.zeros_like(conf)

        head = jnp.concatenate([bx, by, bw, bh, conf, zero, zero, zero], axis=0)
        head_t = jnp.transpose(head)                # (tHW, 8)
        out_ref[a, :, 0:emb_off] = head_t[:, 0:emb_off]

    # ---- embedding: transpose each chunk ONCE, store to all nA anchors ----
    off = 0
    while off < emb_dim:
        cur = min(emb_chunk, emb_dim - off)
        blk_t = jnp.transpose(pc_ref[det_c + off:det_c + off + cur, :])  # (tHW, cur)
        for a in range(nA):
            out_ref[a, :, emb_off + off:emb_off + off + cur] = blk_t
        off += cur


def yolo_layer_forward(p_cat, anchors, img_size, nA=4, nC=1):
    """Inference forward of YOLOLayer. p_cat is NCHW float32."""
    nB, C, nGh, nGw = p_cat.shape
    nCp5 = nC + 5
    det_c = nA * nCp5
    emb_dim = C - det_c
    HW = nGh * nGw
    D = 6 + emb_dim

    # create_grids
    stride = img_size[0] / nGw
    assert abs(stride - img_size[1] / nGh) < 1e-6
    anchor_vec = tuple((float(aw) / stride, float(ah) / stride)
                       for (aw, ah) in anchors)

    # HW tile: largest 128-multiple (<= 512) dividing HW, else the full extent.
    tHW = HW
    for cand in (512, 384, 256, 128):
        if HW % cand == 0:
            tHW = cand
            break
    nT = HW // tHW
    emb_chunk = 128 if tHW <= 256 else 64   # keep transpose live set in vregs

    # Whole input as (nB, C, HW): pure reshape, no channel-slice HBM copies.
    p_all = p_cat.reshape(nB, C, HW)

    kernel = functools.partial(_yolo_fused_kernel, float(stride), nA, nCp5,
                               emb_dim, emb_chunk, nGw, tHW, anchor_vec)

    out = pl.pallas_call(
        kernel,
        out_shape=jax.ShapeDtypeStruct((nB, nA, HW, D), jnp.float32),
        grid_spec=pltpu.PrefetchScalarGridSpec(
            num_scalar_prefetch=0,
            grid=(nB, nT),
            in_specs=[
                pl.BlockSpec((None, C, tHW), lambda b, t: (b, 0, t)),
            ],
            out_specs=pl.BlockSpec((None, nA, tHW, D),
                                   lambda b, t: (b, 0, t, 0)),
        ),
        compiler_params=pltpu.CompilerParams(
            dimension_semantics=("parallel", "parallel"),
            vmem_limit_bytes=32 * 1024 * 1024),
    )(p_all)

    # Pure metadata reshape -> module's (nB, nA*nGh*nGw, 6+emb_dim).
    return out.reshape(nB, nA * HW, D)


def yolo_layer_reference(p_cat, anchors, img_size, nA=4, nC=1):
    """Pure-JAX reference mirroring the PyTorch forward (inference branch)."""
    nB, C, nGh, nGw = p_cat.shape
    det_c = nA * (nC + 5)
    emb_dim = C - det_c
    stride = img_size[0] / nGw
    anchor_vec = jnp.asarray(anchors, jnp.float32) / stride

    p = p_cat[:, :det_c].reshape(nB, nA, nC + 5, nGh, nGw).transpose(0, 1, 3, 4, 2)
    pemb = p_cat[:, det_c:].transpose(0, 2, 3, 1)

    p_box = p[..., :4]
    conf = jax.nn.softmax(p[..., 4:6], axis=-1)[..., 1:2]

    gxm = jnp.tile(jnp.arange(nGw, dtype=jnp.float32)[None, :], (nGh, 1))
    gym = jnp.tile(jnp.arange(nGh, dtype=jnp.float32)[:, None], (1, nGw))
    aw = anchor_vec[:, 0][None, :, None, None]
    ah = anchor_vec[:, 1][None, :, None, None]
    bx = (aw * p_box[..., 0] + gxm) * stride
    by = (ah * p_box[..., 1] + gym) * stride
    bw = aw * jnp.exp(p_box[..., 2]) * stride
    bh = ah * jnp.exp(p_box[..., 3]) * stride
    box = jnp.stack([bx, by, bw, bh], axis=-1)

    cls = jnp.zeros((nB, nA, nGh, nGw, 1), jnp.float32)
    emb = jnp.broadcast_to(pemb[:, None], (nB, nA, nGh, nGw, emb_dim))
    out = jnp.concatenate([box, conf, cls, emb], axis=-1)
    return out.reshape(nB, nA * nGh * nGw, out.shape[-1])


if __name__ == "__main__":
    key = jax.random.PRNGKey(0)

    # Module implies: nA=4, nC=1 (4*(1+5)=24 detection channels), emb_dim=512.
    nB, nA, nC, emb_dim = 2, 4, 1, 512
    nGh, nGw = 16, 16
    img_size = (128, 128)  # stride = 8
    anchors = [(8.0, 24.0), (11.0, 34.0), (16.0, 48.0), (23.0, 68.0)]

    C = nA * (nC + 5) + emb_dim  # 536
    p_cat = jax.random.normal(key, (nB, C, nGh, nGw), dtype=jnp.float32)

    fwd = jax.jit(functools.partial(yolo_layer_forward, anchors=anchors,
                                    img_size=img_size, nA=nA, nC=nC))
    out = fwd(p_cat)
    out = jax.block_until_ready(out)

    ref = yolo_layer_reference(p_cat, anchors, img_size, nA=nA, nC=nC)
    assert out.shape == (nB, nA * nGh * nGw, 6 + emb_dim), out.shape
    assert jnp.allclose(out, ref, atol=1e-5, rtol=1e-5), "mismatch vs reference"

    print("KERNEL_OK")
</pallas_src>

<mosaic_0001>
module attributes {stable_mosaic.version = 11 : i64} {
  func.func @_yolo_fused_kernel(%arg0: i32, %arg1: i32, %arg2: memref<1x536x256xf32, #tpu.memory_space<vmem>>, %arg3: memref<1x4x256x518xf32, #tpu.memory_space<vmem>>) attributes {dimension_semantics = [#tpu.dimension_semantics<parallel>, #tpu.dimension_semantics<parallel>], iteration_bounds = array<i64: 2, 1>, scalar_prefetch = 0 : i64, scratch_operands = 0 : i64, tpu.core_type = #tpu.core_type<tc>, window_params = [{transform_indices = @transform_0, window_bounds = array<i64: 1, 536, 256>}, {transform_indices = @transform_1, window_bounds = array<i64: 1, 4, 256, 518>}]} {
    %c256_i32 = arith.constant 256 : i32
    %0 = arith.muli %arg1, %c256_i32 : i32
    %1 = tpu.iota {dimensions = array<i32: 1>} : vector<1x256xi32>
    %2 = vector.broadcast %0 : i32 to vector<1x256xi32>
    %3 = arith.addi %2, %1 : vector<1x256xi32>
    %4 = arith.sitofp %3 : vector<1x256xi32> to vector<1x256xf32>
    %cst = arith.constant 6.250000e-02 : f32
    %5 = vector.broadcast %cst : f32 to vector<1x256xf32>
    %6 = arith.mulf %4, %5 : vector<1x256xf32>
    %7 = math.floor %6 : vector<1x256xf32>
    %cst_0 = arith.constant 1.600000e+01 : f32
    %8 = vector.broadcast %cst_0 : f32 to vector<1x256xf32>
    %9 = arith.mulf %7, %8 : vector<1x256xf32>
    %10 = arith.subf %4, %9 : vector<1x256xf32>
    %cst_1 = arith.constant 1.550000e+01 : f32
    %11 = vector.broadcast %cst_1 : f32 to vector<1x256xf32>
    %12 = arith.cmpf oge, %10, %11 : vector<1x256xf32>
    %cst_2 = arith.constant 1.000000e+00 : f32
    %13 = vector.broadcast %cst_2 : f32 to vector<1x256xf32>
    %14 = arith.addf %7, %13 : vector<1x256xf32>
    %15 = arith.select %12, %14, %7 : vector<1x256xi1>, vector<1x256xf32>
    %cst_3 = arith.constant 1.600000e+01 : f32
    %16 = vector.broadcast %cst_3 : f32 to vector<1x256xf32>
    %17 = arith.subf %10, %16 : vector<1x256xf32>
    %18 = arith.select %12, %17, %10 : vector<1x256xi1>, vector<1x256xf32>
    %c0 = arith.constant 0 : index
    %c0_4 = arith.constant 0 : index
    %c0_5 = arith.constant 0 : index
    %19 = vector.load %arg2[%c0, %c0_4, %c0_5] : memref<1x536x256xf32, #tpu.memory_space<vmem>>, vector<1x1x256xf32>
    %20 = vector.shape_cast %19 : vector<1x1x256xf32> to vector<1x256xf32>
    %c0_6 = arith.constant 0 : index
    %c1 = arith.constant 1 : index
    %c0_7 = arith.constant 0 : index
    %21 = vector.load %arg2[%c0_6, %c1, %c0_7] : memref<1x536x256xf32, #tpu.memory_space<vmem>>, vector<1x1x256xf32>
    %22 = vector.shape_cast %21 : vector<1x1x256xf32> to vector<1x256xf32>
    %c0_8 = arith.constant 0 : index
    %c2 = arith.constant 2 : index
    %c0_9 = arith.constant 0 : index
    %23 = vector.load %arg2[%c0_8, %c2, %c0_9] : memref<1x536x256xf32, #tpu.memory_space<vmem>>, vector<1x1x256xf32>
    %24 = vector.shape_cast %23 : vector<1x1x256xf32> to vector<1x256xf32>
    %c0_10 = arith.constant 0 : index
    %c3 = arith.constant 3 : index
    %c0_11 = arith.constant 0 : index
    %25 = vector.load %arg2[%c0_10, %c3, %c0_11] : memref<1x536x256xf32, #tpu.memory_space<vmem>>, vector<1x1x256xf32>
    %26 = vector.shape_cast %25 : vector<1x1x256xf32> to vector<1x256xf32>
    %c0_12 = arith.constant 0 : index
    %c4 = arith.constant 4 : index
    %c0_13 = arith.constant 0 : index
    %27 = vector.load %arg2[%c0_12, %c4, %c0_13] : memref<1x536x256xf32, #tpu.memory_space<vmem>>, vector<1x1x256xf32>
    %28 = vector.shape_cast %27 : vector<1x1x256xf32> to vector<1x256xf32>
    %c0_14 = arith.constant 0 : index
    %c5 = arith.constant 5 : index
    %c0_15 = arith.constant 0 : index
    %29 = vector.load %arg2[%c0_14, %c5, %c0_15] : memref<1x536x256xf32, #tpu.memory_space<vmem>>, vector<1x1x256xf32>
    %30 = vector.shape_cast %29 : vector<1x1x256xf32> to vector<1x256xf32>
    %cst_16 = arith.constant 1.000000e+00 : f32
    %31 = vector.broadcast %cst_16 : f32 to vector<1x256xf32>
    %32 = arith.mulf %31, %20 : vector<1x256xf32>
    %33 = arith.addf %32, %18 : vector<1x256xf32>
    %cst_17 = arith.constant 8.000000e+00 : f32
    %34 = vector.broadcast %cst_17 : f32 to vector<1x256xf32>
    %35 = arith.mulf %33, %34 : vector<1x256xf32>
    %cst_18 = arith.constant 3.000000e+00 : f32
    %36 = vector.broadcast %cst_18 : f32 to vector<1x256xf32>
    %37 = arith.mulf %36, %22 : vector<1x256xf32>
    %38 = arith.addf %37, %15 : vector<1x256xf32>
    %cst_19 = arith.constant 8.000000e+00 : f32
    %39 = vector.broadcast %cst_19 : f32 to vector<1x256xf32>
    %40 = arith.mulf %38, %39 : vector<1x256xf32>
    %41 = math.exp %24 : vector<1x256xf32>
    %cst_20 = arith.constant 1.000000e+00 : f32
    %42 = vector.broadcast %cst_20 : f32 to vector<1x256xf32>
    %43 = arith.mulf %42, %41 : vector<1x256xf32>
    %cst_21 = arith.constant 8.000000e+00 : f32
    %44 = vector.broadcast %cst_21 : f32 to vector<1x256xf32>
    %45 = arith.mulf %43, %44 : vector<1x256xf32>
    %46 = math.exp %26 : vector<1x256xf32>
    %cst_22 = arith.constant 3.000000e+00 : f32
    %47 = vector.broadcast %cst_22 : f32 to vector<1x256xf32>
    %48 = arith.mulf %47, %46 : vector<1x256xf32>
    %cst_23 = arith.constant 8.000000e+00 : f32
    %49 = vector.broadcast %cst_23 : f32 to vector<1x256xf32>
    %50 = arith.mulf %48, %49 : vector<1x256xf32>
    %51 = arith.subf %28, %30 : vector<1x256xf32>
    %52 = math.exp %51 : vector<1x256xf32>
    %cst_24 = arith.constant 1.000000e+00 : f32
    %53 = vector.broadcast %cst_24 : f32 to vector<1x256xf32>
    %54 = arith.addf %53, %52 : vector<1x256xf32>
    %cst_25 = arith.constant 1.000000e+00 : f32
    %55 = vector.broadcast %cst_25 : f32 to vector<1x256xf32>
    %56 = arith.divf %55, %54 : vector<1x256xf32>
    %cst_26 = arith.constant 0.000000e+00 : f32
    %57 = vector.broadcast %cst_26 : f32 to vector<1x256xf32>
    %58 = tpu.concatenate %35, %40, %45, %50, %56, %57, %57, %57 in 0 : vector<1x256xf32>, vector<1x256xf32>, vector<1x256xf32>, vector<1x256xf32>, vector<1x256xf32>, vector<1x256xf32>, vector<1x256xf32>, vector<1x256xf32> -> vector<8x256xf32>
    %59 = tpu.transpose %58, [1, 0] : vector<8x256xf32> -> vector<256x8xf32>
    %60 = vector.extract_strided_slice %59 {offsets = [0, 0], sizes = [256, 6], strides = [1, 1]} : vector<256x8xf32> to vector<256x6xf32>
    %c0_27 = arith.constant 0 : index
    %c0_28 = arith.constant 0 : index
    %c0_29 = arith.constant 0 : index
    %c0_30 = arith.constant 0 : index
    %61 = vector.load %arg3[%c0_27, %c0_28, %c0_29, %c0_30] : memref<1x4x256x518xf32, #tpu.memory_space<vmem>>, vector<1x1x256x6xf32>
    %62 = vector.shape_cast %61 : vector<1x1x256x6xf32> to vector<256x6xf32>
    %63 = vector.shape_cast %60 : vector<256x6xf32> to vector<1x1x256x6xf32>
    tpu.vector_store %arg3[%c0_27, %c0_28, %c0_29, %c0_30], %63 {strides = array<i32>} : memref<1x4x256x518xf32, #tpu.memory_space<vmem>>, vector<1x1x256x6xf32>,
    %c0_31 = arith.constant 0 : index
    %c6 = arith.constant 6 : index
    %c0_32 = arith.constant 0 : index
    %64 = vector.load %arg2[%c0_31, %c6, %c0_32] : memref<1x536x256xf32, #tpu.memory_space<vmem>>, vector<1x1x256xf32>
    %65 = vector.shape_cast %64 : vector<1x1x256xf32> to vector<1x256xf32>
    %c0_33 = arith.constant 0 : index
    %c7 = arith.constant 7 : index
    %c0_34 = arith.constant 0 : index
    %66 = vector.load %arg2[%c0_33, %c7, %c0_34] : memref<1x536x256xf32, #tpu.memory_space<vmem>>, vector<1x1x256xf32>
    %67 = vector.shape_cast %66 : vector<1x1x256xf32> to vector<1x256xf32>
    %c0_35 = arith.constant 0 : index
    %c8 = arith.constant 8 : index
    %c0_36 = arith.constant 0 : index
    %68 = vector.load %arg2[%c0_35, %c8, %c0_36] : memref<1x536x256xf32, #tpu.memory_space<vmem>>, vector<1x1x256xf32>
    %69 = vector.shape_cast %68 : vector<1x1x256xf32> to vector<1x256xf32>
    %c0_37 = arith.constant 0 : index
    %c9 = arith.constant 9 : index
    %c0_38 = arith.constant 0 : index
    %70 = vector.load %arg2[%c0_37, %c9, %c0_38] : memref<1x536x256xf32, #tpu.memory_space<vmem>>, vector<1x1x256xf32>
    %71 = vector.shape_cast %70 : vector<1x1x256xf32> to vector<1x256xf32>
    %c0_39 = arith.constant 0 : index
    %c10 = arith.constant 10 : index
    %c0_40 = arith.constant 0 : index
    %72 = vector.load %arg2[%c0_39, %c10, %c0_40] : memref<1x536x256xf32, #tpu.memory_space<vmem>>, vector<1x1x256xf32>
    %73 = vector.shape_cast %72 : vector<1x1x256xf32> to vector<1x256xf32>
    %c0_41 = arith.constant 0 : index
    %c11 = arith.constant 11 : index
    %c0_42 = arith.constant 0 : index
    %74 = vector.load %arg2[%c0_41, %c11, %c0_42] : memref<1x536x256xf32, #tpu.memory_space<vmem>>, vector<1x1x256xf32>
    %75 = vector.shape_cast %74 : vector<1x1x256xf32> to vector<1x256xf32>
    %cst_43 = arith.constant 1.375000e+00 : f32
    %76 = vector.broadcast %cst_43 : f32 to vector<1x256xf32>
    %77 = arith.mulf %76, %65 : vector<1x256xf32>
    %78 = arith.addf %77, %18 : vector<1x256xf32>
    %cst_44 = arith.constant 8.000000e+00 : f32
    %79 = vector.broadcast %cst_44 : f32 to vector<1x256xf32>
    %80 = arith.mulf %78, %79 : vector<1x256xf32>
    %cst_45 = arith.constant 4.250000e+00 : f32
    %81 = vector.broadcast %cst_45 : f32 to vector<1x256xf32>
    %82 = arith.mulf %81, %67 : vector<1x256xf32>
    %83 = arith.addf %82, %15 : vector<1x256xf32>
    %cst_46 = arith.constant 8.000000e+00 : f32
    %84 = vector.broadcast %cst_46 : f32 to vector<1x256xf32>
    %85 = arith.mulf %83, %84 : vector<1x256xf32>
    %86 = math.exp %69 : vector<1x256xf32>
    %cst_47 = arith.constant 1.375000e+00 : f32
    %87 = vector.broadcast %cst_47 : f32 to vector<1x256xf32>
    %88 = arith.mulf %87, %86 : vector<1x256xf32>
    %cst_48 = arith.constant 8.000000e+00 : f32
    %89 = vector.broadcast %cst_48 : f32 to vector<1x256xf32>
    %90 = arith.mulf %88, %89 : vector<1x256xf32>
    %91 = math.exp %71 : vector<1x256xf32>
    %cst_49 = arith.constant 4.250000e+00 : f32
    %92 = vector.broadcast %cst_49 : f32 to vector<1x256xf32>
    %93 = arith.mulf %92, %91 : vector<1x256xf32>
    %cst_50 = arith.constant 8.000000e+00 : f32
    %94 = vector.broadcast %cst_50 : f32 to vector<1x256xf32>
    %95 = arith.mulf %93, %94 : vector<1x256xf32>
    %96 = arith.subf %73, %75 : vector<1x256xf32>
    %97 = math.exp %96 : vector<1x256xf32>
    %cst_51 = arith.constant 1.000000e+00 : f32
    %98 = vector.broadcast %cst_51 : f32 to vector<1x256xf32>
    %99 = arith.addf %98, %97 : vector<1x256xf32>
    %cst_52 = arith.constant 1.000000e+00 : f32
    %100 = vector.broadcast %cst_52 : f32 to vector<1x256xf32>
    %101 = arith.divf %100, %99 : vector<1x256xf32>
    %cst_53 = arith.constant 0.000000e+00 : f32
    %102 = vector.broadcast %cst_53 : f32 to vector<1x256xf32>
    %103 = tpu.concatenate %80, %85, %90, %95, %101, %102, %102, %102 in 0 : vector<1x256xf32>, vector<1x256xf32>, vector<1x256xf32>, vector<1x256xf32>, vector<1x256xf32>, vector<1x256xf32>, vector<1x256xf32>, vector<1x256xf32> -> vector<8x256xf32>
    %104 = tpu.transpose %103, [1, 0] : vector<8x256xf32> -> vector<256x8xf32>
    %105 = vector.extract_strided_slice %104 {offsets = [0, 0], sizes = [256, 6], strides = [1, 1]} : vector<256x8xf32> to vector<256x6xf32>
    %c0_54 = arith.constant 0 : index
    %c1_55 = arith.constant 1 : index
    %c0_56 = arith.constant 0 : index
    %c0_57 = arith.constant 0 : index
    %106 = vector.load %arg3[%c0_54, %c1_55, %c0_56, %c0_57] : memref<1x4x256x518xf32, #tpu.memory_space<vmem>>, vector<1x1x256x6xf32>
    %107 = vector.shape_cast %106 : vector<1x1x256x6xf32> to vector<256x6xf32>
    %108 = vector.shape_cast %105 : vector<256x6xf32> to vector<1x1x256x6xf32>
    tpu.vector_store %arg3[%c0_54, %c1_55, %c0_56, %c0_57], %108 {strides = array<i32>} : memref<1x4x256x518xf32, #tpu.memory_space<vmem>>, vector<1x1x256x6xf32>,
    %c0_58 = arith.constant 0 : index
    %c12 = arith.constant 12 : index
    %c0_59 = arith.constant 0 : index
    %109 = vector.load %arg2[%c0_58, %c12, %c0_59] : memref<1x536x256xf32, #tpu.memory_space<vmem>>, vector<1x1x256xf32>
    %110 = vector.shape_cast %109 : vector<1x1x256xf32> to vector<1x256xf32>
    %c0_60 = arith.constant 0 : index
    %c13 = arith.constant 13 : index
    %c0_61 = arith.constant 0 : index
    %111 = vector.load %arg2[%c0_60, %c13, %c0_61] : memref<1x536x256xf32, #tpu.memory_space<vmem>>, vector<1x1x256xf32>
    %112 = vector.shape_cast %111 : vector<1x1x256xf32> to vector<1x256xf32>
    %c0_62 = arith.constant 0 : index
    %c14 = arith.constant 14 : index
    %c0_63 = arith.constant 0 : index
    %113 = vector.load %arg2[%c0_62, %c14, %c0_63] : memref<1x536x256xf32, #tpu.memory_space<vmem>>, vector<1x1x256xf32>
    %114 = vector.shape_cast %113 : vector<1x1x256xf32> to vector<1x256xf32>
    %c0_64 = arith.constant 0 : index
    %c15 = arith.constant 15 : index
    %c0_65 = arith.constant 0 : index
    %115 = vector.load %arg2[%c0_64, %c15, %c0_65] : memref<1x536x256xf32, #tpu.memory_space<vmem>>, vector<1x1x256xf32>
    %116 = vector.shape_cast %115 : vector<1x1x256xf32> to vector<1x256xf32>
    %c0_66 = arith.constant 0 : index
    %c16 = arith.constant 16 : index
    %c0_67 = arith.constant 0 : index
    %117 = vector.load %arg2[%c0_66, %c16, %c0_67] : memref<1x536x256xf32, #tpu.memory_space<vmem>>, vector<1x1x256xf32>
    %118 = vector.shape_cast %117 : vector<1x1x256xf32> to vector<1x256xf32>
    %c0_68 = arith.constant 0 : index
    %c17 = arith.constant 17 : index
    %c0_69 = arith.constant 0 : index
    %119 = vector.load %arg2[%c0_68, %c17, %c0_69] : memref<1x536x256xf32, #tpu.memory_space<vmem>>, vector<1x1x256xf32>
    %120 = vector.shape_cast %119 : vector<1x1x256xf32> to vector<1x256xf32>
    %cst_70 = arith.constant 2.000000e+00 : f32
    %121 = vector.broadcast %cst_70 : f32 to vector<1x256xf32>
    %122 = arith.mulf %121, %110 : vector<1x256xf32>
    %123 = arith.addf %122, %18 : vector<1x256xf32>
    %cst_71 = arith.constant 8.000000e+00 : f32
    %124 = vector.broadcast %cst_71 : f32 to vector<1x256xf32>
    %125 = arith.mulf %123, %124 : vector<1x256xf32>
    %cst_72 = arith.constant 6.000000e+00 : f32
    %126 = vector.broadcast %cst_72 : f32 to vector<1x256xf32>
    %127 = arith.mulf %126, %112 : vector<1x256xf32>
    %128 = arith.addf %127, %15 : vector<1x256xf32>
    %cst_73 = arith.constant 8.000000e+00 : f32
    %129 = vector.broadcast %cst_73 : f32 to vector<1x256xf32>
    %130 = arith.mulf %128, %129 : vector<1x256xf32>
    %131 = math.exp %114 : vector<1x256xf32>
    %cst_74 = arith.constant 2.000000e+00 : f32
    %132 = vector.broadcast %cst_74 : f32 to vector<1x256xf32>
    %133 = arith.mulf %132, %131 : vector<1x256xf32>
    %cst_75 = arith.constant 8.000000e+00 : f32
    %134 = vector.broadcast %cst_75 : f32 to vector<1x256xf32>
    %135 = arith.mulf %133, %134 : vector<1x256xf32>
    %136 = math.exp %116 : vector<1x256xf32>
    %cst_76 = arith.constant 6.000000e+00 : f32
    %137 = vector.broadcast %cst_76 : f32 to vector<1x256xf32>
    %138 = arith.mulf %137, %136 : vector<1x256xf32>
    %cst_77 = arith.constant 8.000000e+00 : f32
    %139 = vector.broadcast %cst_77 : f32 to vector<1x256xf32>
    %140 = arith.mulf %138, %139 : vector<1x256xf32>
    %141 = arith.subf %118, %120 : vector<1x256xf32>
    %142 = math.exp %141 : vector<1x256xf32>
    %cst_78 = arith.constant 1.000000e+00 : f32
    %143 = vector.broadcast %cst_78 : f32 to vector<1x256xf32>
    %144 = arith.addf %143, %142 : vector<1x256xf32>
    %cst_79 = arith.constant 1.000000e+00 : f32
    %145 = vector.broadcast %cst_79 : f32 to vector<1x256xf32>
    %146 = arith.divf %145, %144 : vector<1x256xf32>
    %cst_80 = arith.constant 0.000000e+00 : f32
    %147 = vector.broadcast %cst_80 : f32 to vector<1x256xf32>
    %148 = tpu.concatenate %125, %130, %135, %140, %146, %147, %147, %147 in 0 : vector<1x256xf32>, vector<1x256xf32>, vector<1x256xf32>, vector<1x256xf32>, vector<1x256xf32>, vector<1x256xf32>, vector<1x256xf32>, vector<1x256xf32> -> vector<8x256xf32>
    %149 = tpu.transpose %148, [1, 0] : vector<8x256xf32> -> vector<256x8xf32>
    %150 = vector.extract_strided_slice %149 {offsets = [0, 0], sizes = [256, 6], strides = [1, 1]} : vector<256x8xf32> to vector<256x6xf32>
    %c0_81 = arith.constant 0 : index
    %c2_82 = arith.constant 2 : index
    %c0_83 = arith.constant 0 : index
    %c0_84 = arith.constant 0 : index
    %151 = vector.load %arg3[%c0_81, %c2_82, %c0_83, %c0_84] : memref<1x4x256x518xf32, #tpu.memory_space<vmem>>, vector<1x1x256x6xf32>
    %152 = vector.shape_cast %151 : vector<1x1x256x6xf32> to vector<256x6xf32>
    %153 = vector.shape_cast %150 : vector<256x6xf32> to vector<1x1x256x6xf32>
    tpu.vector_store %arg3[%c0_81, %c2_82, %c0_83, %c0_84], %153 {strides = array<i32>} : memref<1x4x256x518xf32, #tpu.memory_space<vmem>>, vector<1x1x256x6xf32>,
    %c0_85 = arith.constant 0 : index
    %c18 = arith.constant 18 : index
    %c0_86 = arith.constant 0 : index
    %154 = vector.load %arg2[%c0_85, %c18, %c0_86] : memref<1x536x256xf32, #tpu.memory_space<vmem>>, vector<1x1x256xf32>
    %155 = vector.shape_cast %154 : vector<1x1x256xf32> to vector<1x256xf32>
    %c0_87 = arith.constant 0 : index
    %c19 = arith.constant 19 : index
    %c0_88 = arith.constant 0 : index
    %156 = vector.load %arg2[%c0_87, %c19, %c0_88] : memref<1x536x256xf32, #tpu.memory_space<vmem>>, vector<1x1x256xf32>
    %157 = vector.shape_cast %156 : vector<1x1x256xf32> to vector<1x256xf32>
    %c0_89 = arith.constant 0 : index
    %c20 = arith.constant 20 : index
    %c0_90 = arith.constant 0 : index
    %158 = vector.load %arg2[%c0_89, %c20, %c0_90] : memref<1x536x256xf32, #tpu.memory_space<vmem>>, vector<1x1x256xf32>
    %159 = vector.shape_cast %158 : vector<1x1x256xf32> to vector<1x256xf32>
    %c0_91 = arith.constant 0 : index
    %c21 = arith.constant 21 : index
    %c0_92 = arith.constant 0 : index
    %160 = vector.load %arg2[%c0_91, %c21, %c0_92] : memref<1x536x256xf32, #tpu.memory_space<vmem>>, vector<1x1x256xf32>
    %161 = vector.shape_cast %160 : vector<1x1x256xf32> to vector<1x256xf32>
    %c0_93 = arith.constant 0 : index
    %c22 = arith.constant 22 : index
    %c0_94 = arith.constant 0 : index
    %162 = vector.load %arg2[%c0_93, %c22, %c0_94] : memref<1x536x256xf32, #tpu.memory_space<vmem>>, vector<1x1x256xf32>
    %163 = vector.shape_cast %162 : vector<1x1x256xf32> to vector<1x256xf32>
    %c0_95 = arith.constant 0 : index
    %c23 = arith.constant 23 : index
    %c0_96 = arith.constant 0 : index
    %164 = vector.load %arg2[%c0_95, %c23, %c0_96] : memref<1x536x256xf32, #tpu.memory_space<vmem>>, vector<1x1x256xf32>
    %165 = vector.shape_cast %164 : vector<1x1x256xf32> to vector<1x256xf32>
    %cst_97 = arith.constant 2.875000e+00 : f32
    %166 = vector.broadcast %cst_97 : f32 to vector<1x256xf32>
    %167 = arith.mulf %166, %155 : vector<1x256xf32>
    %168 = arith.addf %167, %18 : vector<1x256xf32>
    %cst_98 = arith.constant 8.000000e+00 : f32
    %169 = vector.broadcast %cst_98 : f32 to vector<1x256xf32>
    %170 = arith.mulf %168, %169 : vector<1x256xf32>
    %cst_99 = arith.constant 8.500000e+00 : f32
    %171 = vector.broadcast %cst_99 : f32 to vector<1x256xf32>
    %172 = arith.mulf %171, %157 : vector<1x256xf32>
    %173 = arith.addf %172, %15 : vector<1x256xf32>
    %cst_100 = arith.constant 8.000000e+00 : f32
    %174 = vector.broadcast %cst_100 : f32 to vector<1x256xf32>
    %175 = arith.mulf %173, %174 : vector<1x256xf32>
    %176 = math.exp %159 : vector<1x256xf32>
    %cst_101 = arith.constant 2.875000e+00 : f32
    %177 = vector.broadcast %cst_101 : f32 to vector<1x256xf32>
    %178 = arith.mulf %177, %176 : vector<1x256xf32>
    %cst_102 = arith.constant 8.000000e+00 : f32
    %179 = vector.broadcast %cst_102 : f32 to vector<1x256xf32>
    %180 = arith.mulf %178, %179 : vector<1x256xf32>
    %181 = math.exp %161 : vector<1x256xf32>
    %cst_103 = arith.constant 8.500000e+00 : f32
    %182 = vector.broadcast %cst_103 : f32 to vector<1x256xf32>
    %183 = arith.mulf %182, %181 : vector<1x256xf32>
    %cst_104 = arith.constant 8.000000e+00 : f32
    %184 = vector.broadcast %cst_104 : f32 to vector<1x256xf32>
    %185 = arith.mulf %183, %184 : vector<1x256xf32>
    %186 = arith.subf %163, %165 : vector<1x256xf32>
    %187 = math.exp %186 : vector<1x256xf32>
    %cst_105 = arith.constant 1.000000e+00 : f32
    %188 = vector.broadcast %cst_105 : f32 to vector<1x256xf32>
    %189 = arith.addf %188, %187 : vector<1x256xf32>
    %cst_106 = arith.constant 1.000000e+00 : f32
    %190 = vector.broadcast %cst_106 : f32 to vector<1x256xf32>
    %191 = arith.divf %190, %189 : vector<1x256xf32>
    %cst_107 = arith.constant 0.000000e+00 : f32
    %192 = vector.broadcast %cst_107 : f32 to vector<1x256xf32>
    %193 = tpu.concatenate %170, %175, %180, %185, %191, %192, %192, %192 in 0 : vector<1x256xf32>, vector<1x256xf32>, vector<1x256xf32>, vector<1x256xf32>, vector<1x256xf32>, vector<1x256xf32>, vector<1x256xf32>, vector<1x256xf32> -> vector<8x256xf32>
    %194 = tpu.transpose %193, [1, 0] : vector<8x256xf32> -> vector<256x8xf32>
    %195 = vector.extract_strided_slice %194 {offsets = [0, 0], sizes = [256, 6], strides = [1, 1]} : vector<256x8xf32> to vector<256x6xf32>
    %c0_108 = arith.constant 0 : index
    %c3_109 = arith.constant 3 : index
    %c0_110 = arith.constant 0 : index
    %c0_111 = arith.constant 0 : index
    %196 = vector.load %arg3[%c0_108, %c3_109, %c0_110, %c0_111] : memref<1x4x256x518xf32, #tpu.memory_space<vmem>>, vector<1x1x256x6xf32>
    %197 = vector.shape_cast %196 : vector<1x1x256x6xf32> to vector<256x6xf32>
    %198 = vector.shape_cast %195 : vector<256x6xf32> to vector<1x1x256x6xf32>
    tpu.vector_store %arg3[%c0_108, %c3_109, %c0_110, %c0_111], %198 {strides = array<i32>} : memref<1x4x256x518xf32, #tpu.memory_space<vmem>>, vector<1x1x256x6xf32>,
    %c0_112 = arith.constant 0 : index
    %c24 = arith.constant 24 : index
    %c0_113 = arith.constant 0 : index
    %199 = vector.load %arg2[%c0_112, %c24, %c0_113] : memref<1x536x256xf32, #tpu.memory_space<vmem>>, vector<1x128x256xf32>
    %200 = vector.shape_cast %199 : vector<1x128x256xf32> to vector<128x256xf32>
    %201 = tpu.transpose %200, [1, 0] : vector<128x256xf32> -> vector<256x128xf32>
    %c0_114 = arith.constant 0 : index
    %c0_115 = arith.constant 0 : index
    %c0_116 = arith.constant 0 : index
    %c6_117 = arith.constant 6 : index
    %202 = vector.load %arg3[%c0_114, %c0_115, %c0_116, %c6_117] : memref<1x4x256x518xf32, #tpu.memory_space<vmem>>, vector<1x1x256x128xf32>
    %203 = vector.shape_cast %202 : vector<1x1x256x128xf32> to vector<256x128xf32>
    %204 = vector.shape_cast %201 : vector<256x128xf32> to vector<1x1x256x128xf32>
    tpu.vector_store %arg3[%c0_114, %c0_115, %c0_116, %c6_117], %204 {strides = array<i32>} : memref<1x4x256x518xf32, #tpu.memory_space<vmem>>, vector<1x1x256x128xf32>,
    %c0_118 = arith.constant 0 : index
    %c1_119 = arith.constant 1 : index
    %c0_120 = arith.constant 0 : index
    %c6_121 = arith.constant 6 : index
    %205 = vector.load %arg3[%c0_118, %c1_119, %c0_120, %c6_121] : memref<1x4x256x518xf32, #tpu.memory_space<vmem>>, vector<1x1x256x128xf32>
    %206 = vector.shape_cast %205 : vector<1x1x256x128xf32> to vector<256x128xf32>
    %207 = vector.shape_cast %201 : vector<256x128xf32> to vector<1x1x256x128xf32>
    tpu.vector_store %arg3[%c0_118, %c1_119, %c0_120, %c6_121], %207 {strides = array<i32>} : memref<1x4x256x518xf32, #tpu.memory_space<vmem>>, vector<1x1x256x128xf32>,
    %c0_122 = arith.constant 0 : index
    %c2_123 = arith.constant 2 : index
    %c0_124 = arith.constant 0 : index
    %c6_125 = arith.constant 6 : index
    %208 = vector.load %arg3[%c0_122, %c2_123, %c0_124, %c6_125] : memref<1x4x256x518xf32, #tpu.memory_space<vmem>>, vector<1x1x256x128xf32>
    %209 = vector.shape_cast %208 : vector<1x1x256x128xf32> to vector<256x128xf32>
    %210 = vector.shape_cast %201 : vector<256x128xf32> to vector<1x1x256x128xf32>
    tpu.vector_store %arg3[%c0_122, %c2_123, %c0_124, %c6_125], %210 {strides = array<i32>} : memref<1x4x256x518xf32, #tpu.memory_space<vmem>>, vector<1x1x256x128xf32>,
    %c0_126 = arith.constant 0 : index
    %c3_127 = arith.constant 3 : index
    %c0_128 = arith.constant 0 : index
    %c6_129 = arith.constant 6 : index
    %211 = vector.load %arg3[%c0_126, %c3_127, %c0_128, %c6_129] : memref<1x4x256x518xf32, #tpu.memory_space<vmem>>, vector<1x1x256x128xf32>
    %212 = vector.shape_cast %211 : vector<1x1x256x128xf32> to vector<256x128xf32>
    %213 = vector.shape_cast %201 : vector<256x128xf32> to vector<1x1x256x128xf32>
    tpu.vector_store %arg3[%c0_126, %c3_127, %c0_128, %c6_129], %213 {strides = array<i32>} : memref<1x4x256x518xf32, #tpu.memory_space<vmem>>, vector<1x1x256x128xf32>,
    %c0_130 = arith.constant 0 : index
    %c152 = arith.constant 152 : index
    %c0_131 = arith.constant 0 : index
    %214 = vector.load %arg2[%c0_130, %c152, %c0_131] : memref<1x536x256xf32, #tpu.memory_space<vmem>>, vector<1x128x256xf32>
    %215 = vector.shape_cast %214 : vector<1x128x256xf32> to vector<128x256xf32>
    %216 = tpu.transpose %215, [1, 0] : vector<128x256xf32> -> vector<256x128xf32>
    %c0_132 = arith.constant 0 : index
    %c0_133 = arith.constant 0 : index
    %c0_134 = arith.constant 0 : index
    %c134 = arith.constant 134 : index
    %217 = vector.load %arg3[%c0_132, %c0_133, %c0_134, %c134] : memref<1x4x256x518xf32, #tpu.memory_space<vmem>>, vector<1x1x256x128xf32>
    %218 = vector.shape_cast %217 : vector<1x1x256x128xf32> to vector<256x128xf32>
    %219 = vector.shape_cast %216 : vector<256x128xf32> to vector<1x1x256x128xf32>
    tpu.vector_store %arg3[%c0_132, %c0_133, %c0_134, %c134], %219 {strides = array<i32>} : memref<1x4x256x518xf32, #tpu.memory_space<vmem>>, vector<1x1x256x128xf32>,
    %c0_135 = arith.constant 0 : index
    %c1_136 = arith.constant 1 : index
    %c0_137 = arith.constant 0 : index
    %c134_138 = arith.constant 134 : index
    %220 = vector.load %arg3[%c0_135, %c1_136, %c0_137, %c134_138] : memref<1x4x256x518xf32, #tpu.memory_space<vmem>>, vector<1x1x256x128xf32>
    %221 = vector.shape_cast %220 : vector<1x1x256x128xf32> to vector<256x128xf32>
    %222 = vector.shape_cast %216 : vector<256x128xf32> to vector<1x1x256x128xf32>
    tpu.vector_store %arg3[%c0_135, %c1_136, %c0_137, %c134_138], %222 {strides = array<i32>} : memref<1x4x256x518xf32, #tpu.memory_space<vmem>>, vector<1x1x256x128xf32>,
    %c0_139 = arith.constant 0 : index
    %c2_140 = arith.constant 2 : index
    %c0_141 = arith.constant 0 : index
    %c134_142 = arith.constant 134 : index
    %223 = vector.load %arg3[%c0_139, %c2_140, %c0_141, %c134_142] : memref<1x4x256x518xf32, #tpu.memory_space<vmem>>, vector<1x1x256x128xf32>
    %224 = vector.shape_cast %223 : vector<1x1x256x128xf32> to vector<256x128xf32>
    %225 = vector.shape_cast %216 : vector<256x128xf32> to vector<1x1x256x128xf32>
    tpu.vector_store %arg3[%c0_139, %c2_140, %c0_141, %c134_142], %225 {strides = array<i32>} : memref<1x4x256x518xf32, #tpu.memory_space<vmem>>, vector<1x1x256x128xf32>,
    %c0_143 = arith.constant 0 : index
    %c3_144 = arith.constant 3 : index
    %c0_145 = arith.constant 0 : index
    %c134_146 = arith.constant 134 : index
    %226 = vector.load %arg3[%c0_143, %c3_144, %c0_145, %c134_146] : memref<1x4x256x518xf32, #tpu.memory_space<vmem>>, vector<1x1x256x128xf32>
    %227 = vector.shape_cast %226 : vector<1x1x256x128xf32> to vector<256x128xf32>
    %228 = vector.shape_cast %216 : vector<256x128xf32> to vector<1x1x256x128xf32>
    tpu.vector_store %arg3[%c0_143, %c3_144, %c0_145, %c134_146], %228 {strides = array<i32>} : memref<1x4x256x518xf32, #tpu.memory_space<vmem>>, vector<1x1x256x128xf32>,
    %c0_147 = arith.constant 0 : index
    %c280 = arith.constant 280 : index
    %c0_148 = arith.constant 0 : index
    %229 = vector.load %arg2[%c0_147, %c280, %c0_148] : memref<1x536x256xf32, #tpu.memory_space<vmem>>, vector<1x128x256xf32>
    %230 = vector.shape_cast %229 : vector<1x128x256xf32> to vector<128x256xf32>
    %231 = tpu.transpose %230, [1, 0] : vector<128x256xf32> -> vector<256x128xf32>
    %c0_149 = arith.constant 0 : index
    %c0_150 = arith.constant 0 : index
    %c0_151 = arith.constant 0 : index
    %c262 = arith.constant 262 : index
    %232 = vector.load %arg3[%c0_149, %c0_150, %c0_151, %c262] : memref<1x4x256x518xf32, #tpu.memory_space<vmem>>, vector<1x1x256x128xf32>
    %233 = vector.shape_cast %232 : vector<1x1x256x128xf32> to vector<256x128xf32>
    %234 = vector.shape_cast %231 : vector<256x128xf32> to vector<1x1x256x128xf32>
    tpu.vector_store %arg3[%c0_149, %c0_150, %c0_151, %c262], %234 {strides = array<i32>} : memref<1x4x256x518xf32, #tpu.memory_space<vmem>>, vector<1x1x256x128xf32>,
    %c0_152 = arith.constant 0 : index
    %c1_153 = arith.constant 1 : index
    %c0_154 = arith.constant 0 : index
    %c262_155 = arith.constant 262 : index
    %235 = vector.load %arg3[%c0_152, %c1_153, %c0_154, %c262_155] : memref<1x4x256x518xf32, #tpu.memory_space<vmem>>, vector<1x1x256x128xf32>
    %236 = vector.shape_cast %235 : vector<1x1x256x128xf32> to vector<256x128xf32>
    %237 = vector.shape_cast %231 : vector<256x128xf32> to vector<1x1x256x128xf32>
    tpu.vector_store %arg3[%c0_152, %c1_153, %c0_154, %c262_155], %237 {strides = array<i32>} : memref<1x4x256x518xf32, #tpu.memory_space<vmem>>, vector<1x1x256x128xf32>,
    %c0_156 = arith.constant 0 : index
    %c2_157 = arith.constant 2 : index
    %c0_158 = arith.constant 0 : index
    %c262_159 = arith.constant 262 : index
    %238 = vector.load %arg3[%c0_156, %c2_157, %c0_158, %c262_159] : memref<1x4x256x518xf32, #tpu.memory_space<vmem>>, vector<1x1x256x128xf32>
    %239 = vector.shape_cast %238 : vector<1x1x256x128xf32> to vector<256x128xf32>
    %240 = vector.shape_cast %231 : vector<256x128xf32> to vector<1x1x256x128xf32>
    tpu.vector_store %arg3[%c0_156, %c2_157, %c0_158, %c262_159], %240 {strides = array<i32>} : memref<1x4x256x518xf32, #tpu.memory_space<vmem>>, vector<1x1x256x128xf32>,
    %c0_160 = arith.constant 0 : index
    %c3_161 = arith.constant 3 : index
    %c0_162 = arith.constant 0 : index
    %c262_163 = arith.constant 262 : index
    %241 = vector.load %arg3[%c0_160, %c3_161, %c0_162, %c262_163] : memref<1x4x256x518xf32, #tpu.memory_space<vmem>>, vector<1x1x256x128xf32>
    %242 = vector.shape_cast %241 : vector<1x1x256x128xf32> to vector<256x128xf32>
    %243 = vector.shape_cast %231 : vector<256x128xf32> to vector<1x1x256x128xf32>
    tpu.vector_store %arg3[%c0_160, %c3_161, %c0_162, %c262_163], %243 {strides = array<i32>} : memref<1x4x256x518xf32, #tpu.memory_space<vmem>>, vector<1x1x256x128xf32>,
    %c0_164 = arith.constant 0 : index
    %c408 = arith.constant 408 : index
    %c0_165 = arith.constant 0 : index
    %244 = vector.load %arg2[%c0_164, %c408, %c0_165] : memref<1x536x256xf32, #tpu.memory_space<vmem>>, vector<1x128x256xf32>
    %245 = vector.shape_cast %244 : vector<1x128x256xf32> to vector<128x256xf32>
    %246 = tpu.transpose %245, [1, 0] : vector<128x256xf32> -> vector<256x128xf32>
    %c0_166 = arith.constant 0 : index
    %c0_167 = arith.constant 0 : index
    %c0_168 = arith.constant 0 : index
    %c390 = arith.constant 390 : index
    %247 = vector.load %arg3[%c0_166, %c0_167, %c0_168, %c390] : memref<1x4x256x518xf32, #tpu.memory_space<vmem>>, vector<1x1x256x128xf32>
    %248 = vector.shape_cast %247 : vector<1x1x256x128xf32> to vector<256x128xf32>
    %249 = vector.shape_cast %246 : vector<256x128xf32> to vector<1x1x256x128xf32>
    tpu.vector_store %arg3[%c0_166, %c0_167, %c0_168, %c390], %249 {strides = array<i32>} : memref<1x4x256x518xf32, #tpu.memory_space<vmem>>, vector<1x1x256x128xf32>,
    %c0_169 = arith.constant 0 : index
    %c1_170 = arith.constant 1 : index
    %c0_171 = arith.constant 0 : index
    %c390_172 = arith.constant 390 : index
    %250 = vector.load %arg3[%c0_169, %c1_170, %c0_171, %c390_172] : memref<1x4x256x518xf32, #tpu.memory_space<vmem>>, vector<1x1x256x128xf32>
    %251 = vector.shape_cast %250 : vector<1x1x256x128xf32> to vector<256x128xf32>
    %252 = vector.shape_cast %246 : vector<256x128xf32> to vector<1x1x256x128xf32>
    tpu.vector_store %arg3[%c0_169, %c1_170, %c0_171, %c390_172], %252 {strides = array<i32>} : memref<1x4x256x518xf32, #tpu.memory_space<vmem>>, vector<1x1x256x128xf32>,
    %c0_173 = arith.constant 0 : index
    %c2_174 = arith.constant 2 : index
    %c0_175 = arith.constant 0 : index
    %c390_176 = arith.constant 390 : index
    %253 = vector.load %arg3[%c0_173, %c2_174, %c0_175, %c390_176] : memref<1x4x256x518xf32, #tpu.memory_space<vmem>>, vector<1x1x256x128xf32>
    %254 = vector.shape_cast %253 : vector<1x1x256x128xf32> to vector<256x128xf32>
    %255 = vector.shape_cast %246 : vector<256x128xf32> to vector<1x1x256x128xf32>
    tpu.vector_store %arg3[%c0_173, %c2_174, %c0_175, %c390_176], %255 {strides = array<i32>} : memref<1x4x256x518xf32, #tpu.memory_space<vmem>>, vector<1x1x256x128xf32>,
    %c0_177 = arith.constant 0 : index
    %c3_178 = arith.constant 3 : index
    %c0_179 = arith.constant 0 : index
    %c390_180 = arith.constant 390 : index
    %256 = vector.load %arg3[%c0_177, %c3_178, %c0_179, %c390_180] : memref<1x4x256x518xf32, #tpu.memory_space<vmem>>, vector<1x1x256x128xf32>
    %257 = vector.shape_cast %256 : vector<1x1x256x128xf32> to vector<256x128xf32>
    %258 = vector.shape_cast %246 : vector<256x128xf32> to vector<1x1x256x128xf32>
    tpu.vector_store %arg3[%c0_177, %c3_178, %c0_179, %c390_180], %258 {strides = array<i32>} : memref<1x4x256x518xf32, #tpu.memory_space<vmem>>, vector<1x1x256x128xf32>,
    return
  }
  func.func @transform_0(%arg0: i32, %arg1: i32) -> (i32, i32, i32) {
    %c0_i32 = arith.constant 0 : i32
    %c0_i32_0 = arith.constant 0 : i32
    return %arg0, %c0_i32, %arg1 : i32, i32, i32
  }
  func.func @transform_1(%arg0: i32, %arg1: i32) -> (i32, i32, i32, i32) {
    %c0_i32 = arith.constant 0 : i32
    %c0_i32_0 = arith.constant 0 : i32
    %c0_i32_1 = arith.constant 0 : i32
    return %arg0, %c0_i32, %arg1, %c0_i32_0 : i32, i32, i32, i32
  }
}

</mosaic_0001>

<llo_original>
// kernel: yolo_layer_forward.1
$region0: #{yolo_layer_forward.1}
  #allocation0 [shape = 'u32[]', space=smem, size = 0x4, offset = 0x4, fixed_abs, tag = 'smem constant byte address 0x4 - core index']
  #allocation1 [shape = 'u32[144,128]{1,0:T(1,128)}', space=vmem, size = 0x12000, scoped, tag = 'internal scratch']
  %s0 = inlined_call_operand.vmem [shape: f32[2,536,256], index: 0, kind: input, shape index: {}]
  %s1 = inlined_call_operand.vmem [shape: f32[2,4,256,518], index: 1, kind: output, shape index: {}]
  %s2 = sld [smem:[#allocation0]]
  $region37: #{yolo_layer_forward.1} parent=0
    _
  %s4 = ssub.s32 1, %s2
  %s5 = scalar_select 0, %s4, %s2
  loop: start=0, step=1, limit=4
  $region2: #{yolo_layer_forward.1} parent=0 // loop_pre_header
    _
  $region3: #{yolo_layer_forward.1} parent=0 // loop_header
    %s7 = sphi 0, %s11
    %p8 = scmp.ge.s32.totalorder %s7, 4
    %s14 = sphi 0, %s26
    %s15 = sphi 0, %s22
    %s16 = sphi 0, %s14
    %s17 = sphi 0, %s15
    %s18 = sphi 0, %s16
    %s19 = sphi 0, %s17
    %s31 = sphi 0, %s33
    %s34 = sphi 0, %s31
    %s35 = sphi 0, %s34
    %s51 = sphi 0, %s35
    %s59 = sphi 0, %s61
    %s62 = sphi 0, %s59
    %s63 = sphi 0, %s62
    %s79 = sphi 0, %s63
  $region4: #{yolo_layer_forward.1} parent=0 // loop_header_branch
    %10 = sbr.rel (%p8) target = $region8
  $region5: #{yolo_layer_forward.1} parent=0 // loop_body
    %s12 = ssub.s32 %s7, 1
    %s13 = ssub.s32 %s7, 2
    %s20 = sadd.s32 1, %s15
    %p21 = scmp.ge.s32.totalorder %s20, 1
    %s22 = scalar_select %p21, 0, %s20
    %s23 = sadd.s32 1, %s14
    %s24 = scalar_select %p21, %s23, %s14
    %p25 = scmp.ge.s32.totalorder %s24, 2
    %s26 = scalar_select %p25, 0, %s24
    %s27 = ssub.s32 %s14, %s26
    %s28 = ssub.s32 %s15, %s22
    %s29 = sor.u32 %s27, %s28
    %p30 = scmp.eq.s32.totalorder %s29, 0
    %s32 = sadd.s32 %s31, 1
    %s33 = scalar_select %p30, %s31, %s32
    %p36 = pneg %p30
    %p37 = scmp.eq.s32.totalorder %s7, 1
    %p38 = por %p36, %p37
    %p39 = scmp.ne.s32.totalorder %s31, %s34
    %p40 = scmp.eq.s32.totalorder %s7, 0
    %p41 = por %p39, %p40
    %p42 = scmp.ne.s32.totalorder %s31, %s34
    %p43 = scmp.eq.s32.totalorder %s12, 1
    %p44 = por %p42, %p43
    %p45 = scmp.ne.s32.totalorder %s34, %s35
    %p46 = scmp.eq.s32.totalorder %s12, 0
    %p47 = por %p45, %p46
    %p48 = scmp.ne.s32.totalorder %s34, %s35
    %p49 = scmp.eq.s32.totalorder %s13, 1
    %p50 = por %p48, %p49
    %p52 = scmp.ne.s32.totalorder %s35, %s51
    %p53 = scmp.eq.s32.totalorder %s13, 0
    %p54 = por %p52, %p53
    %s55 = ssub.s32 %s14, %s26
    %s56 = ssub.s32 %s15, %s22
    %s57 = sor.u32 %s55, %s56
    %p58 = scmp.eq.s32.totalorder %s57, 0
    %s60 = sadd.s32 %s59, 1
    %s61 = scalar_select %p58, %s59, %s60
    %p64 = pneg %p58
    %p65 = scmp.eq.s32.totalorder %s7, 1
    %p66 = por %p64, %p65
    %p67 = scmp.ne.s32.totalorder %s59, %s62
    %p68 = scmp.eq.s32.totalorder %s7, 0
    %p69 = por %p67, %p68
    %p70 = scmp.ne.s32.totalorder %s59, %s62
    %p71 = scmp.eq.s32.totalorder %s12, 1
    %p72 = por %p70, %p71
    %p73 = scmp.ne.s32.totalorder %s62, %s63
    %p74 = scmp.eq.s32.totalorder %s12, 0
    %p75 = por %p73, %p74
    %p76 = scmp.ne.s32.totalorder %s62, %s63
    %p77 = scmp.eq.s32.totalorder %s13, 1
    %p78 = por %p76, %p77
    %p80 = scmp.ne.s32.totalorder %s63, %s79
    %p81 = scmp.eq.s32.totalorder %s13, 0
    %p82 = por %p80, %p81
    %p83 = scmp.le.s32.totalorder 1, %s7
    %p84 = scmp.lt.s32.totalorder %s7, 3
    %p85 = pnand %p83, %p84
    %p86 = pneg %p85
    // Predicated region
    $region9: #{yolo_layer_forward.1} parent=5 // pred_check
      _
    $region10: #{yolo_layer_forward.1} parent=5 // pred_check_branch
      %88 = sbr.rel (%p85) target = $region12
    $region11: #{yolo_layer_forward.1} parent=5 // pred_region
      %s89 = ssub.s32 %s7, 1
    $region12: #{yolo_layer_forward.1} parent=5 // pred_fallthru
      _
    %p90 = scmp.lt.s32.totalorder %s7, 2
    // Predicated region
    $region13: #{yolo_layer_forward.1} parent=5 // pred_check
      %p91 = pneg %p90
    $region14: #{yolo_layer_forward.1} parent=5 // pred_check_branch
      %93 = sbr.rel (%p91) target = $region16
    $region15: #{yolo_layer_forward.1} parent=5 // pred_region
      // Predicated region
      $region17: #{yolo_layer_forward.1} parent=15 // pred_check
        %p94 = pneg %p41
      $region18: #{yolo_layer_forward.1} parent=15 // pred_check_branch
        %96 = sbr.rel (%p94) target = $region20
      $region19: #{yolo_layer_forward.1} parent=15 // pred_region
        %s97 = smul.u32 2, %s15
        %p98 = scmp.lt.s32.totalorder %s14, 1
        %s99 = scalar_select %p98, %s14, 1
        %p100 = scmp.lt.s32.totalorder %s97, 1
        %s101 = scalar_select %p100, %s97, 1
        %s102 = smul.addr %s99, 134
        %s103 = sadd.s32 %s101, %s102
        %s104 = smul.addr %s103, 8
        %s105 = scalar_lea.vmem %s0, %s104
        %s106 = smul.u32 2, %s15
      $region20: #{yolo_layer_forward.1} parent=15 // pred_fallthru
        _
    $region16: #{yolo_layer_forward.1} parent=5 // pred_fallthru
      _
    %p107 = scmp.le.s32.totalorder 1, %s7
    %p108 = scmp.lt.s32.totalorder %s7, 3
    %p109 = pnand %p107, %p108
    %p110 = pneg %p109
    // Predicated region
    $region21: #{yolo_layer_forward.1} parent=5 // pred_check
      _
    $region22: #{yolo_layer_forward.1} parent=5 // pred_check_branch
      %112 = sbr.rel (%p109) target = $region24
    $region23: #{yolo_layer_forward.1} parent=5 // pred_region
      %s113 = ssub.s32 %s7, 1
      %s114 = smul.u32 2, %s17
      %p115 = scmp.lt.s32.totalorder %s16, 1
      %s116 = scalar_select %p115, %s16, 1
      %p117 = scmp.lt.s32.totalorder %s114, 1
      %s118 = scalar_select %p117, %s114, 1
      %s119 = smul.addr %s116, 134
      %s120 = sadd.s32 %s118, %s119
      %s121 = smul.addr %s120, 8
      %s122 = scalar_lea.vmem %s0, %s121
      %p123 = pneg %p47
      %p124 = pneg %p44
      %p125 = pneg %p75
      %p126 = pneg %p72
      %s127 = smul.u32 32, %s17
      %p128 = scmp.lt.s32.totalorder %s16, 1
      %s129 = scalar_select %p128, %s16, 1
      %p130 = scmp.lt.s32.totalorder %s127, 31
      %s131 = scalar_select %p130, %s127, 31
      %s132 = smul.addr %s131, 5
      %s133 = smul.addr %s129, 640
      %s134 = sadd.s32 %s132, %s133
      %s135 = smul.addr %s134, 8
      %s136 = scalar_lea.vmem %s1, %s135
      %s137 = smul.u32 2, %s17
      %p138 = scmp.lt.s32.totalorder %s16, 1
      %s139 = scalar_select %p138, %s16, 1
      %p140 = scmp.lt.s32.totalorder %s137, 1
      %s141 = scalar_select %p140, %s137, 1
      %s142 = smul.addr %s139, 134
      %s143 = sadd.s32 %s141, %s142
      %s144 = smul.addr %s143, 8
      %s145 = scalar_lea.vmem %s0, %s144
      %s146 = smul.u32 2, %s17
      %s147 = smul.u32 32, %s17
      %p148 = scmp.lt.s32.totalorder %s16, 1
      %s149 = scalar_select %p148, %s16, 1
      %p150 = scmp.lt.s32.totalorder %s147, 31
      %s151 = scalar_select %p150, %s147, 31
      %s152 = smul.addr %s151, 5
      %s153 = smul.addr %s149, 640
      %s154 = sadd.s32 %s152, %s153
      %s155 = smul.addr %s154, 8
      %s156 = scalar_lea.vmem %s1, %s155
      %s157 = smul.u32 32, %s17
      %s158 = smul.u32 %s17, 256
      %v159 = vlaneseq
      %v160 = vand.u32 %v159, 127
      %v161 = vadd.s32 %v160, 128
      %v162 = vstv %s158
      %v163 = vadd.s32 %v162, %v160
      %v164 = vadd.s32 %v162, %v161
      %v165 = vcvt.s32.f32 %v163
      %v166 = vcvt.s32.f32 %v164
      %v167 = vmul.f32 %v165, 0.0625
      %v168 = vmul.f32 %v166, 0.0625
      %v169 = vfloor.f32 %v167
      %v170 = vfloor.f32 %v168
      %v171 = vmul.f32 %v169, 16.0
      %v172 = vmul.f32 %v170, 16.0
      %v173 = vsub.f32 %v165, %v171
      %v174 = vsub.f32 %v166, %v172
      %vm175 = vcmp.ge.f32.partialorder %v173, 15.5
      %vm176 = vcmp.ge.f32.partialorder %v174, 15.5
      %v177 = vadd.f32 %v169, 1.0
      %v178 = vadd.f32 %v170, 1.0
      %v179 = vsel %vm175, %v177, %v169
      %v180 = vsel %vm176, %v178, %v170
      %v181 = vsub.f32 %v173, 16.0
      %v182 = vsub.f32 %v174, 16.0
      %v183 = vsel %vm175, %v181, %v173
      %v184 = vsel %vm176, %v182, %v174
      %v185 = vld [vmem:[%s145] ss:$8 sm:$0x3]
      %s186 = scalar_lea.vmem %s145, 1
      %v187 = vld [vmem:[%s186] ss:$8 sm:$0x3]
      %s188 = scalar_lea.vmem %s145, 2
      %v189 = vld [vmem:[%s188] ss:$8 sm:$0x3]
      %s190 = scalar_lea.vmem %s145, 3
      %v191 = vld [vmem:[%s190] ss:$8 sm:$0x3]
      %s192 = scalar_lea.vmem %s145, 4
      %v193 = vld [vmem:[%s192] ss:$8 sm:$0x3]
      %s194 = scalar_lea.vmem %s145, 5
      %v195 = vld [vmem:[%s194] ss:$8 sm:$0x3]
      %v198 = vcombine.low %v183, %v184
      %v200 = vunpack.c.l.s4 1966171168
      %v201 = vunpack.c.0.s8 %v200
      %v202 = vlaneseq
      %v203 = vshrl.u32 %v202, 7
      %v204 = vsub.s32 %v201, %v203
      %v205 = vrot.slane %v198, %v204
      %v207 = vunpack.c.l.s4 1966171168
      %v208 = vunpack.c.0.s8 %v207
      %v209 = vlaneseq
      %v210 = vshrl.u32 %v209, 7
      %v211 = vsub.s32 %v208, %v210
      %v212 = vrot.slane %v205, %v211
      %v214 = vadd.f32 %v185, %v212
      %v215 = vmul.f32 %v214, 8.0
      %v216 = vmul.f32 %v187, 3.0
      %v219 = vcombine.low %v179, %v180
      %v221 = vunpack.c.l.s4 1966171168
      %v222 = vunpack.c.0.s8 %v221
      %v223 = vlaneseq
      %v224 = vshrl.u32 %v223, 7
      %v225 = vsub.s32 %v222, %v224
      %v226 = vrot.slane %v219, %v225
      %v228 = vunpack.c.l.s4 1966171168
      %v229 = vunpack.c.0.s8 %v228
      %v230 = vlaneseq
      %v231 = vshrl.u32 %v230, 7
      %v232 = vsub.s32 %v229, %v231
      %v233 = vrot.slane %v226, %v232
      %v235 = vadd.f32 %v216, %v233
      %v236 = vmul.f32 %v235, 8.0
      %v237 = vmul.f32 %v189, 1.442695
      %v238 = vpow.pop %v237
      %v239 = vmul.f32 %v238, 8.0
      %v240 = vmul.f32 %v191, 1.442695
      %v241 = vpow.pop %v240
      %v242 = vmul.f32 %v241, 3.0
      %v243 = vmul.f32 %v242, 8.0
      %v244 = vsub.f32 %v193, %v195
      %v245 = vmul.f32 %v244, 1.442695
      %v246 = vpow.pop %v245
      %v247 = vadd.f32 %v246, 1.0
      %v248 = vrcp.pop %v247
      %v249 = vmul.f32 1.0, %v248
      %v251 = vlaneseq
      %v252 = vshrl.u32 %v251, 7
      %v253 = vsub.s32 0, %v252
      %v254 = vrot.slane %v215, %v253
      %v255 = vlaneseq
      %v256 = vshrl.u32 %v255, 7
      %v257 = vsub.s32 1, %v256
      %v258 = vrot.slane %v215, %v257
      %v262 = vlaneseq
      %v263 = vshrl.u32 %v262, 7
      %v264 = vsub.s32 0, %v263
      %v265 = vrot.slane %v236, %v264
      %v266 = vlaneseq
      %v267 = vshrl.u32 %v266, 7
      %v268 = vsub.s32 1, %v267
      %v269 = vrot.slane %v236, %v268
      %v273 = vlaneseq
      %v274 = vshrl.u32 %v273, 7
      %v275 = vsub.s32 0, %v274
      %v276 = vrot.slane %v239, %v275
      %v277 = vlaneseq
      %v278 = vshrl.u32 %v277, 7
      %v279 = vsub.s32 1, %v278
      %v280 = vrot.slane %v239, %v279
      %v284 = vlaneseq
      %v285 = vshrl.u32 %v284, 7
      %v286 = vsub.s32 0, %v285
      %v287 = vrot.slane %v243, %v286
      %v288 = vlaneseq
      %v289 = vshrl.u32 %v288, 7
      %v290 = vsub.s32 1, %v289
      %v291 = vrot.slane %v243, %v290
      %v295 = vlaneseq
      %v296 = vshrl.u32 %v295, 7
      %v297 = vsub.s32 0, %v296
      %v298 = vrot.slane %v249, %v297
      %v299 = vlaneseq
      %v300 = vshrl.u32 %v299, 7
      %v301 = vsub.s32 1, %v300
      %v302 = vrot.slane %v249, %v301
      %vm305 = vcmask 1040384
      %v306 = vsel %vm305, %v254, %v265
      %v307 = vsel %vm305, %v258, %v269
      %vm308 = vcmask 1041408
      %v309 = vsel %vm308, %v306, %v276
      %v310 = vsel %vm308, %v307, %v280
      %vm311 = vcmask 1042432
      %v312 = vsel %vm311, %v309, %v287
      %v313 = vsel %vm311, %v310, %v291
      %vm314 = vcmask 1043456
      %v315 = vsel %vm314, %v312, %v298
      %v316 = vsel %vm314, %v313, %v302
      %vm317 = vcmask 1044480
      %v318 = vsel %vm317, %v315, 0.0
      %v319 = vsel %vm317, %v316, 0.0
      %vm320 = vcmask 1045504
      %v321 = vsel %vm320, %v318, 0.0
      %v322 = vsel %vm320, %v319, 0.0
      %vm323 = vcmask 1046528
      %v324 = vsel %vm323, %v321, 0.0
      %v325 = vsel %vm323, %v322, 0.0
      %326 = vxpose.xlu0.b32.start [1/16] %v324, 128
      %327 = vxpose.xlu0.b32.cont [2/16] 0.0, 128
      %328 = vxpose.xlu0.b32.cont [3/16] 0.0, 128
      %329 = vxpose.xlu0.b32.cont [4/16] 0.0, 128
      %330 = vxpose.xlu0.b32.cont [5/16] 0.0, 128
      %331 = vxpose.xlu0.b32.cont [6/16] 0.0, 128
      %332 = vxpose.xlu0.b32.cont [7/16] 0.0, 128
      %333 = vxpose.xlu0.b32.cont [8/16] 0.0, 128
      %334 = vxpose.xlu0.b32.cont [9/16] 0.0, 128
      %335 = vxpose.xlu0.b32.cont [10/16] 0.0, 128
      %336 = vxpose.xlu0.b32.cont [11/16] 0.0, 128
      %337 = vxpose.xlu0.b32.cont [12/16] 0.0, 128
      %338 = vxpose.xlu0.b32.cont [13/16] 0.0, 128
      %339 = vxpose.xlu0.b32.cont [14/16] 0.0, 128
      %340 = vxpose.xlu0.b32.cont [15/16] 0.0, 128
      %341 = vxpose.xlu0.b32.end [16/16] 0.0, 128
      %v342 = vpop.trf.xlu0
      %v343 = vpop.trf.xlu0
      %v344 = vpop.trf.xlu0
      %v345 = vpop.trf.xlu0
      %v346 = vpop.trf.xlu0
      %v347 = vpop.trf.xlu0
      %v348 = vpop.trf.xlu0
      %v349 = vpop.trf.xlu0
      %v350 = vpop.trf.xlu0
      %v351 = vpop.trf.xlu0
      %v352 = vpop.trf.xlu0
      %v353 = vpop.trf.xlu0
      %v354 = vpop.trf.xlu0
      %v355 = vpop.trf.xlu0
      %v356 = vpop.trf.xlu0
      %v357 = vpop.trf.xlu0
      %358 = vxpose.xlu0.b32.start [1/16] %v325, 128
      %359 = vxpose.xlu0.b32.cont [2/16] 0.0, 128
      %360 = vxpose.xlu0.b32.cont [3/16] 0.0, 128
      %361 = vxpose.xlu0.b32.cont [4/16] 0.0, 128
      %362 = vxpose.xlu0.b32.cont [5/16] 0.0, 128
      %363 = vxpose.xlu0.b32.cont [6/16] 0.0, 128
      %364 = vxpose.xlu0.b32.cont [7/16] 0.0, 128
      %365 = vxpose.xlu0.b32.cont [8/16] 0.0, 128
      %366 = vxpose.xlu0.b32.cont [9/16] 0.0, 128
      %367 = vxpose.xlu0.b32.cont [10/16] 0.0, 128
      %368 = vxpose.xlu0.b32.cont [11/16] 0.0, 128
      %369 = vxpose.xlu0.b32.cont [12/16] 0.0, 128
      %370 = vxpose.xlu0.b32.cont [13/16] 0.0, 128
      %371 = vxpose.xlu0.b32.cont [14/16] 0.0, 128
      %372 = vxpose.xlu0.b32.cont [15/16] 0.0, 128
      %373 = vxpose.xlu0.b32.end [16/16] 0.0, 128
      %v374 = vpop.trf.xlu0
      %v375 = vpop.trf.xlu0
      %v376 = vpop.trf.xlu0
      %v377 = vpop.trf.xlu0
      %v378 = vpop.trf.xlu0
      %v379 = vpop.trf.xlu0
      %v380 = vpop.trf.xlu0
      %v381 = vpop.trf.xlu0
      %v382 = vpop.trf.xlu0
      %v383 = vpop.trf.xlu0
      %v384 = vpop.trf.xlu0
      %v385 = vpop.trf.xlu0
      %v386 = vpop.trf.xlu0
      %v387 = vpop.trf.xlu0
      %v388 = vpop.trf.xlu0
      %v389 = vpop.trf.xlu0
      %vm390 = vcmask 48128
      %391 = vst.msk [vmem:[%s156] sm:$0xff] %vm390, %v342
      %392 = vst.msk [vmem:[%s156 + $0x28] sm:$0xff] %vm390, %v343
      %393 = vst.msk [vmem:[%s156 + $0x50] sm:$0xff] %vm390, %v344
      %394 = vst.msk [vmem:[%s156 + $0x78] sm:$0xff] %vm390, %v345
      %395 = vst.msk [vmem:[%s156 + $0xa0] sm:$0xff] %vm390, %v346
      %396 = vst.msk [vmem:[%s156 + $0xc8] sm:$0xff] %vm390, %v347
      %397 = vst.msk [vmem:[%s156 + $0xf0] sm:$0xff] %vm390, %v348
      %398 = vst.msk [vmem:[%s156 + $0x118] sm:$0xff] %vm390, %v349
      %399 = vst.msk [vmem:[%s156 + $0x140] sm:$0xff] %vm390, %v350
      %400 = vst.msk [vmem:[%s156 + $0x168] sm:$0xff] %vm390, %v351
      %401 = vst.msk [vmem:[%s156 + $0x190] sm:$0xff] %vm390, %v352
      %402 = vst.msk [vmem:[%s156 + $0x1b8] sm:$0xff] %vm390, %v353
      %403 = vst.msk [vmem:[%s156 + $0x1e0] sm:$0xff] %vm390, %v354
      %404 = vst.msk [vmem:[%s156 + $0x208] sm:$0xff] %vm390, %v355
      %405 = vst.msk [vmem:[%s156 + $0x230] sm:$0xff] %vm390, %v356
      %406 = vst.msk [vmem:[%s156 + $0x258] sm:$0xff] %vm390, %v357
      %407 = vst.msk [vmem:[%s156 + $0x280] sm:$0xff] %vm390, %v374
      %408 = vst.msk [vmem:[%s156 + $0x2a8] sm:$0xff] %vm390, %v375
      %409 = vst.msk [vmem:[%s156 + $0x2d0] sm:$0xff] %vm390, %v376
      %410 = vst.msk [vmem:[%s156 + $0x2f8] sm:$0xff] %vm390, %v377
      %411 = vst.msk [vmem:[%s156 + $0x320] sm:$0xff] %vm390, %v378
      %412 = vst.msk [vmem:[%s156 + $0x348] sm:$0xff] %vm390, %v379
      %413 = vst.msk [vmem:[%s156 + $0x370] sm:$0xff] %vm390, %v380
      %414 = vst.msk [vmem:[%s156 + $0x398] sm:$0xff] %vm390, %v381
      %415 = vst.msk [vmem:[%s156 + $0x3c0] sm:$0xff] %vm390, %v382
      %416 = vst.msk [vmem:[%s156 + $0x3e8] sm:$0xff] %vm390, %v383
      %417 = vst.msk [vmem:[%s156 + $0x410] sm:$0xff] %vm390, %v384
      %418 = vst.msk [vmem:[%s156 + $0x438] sm:$0xff] %vm390, %v385
      %419 = vst.msk [vmem:[%s156 + $0x460] sm:$0xff] %vm390, %v386
      %420 = vst.msk [vmem:[%s156 + $0x488] sm:$0xff] %vm390, %v387
      %421 = vst.msk [vmem:[%s156 + $0x4b0] sm:$0xff] %vm390, %v388
      %422 = vst.msk [vmem:[%s156 + $0x4d8] sm:$0xff] %vm390, %v389
      %s423 = scalar_lea.vmem %s145, 6
      %v424 = vld [vmem:[%s423] ss:$8 sm:$0x3]
      %s425 = scalar_lea.vmem %s145, 7
      %v426 = vld [vmem:[%s425] ss:$8 sm:$0x3]
      %s427 = scalar_lea.vmem %s145, 16
      %v428 = vld [vmem:[%s427] ss:$8 sm:$0x3]
      %s429 = scalar_lea.vmem %s145, 17
      %v430 = vld [vmem:[%s429] ss:$8 sm:$0x3]
      %s431 = scalar_lea.vmem %s145, 18
      %v432 = vld [vmem:[%s431] ss:$8 sm:$0x3]
      %s433 = scalar_lea.vmem %s145, 19
      %v434 = vld [vmem:[%s433] ss:$8 sm:$0x3]
      %v435 = vmul.f32 %v424, 1.375
      %v436 = vadd.f32 %v435, %v212
      %v437 = vmul.f32 %v436, 8.0
      %v438 = vmul.f32 %v426, 4.25
      %v439 = vadd.f32 %v438, %v233
      %v440 = vmul.f32 %v439, 8.0
      %v441 = vmul.f32 %v428, 1.442695
      %v442 = vpow.pop %v441
      %v443 = vmul.f32 %v442, 1.375
      %v444 = vmul.f32 %v443, 8.0
      %v445 = vmul.f32 %v430, 1.442695
      %v446 = vpow.pop %v445
      %v447 = vmul.f32 %v446, 4.25
      %v448 = vmul.f32 %v447, 8.0
      %v449 = vsub.f32 %v432, %v434
      %v450 = vmul.f32 %v449, 1.442695
      %v451 = vpow.pop %v450
      %v452 = vadd.f32 %v451, 1.0
      %v453 = vrcp.pop %v452
      %v454 = vmul.f32 1.0, %v453
      %v456 = vlaneseq
      %v457 = vshrl.u32 %v456, 7
      %v458 = vsub.s32 0, %v457
      %v459 = vrot.slane %v437, %v458
      %v460 = vlaneseq
      %v461 = vshrl.u32 %v460, 7
      %v462 = vsub.s32 1, %v461
      %v463 = vrot.slane %v437, %v462
      %v467 = vlaneseq
      %v468 = vshrl.u32 %v467, 7
      %v469 = vsub.s32 0, %v468
      %v470 = vrot.slane %v440, %v469
      %v471 = vlaneseq
      %v472 = vshrl.u32 %v471, 7
      %v473 = vsub.s32 1, %v472
      %v474 = vrot.slane %v440, %v473
      %v478 = vlaneseq
      %v479 = vshrl.u32 %v478, 7
      %v480 = vsub.s32 0, %v479
      %v481 = vrot.slane %v444, %v480
      %v482 = vlaneseq
      %v483 = vshrl.u32 %v482, 7
      %v484 = vsub.s32 1, %v483
      %v485 = vrot.slane %v444, %v484
      %v489 = vlaneseq
      %v490 = vshrl.u32 %v489, 7
      %v491 = vsub.s32 0, %v490
      %v492 = vrot.slane %v448, %v491
      %v493 = vlaneseq
      %v494 = vshrl.u32 %v493, 7
      %v495 = vsub.s32 1, %v494
      %v496 = vrot.slane %v448, %v495
      %v500 = vlaneseq
      %v501 = vshrl.u32 %v500, 7
      %v502 = vsub.s32 0, %v501
      %v503 = vrot.slane %v454, %v502
      %v504 = vlaneseq
      %v505 = vshrl.u32 %v504, 7
      %v506 = vsub.s32 1, %v505
      %v507 = vrot.slane %v454, %v506
      %v510 = vsel %vm305, %v459, %v470
      %v511 = vsel %vm305, %v463, %v474
      %v512 = vsel %vm308, %v510, %v481
      %v513 = vsel %vm308, %v511, %v485
      %v514 = vsel %vm311, %v512, %v492
      %v515 = vsel %vm311, %v513, %v496
      %v516 = vsel %vm314, %v514, %v503
      %v517 = vsel %vm314, %v515, %v507
      %v518 = vsel %vm317, %v516, 0.0
      %v519 = vsel %vm317, %v517, 0.0
      %v520 = vsel %vm320, %v518, 0.0
      %v521 = vsel %vm320, %v519, 0.0
      %v522 = vsel %vm323, %v520, 0.0
      %v523 = vsel %vm323, %v521, 0.0
      %524 = vxpose.xlu0.b32.start [1/16] %v522, 128
      %525 = vxpose.xlu0.b32.cont [2/16] 0.0, 128
      %526 = vxpose.xlu0.b32.cont [3/16] 0.0, 128
      %527 = vxpose.xlu0.b32.cont [4/16] 0.0, 128
      %528 = vxpose.xlu0.b32.cont [5/16] 0.0, 128
      %529 = vxpose.xlu0.b32.cont [6/16] 0.0, 128
      %530 = vxpose.xlu0.b32.cont [7/16] 0.0, 128
      %531 = vxpose.xlu0.b32.cont [8/16] 0.0, 128
      %532 = vxpose.xlu0.b32.cont [9/16] 0.0, 128
      %533 = vxpose.xlu0.b32.cont [10/16] 0.0, 128
      %534 = vxpose.xlu0.b32.cont [11/16] 0.0, 128
      %535 = vxpose.xlu0.b32.cont [12/16] 0.0, 128
      %536 = vxpose.xlu0.b32.cont [13/16] 0.0, 128
      %537 = vxpose.xlu0.b32.cont [14/16] 0.0, 128
      %538 = vxpose.xlu0.b32.cont [15/16] 0.0, 128
      %539 = vxpose.xlu0.b32.end [16/16] 0.0, 128
      %v540 = vpop.trf.xlu0
      %v541 = vpop.trf.xlu0
      %v542 = vpop.trf.xlu0
      %v543 = vpop.trf.xlu0
      %v544 = vpop.trf.xlu0
      %v545 = vpop.trf.xlu0
      %v546 = vpop.trf.xlu0
      %v547 = vpop.trf.xlu0
      %v548 = vpop.trf.xlu0
      %v549 = vpop.trf.xlu0
      %v550 = vpop.trf.xlu0
      %v551 = vpop.trf.xlu0
      %v552 = vpop.trf.xlu0
      %v553 = vpop.trf.xlu0
      %v554 = vpop.trf.xlu0
      %v555 = vpop.trf.xlu0
      %556 = vxpose.xlu0.b32.start [1/16] %v523, 128
      %557 = vxpose.xlu0.b32.cont [2/16] 0.0, 128
      %558 = vxpose.xlu0.b32.cont [3/16] 0.0, 128
      %559 = vxpose.xlu0.b32.cont [4/16] 0.0, 128
      %560 = vxpose.xlu0.b32.cont [5/16] 0.0, 128
      %561 = vxpose.xlu0.b32.cont [6/16] 0.0, 128
      %562 = vxpose.xlu0.b32.cont [7/16] 0.0, 128
      %563 = vxpose.xlu0.b32.cont [8/16] 0.0, 128
      %564 = vxpose.xlu0.b32.cont [9/16] 0.0, 128
      %565 = vxpose.xlu0.b32.cont [10/16] 0.0, 128
      %566 = vxpose.xlu0.b32.cont [11/16] 0.0, 128
      %567 = vxpose.xlu0.b32.cont [12/16] 0.0, 128
      %568 = vxpose.xlu0.b32.cont [13/16] 0.0, 128
      %569 = vxpose.xlu0.b32.cont [14/16] 0.0, 128
      %570 = vxpose.xlu0.b32.cont [15/16] 0.0, 128
      %571 = vxpose.xlu0.b32.end [16/16] 0.0, 128
      %v572 = vpop.trf.xlu0
      %v573 = vpop.trf.xlu0
      %v574 = vpop.trf.xlu0
      %v575 = vpop.trf.xlu0
      %v576 = vpop.trf.xlu0
      %v577 = vpop.trf.xlu0
      %v578 = vpop.trf.xlu0
      %v579 = vpop.trf.xlu0
      %v580 = vpop.trf.xlu0
      %v581 = vpop.trf.xlu0
      %v582 = vpop.trf.xlu0
      %v583 = vpop.trf.xlu0
      %v584 = vpop.trf.xlu0
      %v585 = vpop.trf.xlu0
      %v586 = vpop.trf.xlu0
      %v587 = vpop.trf.xlu0
      %s588 = scalar_lea.vmem %s156, 1280
      %589 = vst.msk [vmem:[%s588] sm:$0xff] %vm390, %v540
      %590 = vst.msk [vmem:[%s588 + $0x28] sm:$0xff] %vm390, %v541
      %591 = vst.msk [vmem:[%s588 + $0x50] sm:$0xff] %vm390, %v542
      %592 = vst.msk [vmem:[%s588 + $0x78] sm:$0xff] %vm390, %v543
      %593 = vst.msk [vmem:[%s588 + $0xa0] sm:$0xff] %vm390, %v544
      %594 = vst.msk [vmem:[%s588 + $0xc8] sm:$0xff] %vm390, %v545
      %595 = vst.msk [vmem:[%s588 + $0xf0] sm:$0xff] %vm390, %v546
      %596 = vst.msk [vmem:[%s588 + $0x118] sm:$0xff] %vm390, %v547
      %597 = vst.msk [vmem:[%s588 + $0x140] sm:$0xff] %vm390, %v548
      %598 = vst.msk [vmem:[%s588 + $0x168] sm:$0xff] %vm390, %v549
      %599 = vst.msk [vmem:[%s588 + $0x190] sm:$0xff] %vm390, %v550
      %600 = vst.msk [vmem:[%s588 + $0x1b8] sm:$0xff] %vm390, %v551
      %601 = vst.msk [vmem:[%s588 + $0x1e0] sm:$0xff] %vm390, %v552
      %602 = vst.msk [vmem:[%s588 + $0x208] sm:$0xff] %vm390, %v553
      %603 = vst.msk [vmem:[%s588 + $0x230] sm:$0xff] %vm390, %v554
      %604 = vst.msk [vmem:[%s588 + $0x258] sm:$0xff] %vm390, %v555
      %605 = vst.msk [vmem:[%s588 + $0x280] sm:$0xff] %vm390, %v572
      %606 = vst.msk [vmem:[%s588 + $0x2a8] sm:$0xff] %vm390, %v573
      %607 = vst.msk [vmem:[%s588 + $0x2d0] sm:$0xff] %vm390, %v574
      %608 = vst.msk [vmem:[%s588 + $0x2f8] sm:$0xff] %vm390, %v575
      %609 = vst.msk [vmem:[%s588 + $0x320] sm:$0xff] %vm390, %v576
      %610 = vst.msk [vmem:[%s588 + $0x348] sm:$0xff] %vm390, %v577
      %611 = vst.msk [vmem:[%s588 + $0x370] sm:$0xff] %vm390, %v578
      %612 = vst.msk [vmem:[%s588 + $0x398] sm:$0xff] %vm390, %v579
      %613 = vst.msk [vmem:[%s588 + $0x3c0] sm:$0xff] %vm390, %v580
      %614 = vst.msk [vmem:[%s588 + $0x3e8] sm:$0xff] %vm390, %v581
      %615 = vst.msk [vmem:[%s588 + $0x410] sm:$0xff] %vm390, %v582
      %616 = vst.msk [vmem:[%s588 + $0x438] sm:$0xff] %vm390, %v583
      %617 = vst.msk [vmem:[%s588 + $0x460] sm:$0xff] %vm390, %v584
      %618 = vst.msk [vmem:[%s588 + $0x488] sm:$0xff] %vm390, %v585
      %619 = vst.msk [vmem:[%s588 + $0x4b0] sm:$0xff] %vm390, %v586
      %620 = vst.msk [vmem:[%s588 + $0x4d8] sm:$0xff] %vm390, %v587
      %s621 = scalar_lea.vmem %s145, 20
      %v622 = vld [vmem:[%s621] ss:$8 sm:$0x3]
      %s623 = scalar_lea.vmem %s145, 21
      %v624 = vld [vmem:[%s623] ss:$8 sm:$0x3]
      %s625 = scalar_lea.vmem %s145, 22
      %v626 = vld [vmem:[%s625] ss:$8 sm:$0x3]
      %s627 = scalar_lea.vmem %s145, 23
      %v628 = vld [vmem:[%s627] ss:$8 sm:$0x3]
      %s629 = scalar_lea.vmem %s145, 32
      %v630 = vld [vmem:[%s629] ss:$8 sm:$0x3]
      %s631 = scalar_lea.vmem %s145, 33
      %v632 = vld [vmem:[%s631] ss:$8 sm:$0x3]
      %v633 = vmul.f32 %v622, 2.0
      %v634 = vadd.f32 %v633, %v212
      %v635 = vmul.f32 %v634, 8.0
      %v636 = vmul.f32 %v624, 6.0
      %v637 = vadd.f32 %v636, %v233
      %v638 = vmul.f32 %v637, 8.0
      %v639 = vmul.f32 %v626, 1.442695
      %v640 = vpow.pop %v639
      %v641 = vmul.f32 %v640, 2.0
      %v642 = vmul.f32 %v641, 8.0
      %v643 = vmul.f32 %v628, 1.442695
      %v644 = vpow.pop %v643
      %v645 = vmul.f32 %v644, 6.0
      %v646 = vmul.f32 %v645, 8.0
      %v647 = vsub.f32 %v630, %v632
      %v648 = vmul.f32 %v647, 1.442695
      %v649 = vpow.pop %v648
      %v650 = vadd.f32 %v649, 1.0
      %v651 = vrcp.pop %v650
      %v652 = vmul.f32 1.0, %v651
      %v654 = vlaneseq
      %v655 = vshrl.u32 %v654, 7
      %v656 = vsub.s32 0, %v655
      %v657 = vrot.slane %v635, %v656
      %v658 = vlaneseq
      %v659 = vshrl.u32 %v658, 7
      %v660 = vsub.s32 1, %v659
      %v661 = vrot.slane %v635, %v660
      %v665 = vlaneseq
      %v666 = vshrl.u32 %v665, 7
      %v667 = vsub.s32 0, %v666
      %v668 = vrot.slane %v638, %v667
      %v669 = vlaneseq
      %v670 = vshrl.u32 %v669, 7
      %v671 = vsub.s32 1, %v670
      %v672 = vrot.slane %v638, %v671
      %v676 = vlaneseq
      %v677 = vshrl.u32 %v676, 7
      %v678 = vsub.s32 0, %v677
      %v679 = vrot.slane %v642, %v678
      %v680 = vlaneseq
      %v681 = vshrl.u32 %v680, 7
      %v682 = vsub.s32 1, %v681
      %v683 = vrot.slane %v642, %v682
      %v687 = vlaneseq
      %v688 = vshrl.u32 %v687, 7
      %v689 = vsub.s32 0, %v688
      %v690 = vrot.slane %v646, %v689
      %v691 = vlaneseq
      %v692 = vshrl.u32 %v691, 7
      %v693 = vsub.s32 1, %v692
      %v694 = vrot.slane %v646, %v693
      %v698 = vlaneseq
      %v699 = vshrl.u32 %v698, 7
      %v700 = vsub.s32 0, %v699
      %v701 = vrot.slane %v652, %v700
      %v702 = vlaneseq
      %v703 = vshrl.u32 %v702, 7
      %v704 = vsub.s32 1, %v703
      %v705 = vrot.slane %v652, %v704
      %v708 = vsel %vm305, %v657, %v668
      %v709 = vsel %vm305, %v661, %v672
      %v710 = vsel %vm308, %v708, %v679
      %v711 = vsel %vm308, %v709, %v683
      %v712 = vsel %vm311, %v710, %v690
      %v713 = vsel %vm311, %v711, %v694
      %v714 = vsel %vm314, %v712, %v701
      %v715 = vsel %vm314, %v713, %v705
      %v716 = vsel %vm317, %v714, 0.0
      %v717 = vsel %vm317, %v715, 0.0
      %v718 = vsel %vm320, %v716, 0.0
      %v719 = vsel %vm320, %v717, 0.0
      %v720 = vsel %vm323, %v718, 0.0
      %v721 = vsel %vm323, %v719, 0.0
      %722 = vxpose.xlu0.b32.start [1/16] %v720, 128
      %723 = vxpose.xlu0.b32.cont [2/16] 0.0, 128
      %724 = vxpose.xlu0.b32.cont [3/16] 0.0, 128
      %725 = vxpose.xlu0.b32.cont [4/16] 0.0, 128
      %726 = vxpose.xlu0.b32.cont [5/16] 0.0, 128
      %727 = vxpose.xlu0.b32.cont [6/16] 0.0, 128
      %728 = vxpose.xlu0.b32.cont [7/16] 0.0, 128
      %729 = vxpose.xlu0.b32.cont [8/16] 0.0, 128
      %730 = vxpose.xlu0.b32.cont [9/16] 0.0, 128
      %731 = vxpose.xlu0.b32.cont [10/16] 0.0, 128
      %732 = vxpose.xlu0.b32.cont [11/16] 0.0, 128
      %733 = vxpose.xlu0.b32.cont [12/16] 0.0, 128
      %734 = vxpose.xlu0.b32.cont [13/16] 0.0, 128
      %735 = vxpose.xlu0.b32.cont [14/16] 0.0, 128
      %736 = vxpose.xlu0.b32.cont [15/16] 0.0, 128
      %737 = vxpose.xlu0.b32.end [16/16] 0.0, 128
      %v738 = vpop.trf.xlu0
      %v739 = vpop.trf.xlu0
      %v740 = vpop.trf.xlu0
      %v741 = vpop.trf.xlu0
      %v742 = vpop.trf.xlu0
      %v743 = vpop.trf.xlu0
      %v744 = vpop.trf.xlu0
      %v745 = vpop.trf.xlu0
      %v746 = vpop.trf.xlu0
      %v747 = vpop.trf.xlu0
      %v748 = vpop.trf.xlu0
      %v749 = vpop.trf.xlu0
      %v750 = vpop.trf.xlu0
      %v751 = vpop.trf.xlu0
      %v752 = vpop.trf.xlu0
      %v753 = vpop.trf.xlu0
      %754 = vxpose.xlu0.b32.start [1/16] %v721, 128
      %755 = vxpose.xlu0.b32.cont [2/16] 0.0, 128
      %756 = vxpose.xlu0.b32.cont [3/16] 0.0, 128
      %757 = vxpose.xlu0.b32.cont [4/16] 0.0, 128
      %758 = vxpose.xlu0.b32.cont [5/16] 0.0, 128
      %759 = vxpose.xlu0.b32.cont [6/16] 0.0, 128
      %760 = vxpose.xlu0.b32.cont [7/16] 0.0, 128
      %761 = vxpose.xlu0.b32.cont [8/16] 0.0, 128
      %762 = vxpose.xlu0.b32.cont [9/16] 0.0, 128
      %763 = vxpose.xlu0.b32.cont [10/16] 0.0, 128
      %764 = vxpose.xlu0.b32.cont [11/16] 0.0, 128
      %765 = vxpose.xlu0.b32.cont [12/16] 0.0, 128
      %766 = vxpose.xlu0.b32.cont [13/16] 0.0, 128
      %767 = vxpose.xlu0.b32.cont [14/16] 0.0, 128
      %768 = vxpose.xlu0.b32.cont [15/16] 0.0, 128
      %769 = vxpose.xlu0.b32.end [16/16] 0.0, 128
      %v770 = vpop.trf.xlu0
      %v771 = vpop.trf.xlu0
      %v772 = vpop.trf.xlu0
      %v773 = vpop.trf.xlu0
      %v774 = vpop.trf.xlu0
      %v775 = vpop.trf.xlu0
      %v776 = vpop.trf.xlu0
      %v777 = vpop.trf.xlu0
      %v778 = vpop.trf.xlu0
      %v779 = vpop.trf.xlu0
      %v780 = vpop.trf.xlu0
      %v781 = vpop.trf.xlu0
      %v782 = vpop.trf.xlu0
      %v783 = vpop.trf.xlu0
      %v784 = vpop.trf.xlu0
      %v785 = vpop.trf.xlu0
      %s786 = scalar_lea.vmem %s156, 2560
      %787 = vst.msk [vmem:[%s786] sm:$0xff] %vm390, %v738
      %788 = vst.msk [vmem:[%s786 + $0x28] sm:$0xff] %vm390, %v739
      %789 = vst.msk [vmem:[%s786 + $0x50] sm:$0xff] %vm390, %v740
      %790 = vst.msk [vmem:[%s786 + $0x78] sm:$0xff] %vm390, %v741
      %791 = vst.msk [vmem:[%s786 + $0xa0] sm:$0xff] %vm390, %v742
      %792 = vst.msk [vmem:[%s786 + $0xc8] sm:$0xff] %vm390, %v743
      %793 = vst.msk [vmem:[%s786 + $0xf0] sm:$0xff] %vm390, %v744
      %794 = vst.msk [vmem:[%s786 + $0x118] sm:$0xff] %vm390, %v745
      %795 = vst.msk [vmem:[%s786 + $0x140] sm:$0xff] %vm390, %v746
      %796 = vst.msk [vmem:[%s786 + $0x168] sm:$0xff] %vm390, %v747
      %797 = vst.msk [vmem:[%s786 + $0x190] sm:$0xff] %vm390, %v748
      %798 = vst.msk [vmem:[%s786 + $0x1b8] sm:$0xff] %vm390, %v749
      %799 = vst.msk [vmem:[%s786 + $0x1e0] sm:$0xff] %vm390, %v750
      %800 = vst.msk [vmem:[%s786 + $0x208] sm:$0xff] %vm390, %v751
      %801 = vst.msk [vmem:[%s786 + $0x230] sm:$0xff] %vm390, %v752
      %802 = vst.msk [vmem:[%s786 + $0x258] sm:$0xff] %vm390, %v753
      %803 = vst.msk [vmem:[%s786 + $0x280] sm:$0xff] %vm390, %v770
      %804 = vst.msk [vmem:[%s786 + $0x2a8] sm:$0xff] %vm390, %v771
      %805 = vst.msk [vmem:[%s786 + $0x2d0] sm:$0xff] %vm390, %v772
      %806 = vst.msk [vmem:[%s786 + $0x2f8] sm:$0xff] %vm390, %v773
      %807 = vst.msk [vmem:[%s786 + $0x320] sm:$0xff] %vm390, %v774
      %808 = vst.msk [vmem:[%s786 + $0x348] sm:$0xff] %vm390, %v775
      %809 = vst.msk [vmem:[%s786 + $0x370] sm:$0xff] %vm390, %v776
      %810 = vst.msk [vmem:[%s786 + $0x398] sm:$0xff] %vm390, %v777
      %811 = vst.msk [vmem:[%s786 + $0x3c0] sm:$0xff] %vm390, %v778
      %812 = vst.msk [vmem:[%s786 + $0x3e8] sm:$0xff] %vm390, %v779
      %813 = vst.msk [vmem:[%s786 + $0x410] sm:$0xff] %vm390, %v780
      %814 = vst.msk [vmem:[%s786 + $0x438] sm:$0xff] %vm390, %v781
      %815 = vst.msk [vmem:[%s786 + $0x460] sm:$0xff] %vm390, %v782
      %816 = vst.msk [vmem:[%s786 + $0x488] sm:$0xff] %vm390, %v783
      %817 = vst.msk [vmem:[%s786 + $0x4b0] sm:$0xff] %vm390, %v784
      %818 = vst.msk [vmem:[%s786 + $0x4d8] sm:$0xff] %vm390, %v785
      %s819 = scalar_lea.vmem %s145, 34
      %v820 = vld [vmem:[%s819] ss:$8 sm:$0x3]
      %s821 = scalar_lea.vmem %s145, 35
      %v822 = vld [vmem:[%s821] ss:$8 sm:$0x3]
      %s823 = scalar_lea.vmem %s145, 36
      %v824 = vld [vmem:[%s823] ss:$8 sm:$0x3]
      %s825 = scalar_lea.vmem %s145, 37
      %v826 = vld [vmem:[%s825] ss:$8 sm:$0x3]
      %s827 = scalar_lea.vmem %s145, 38
      %v828 = vld [vmem:[%s827] ss:$8 sm:$0x3]
      %s829 = scalar_lea.vmem %s145, 39
      %v830 = vld [vmem:[%s829] ss:$8 sm:$0x3]
      %v831 = vmul.f32 %v820, 2.875
      %v832 = vadd.f32 %v831, %v212
      %v833 = vmul.f32 %v832, 8.0
      %v834 = vmul.f32 %v822, 8.5
      %v835 = vadd.f32 %v834, %v233
      %v836 = vmul.f32 %v835, 8.0
      %v837 = vmul.f32 %v824, 1.442695
      %v838 = vpow.pop %v837
      %v839 = vmul.f32 %v838, 2.875
      %v840 = vmul.f32 %v839, 8.0
      %v841 = vmul.f32 %v826, 1.442695
      %v842 = vpow.pop %v841
      %v843 = vmul.f32 %v842, 8.5
      %v844 = vmul.f32 %v843, 8.0
      %v845 = vsub.f32 %v828, %v830
      %v846 = vmul.f32 %v845, 1.442695
      %v847 = vpow.pop %v846
      %v848 = vadd.f32 %v847, 1.0
      %v849 = vrcp.pop %v848
      %v850 = vmul.f32 1.0, %v849
      %v852 = vlaneseq
      %v853 = vshrl.u32 %v852, 7
      %v854 = vsub.s32 0, %v853
      %v855 = vrot.slane %v833, %v854
      %v856 = vlaneseq
      %v857 = vshrl.u32 %v856, 7
      %v858 = vsub.s32 1, %v857
      %v859 = vrot.slane %v833, %v858
      %v863 = vlaneseq
      %v864 = vshrl.u32 %v863, 7
      %v865 = vsub.s32 0, %v864
      %v866 = vrot.slane %v836, %v865
      %v867 = vlaneseq
      %v868 = vshrl.u32 %v867, 7
      %v869 = vsub.s32 1, %v868
      %v870 = vrot.slane %v836, %v869
      %v874 = vlaneseq
      %v875 = vshrl.u32 %v874, 7
      %v876 = vsub.s32 0, %v875
      %v877 = vrot.slane %v840, %v876
      %v878 = vlaneseq
      %v879 = vshrl.u32 %v878, 7
      %v880 = vsub.s32 1, %v879
      %v881 = vrot.slane %v840, %v880
      %v885 = vlaneseq
      %v886 = vshrl.u32 %v885, 7
      %v887 = vsub.s32 0, %v886
      %v888 = vrot.slane %v844, %v887
      %v889 = vlaneseq
      %v890 = vshrl.u32 %v889, 7
      %v891 = vsub.s32 1, %v890
      %v892 = vrot.slane %v844, %v891
      %v896 = vlaneseq
      %v897 = vshrl.u32 %v896, 7
      %v898 = vsub.s32 0, %v897
      %v899 = vrot.slane %v850, %v898
      %v900 = vlaneseq
      %v901 = vshrl.u32 %v900, 7
      %v902 = vsub.s32 1, %v901
      %v903 = vrot.slane %v850, %v902
      %v906 = vsel %vm305, %v855, %v866
      %v907 = vsel %vm305, %v859, %v870
      %v908 = vsel %vm308, %v906, %v877
      %v909 = vsel %vm308, %v907, %v881
      %v910 = vsel %vm311, %v908, %v888
      %v911 = vsel %vm311, %v909, %v892
      %v912 = vsel %vm314, %v910, %v899
      %v913 = vsel %vm314, %v911, %v903
      %v914 = vsel %vm317, %v912, 0.0
      %v915 = vsel %vm317, %v913, 0.0
      %v916 = vsel %vm320, %v914, 0.0
      %v917 = vsel %vm320, %v915, 0.0
      %v918 = vsel %vm323, %v916, 0.0
      %v919 = vsel %vm323, %v917, 0.0
      %920 = vxpose.xlu0.b32.start [1/16] %v918, 128
      %921 = vxpose.xlu0.b32.cont [2/16] 0.0, 128
      %922 = vxpose.xlu0.b32.cont [3/16] 0.0, 128
      %923 = vxpose.xlu0.b32.cont [4/16] 0.0, 128
      %924 = vxpose.xlu0.b32.cont [5/16] 0.0, 128
      %925 = vxpose.xlu0.b32.cont [6/16] 0.0, 128
      %926 = vxpose.xlu0.b32.cont [7/16] 0.0, 128
      %927 = vxpose.xlu0.b32.cont [8/16] 0.0, 128
      %928 = vxpose.xlu0.b32.cont [9/16] 0.0, 128
      %929 = vxpose.xlu0.b32.cont [10/16] 0.0, 128
      %930 = vxpose.xlu0.b32.cont [11/16] 0.0, 128
      %931 = vxpose.xlu0.b32.cont [12/16] 0.0, 128
      %932 = vxpose.xlu0.b32.cont [13/16] 0.0, 128
      %933 = vxpose.xlu0.b32.cont [14/16] 0.0, 128
      %934 = vxpose.xlu0.b32.cont [15/16] 0.0, 128
      %935 = vxpose.xlu0.b32.end [16/16] 0.0, 128
      %v936 = vpop.trf.xlu0
      %v937 = vpop.trf.xlu0
      %v938 = vpop.trf.xlu0
      %v939 = vpop.trf.xlu0
      %v940 = vpop.trf.xlu0
      %v941 = vpop.trf.xlu0
      %v942 = vpop.trf.xlu0
      %v943 = vpop.trf.xlu0
      %v944 = vpop.trf.xlu0
      %v945 = vpop.trf.xlu0
      %v946 = vpop.trf.xlu0
      %v947 = vpop.trf.xlu0
      %v948 = vpop.trf.xlu0
      %v949 = vpop.trf.xlu0
      %v950 = vpop.trf.xlu0
      %v951 = vpop.trf.xlu0
      %952 = vxpose.xlu0.b32.start [1/16] %v919, 128
      %953 = vxpose.xlu0.b32.cont [2/16] 0.0, 128
      %954 = vxpose.xlu0.b32.cont [3/16] 0.0, 128
      %955 = vxpose.xlu0.b32.cont [4/16] 0.0, 128
      %956 = vxpose.xlu0.b32.cont [5/16] 0.0, 128
      %957 = vxpose.xlu0.b32.cont [6/16] 0.0, 128
      %958 = vxpose.xlu0.b32.cont [7/16] 0.0, 128
      %959 = vxpose.xlu0.b32.cont [8/16] 0.0, 128
      %960 = vxpose.xlu0.b32.cont [9/16] 0.0, 128
      %961 = vxpose.xlu0.b32.cont [10/16] 0.0, 128
      %962 = vxpose.xlu0.b32.cont [11/16] 0.0, 128
      %963 = vxpose.xlu0.b32.cont [12/16] 0.0, 128
      %964 = vxpose.xlu0.b32.cont [13/16] 0.0, 128
      %965 = vxpose.xlu0.b32.cont [14/16] 0.0, 128
      %966 = vxpose.xlu0.b32.cont [15/16] 0.0, 128
      %967 = vxpose.xlu0.b32.end [16/16] 0.0, 128
      %v968 = vpop.trf.xlu0
      %v969 = vpop.trf.xlu0
      %v970 = vpop.trf.xlu0
      %v971 = vpop.trf.xlu0
      %v972 = vpop.trf.xlu0
      %v973 = vpop.trf.xlu0
      %v974 = vpop.trf.xlu0
      %v975 = vpop.trf.xlu0
      %v976 = vpop.trf.xlu0
      %v977 = vpop.trf.xlu0
      %v978 = vpop.trf.xlu0
      %v979 = vpop.trf.xlu0
      %v980 = vpop.trf.xlu0
      %v981 = vpop.trf.xlu0
      %v982 = vpop.trf.xlu0
      %v983 = vpop.trf.xlu0
      %s984 = scalar_lea.vmem %s156, 3840
      %985 = vst.msk [vmem:[%s984] sm:$0xff] %vm390, %v936
      %986 = vst.msk [vmem:[%s984 + $0x28] sm:$0xff] %vm390, %v937
      %987 = vst.msk [vmem:[%s984 + $0x50] sm:$0xff] %vm390, %v938
      %988 = vst.msk [vmem:[%s984 + $0x78] sm:$0xff] %vm390, %v939
      %989 = vst.msk [vmem:[%s984 + $0xa0] sm:$0xff] %vm390, %v940
      %990 = vst.msk [vmem:[%s984 + $0xc8] sm:$0xff] %vm390, %v941
      %991 = vst.msk [vmem:[%s984 + $0xf0] sm:$0xff] %vm390, %v942
      %992 = vst.msk [vmem:[%s984 + $0x118] sm:$0xff] %vm390, %v943
      %993 = vst.msk [vmem:[%s984 + $0x140] sm:$0xff] %vm390, %v944
      %994 = vst.msk [vmem:[%s984 + $0x168] sm:$0xff] %vm390, %v945
      %995 = vst.msk [vmem:[%s984 + $0x190] sm:$0xff] %vm390, %v946
      %996 = vst.msk [vmem:[%s984 + $0x1b8] sm:$0xff] %vm390, %v947
      %997 = vst.msk [vmem:[%s984 + $0x1e0] sm:$0xff] %vm390, %v948
      %998 = vst.msk [vmem:[%s984 + $0x208] sm:$0xff] %vm390, %v949
      %999 = vst.msk [vmem:[%s984 + $0x230] sm:$0xff] %vm390, %v950
      %1000 = vst.msk [vmem:[%s984 + $0x258] sm:$0xff] %vm390, %v951
      %1001 = vst.msk [vmem:[%s984 + $0x280] sm:$0xff] %vm390, %v968
      %1002 = vst.msk [vmem:[%s984 + $0x2a8] sm:$0xff] %vm390, %v969
      %1003 = vst.msk [vmem:[%s984 + $0x2d0] sm:$0xff] %vm390, %v970
      %1004 = vst.msk [vmem:[%s984 + $0x2f8] sm:$0xff] %vm390, %v971
      %1005 = vst.msk [vmem:[%s984 + $0x320] sm:$0xff] %vm390, %v972
      %1006 = vst.msk [vmem:[%s984 + $0x348] sm:$0xff] %vm390, %v973
      %1007 = vst.msk [vmem:[%s984 + $0x370] sm:$0xff] %vm390, %v974
      %1008 = vst.msk [vmem:[%s984 + $0x398] sm:$0xff] %vm390, %v975
      %1009 = vst.msk [vmem:[%s984 + $0x3c0] sm:$0xff] %vm390, %v976
      %1010 = vst.msk [vmem:[%s984 + $0x3e8] sm:$0xff] %vm390, %v977
      %1011 = vst.msk [vmem:[%s984 + $0x410] sm:$0xff] %vm390, %v978
      %1012 = vst.msk [vmem:[%s984 + $0x438] sm:$0xff] %vm390, %v979
      %1013 = vst.msk [vmem:[%s984 + $0x460] sm:$0xff] %vm390, %v980
      %1014 = vst.msk [vmem:[%s984 + $0x488] sm:$0xff] %vm390, %v981
      %1015 = vst.msk [vmem:[%s984 + $0x4b0] sm:$0xff] %vm390, %v982
      %1016 = vst.msk [vmem:[%s984 + $0x4d8] sm:$0xff] %vm390, %v983
      %v1017 = vld [vmem:[%s145 + $0x30] sm:$0xff]
      %v1018 = vld [vmem:[%s145 + $0x38] sm:$0xff]
      %v1019 = vld [vmem:[%s145 + $0x40] sm:$0xff]
      %v1020 = vld [vmem:[%s145 + $0x48] sm:$0xff]
      %v1021 = vld [vmem:[%s145 + $0x50] sm:$0xff]
      %v1022 = vld [vmem:[%s145 + $0x58] sm:$0xff]
      %v1023 = vld [vmem:[%s145 + $0x60] sm:$0xff]
      %v1024 = vld [vmem:[%s145 + $0x68] sm:$0xff]
      %v1025 = vld [vmem:[%s145 + $0x70] sm:$0xff]
      %v1026 = vld [vmem:[%s145 + $0x78] sm:$0xff]
      %v1027 = vld [vmem:[%s145 + $0x80] sm:$0xff]
      %v1028 = vld [vmem:[%s145 + $0x88] sm:$0xff]
      %v1029 = vld [vmem:[%s145 + $0x90] sm:$0xff]
      %v1030 = vld [vmem:[%s145 + $0x98] sm:$0xff]
      %v1031 = vld [vmem:[%s145 + $0xa0] sm:$0xff]
      %v1032 = vld [vmem:[%s145 + $0xa8] sm:$0xff]
      %v1033 = vld [vmem:[%s145 + $0xb0] sm:$0xff]
      %v1034 = vld [vmem:[%s145 + $0xb8] sm:$0xff]
      %v1035 = vld [vmem:[%s145 + $0xc0] sm:$0xff]
      %v1036 = vld [vmem:[%s145 + $0xc8] sm:$0xff]
      %v1037 = vld [vmem:[%s145 + $0xd0] sm:$0xff]
      %v1038 = vld [vmem:[%s145 + $0xd8] sm:$0xff]
      %v1039 = vld [vmem:[%s145 + $0xe0] sm:$0xff]
      %v1040 = vld [vmem:[%s145 + $0xe8] sm:$0xff]
      %v1041 = vld [vmem:[%s145 + $0xf0] sm:$0xff]
      %v1042 = vld [vmem:[%s145 + $0xf8] sm:$0xff]
      %v1043 = vld [vmem:[%s145 + $0x100] sm:$0xff]
      %v1044 = vld [vmem:[%s145 + $0x108] sm:$0xff]
      %v1045 = vld [vmem:[%s145 + $0x110] sm:$0xff]
      %v1046 = vld [vmem:[%s145 + $0x118] sm:$0xff]
      %v1047 = vld [vmem:[%s145 + $0x120] sm:$0xff]
      %v1048 = vld [vmem:[%s145 + $0x128] sm:$0xff]
      %1049 = vxpose.xlu0.b32.start [1/16] %v1017, 128
      %1050 = vxpose.xlu0.b32.cont [2/16] %v1019, 128
      %1051 = vxpose.xlu0.b32.cont [3/16] %v1021, 128
      %1052 = vxpose.xlu0.b32.cont [4/16] %v1023, 128
      %1053 = vxpose.xlu0.b32.cont [5/16] %v1025, 128
      %1054 = vxpose.xlu0.b32.cont [6/16] %v1027, 128
      %1055 = vxpose.xlu0.b32.cont [7/16] %v1029, 128
      %1056 = vxpose.xlu0.b32.cont [8/16] %v1031, 128
      %1057 = vxpose.xlu0.b32.cont [9/16] %v1033, 128
      %1058 = vxpose.xlu0.b32.cont [10/16] %v1035, 128
      %1059 = vxpose.xlu0.b32.cont [11/16] %v1037, 128
      %1060 = vxpose.xlu0.b32.cont [12/16] %v1039, 128
      %1061 = vxpose.xlu0.b32.cont [13/16] %v1041, 128
      %1062 = vxpose.xlu0.b32.cont [14/16] %v1043, 128
      %1063 = vxpose.xlu0.b32.cont [15/16] %v1045, 128
      %1064 = vxpose.xlu0.b32.end [16/16] %v1047, 128
      %v1065 = vpop.trf.xlu0
      %v1066 = vpop.trf.xlu0
      %v1067 = vpop.trf.xlu0
      %v1068 = vpop.trf.xlu0
      %v1069 = vpop.trf.xlu0
      %v1070 = vpop.trf.xlu0
      %v1071 = vpop.trf.xlu0
      %v1072 = vpop.trf.xlu0
      %v1073 = vpop.trf.xlu0
      %v1074 = vpop.trf.xlu0
      %v1075 = vpop.trf.xlu0
      %v1076 = vpop.trf.xlu0
      %v1077 = vpop.trf.xlu0
      %v1078 = vpop.trf.xlu0
      %v1079 = vpop.trf.xlu0
      %v1080 = vpop.trf.xlu0
      %1081 = vxpose.xlu0.b32.start [1/16] %v1018, 128
      %1082 = vxpose.xlu0.b32.cont [2/16] %v1020, 128
      %1083 = vxpose.xlu0.b32.cont [3/16] %v1022, 128
      %1084 = vxpose.xlu0.b32.cont [4/16] %v1024, 128
      %1085 = vxpose.xlu0.b32.cont [5/16] %v1026, 128
      %1086 = vxpose.xlu0.b32.cont [6/16] %v1028, 128
      %1087 = vxpose.xlu0.b32.cont [7/16] %v1030, 128
      %1088 = vxpose.xlu0.b32.cont [8/16] %v1032, 128
      %1089 = vxpose.xlu0.b32.cont [9/16] %v1034, 128
      %1090 = vxpose.xlu0.b32.cont [10/16] %v1036, 128
      %1091 = vxpose.xlu0.b32.cont [11/16] %v1038, 128
      %1092 = vxpose.xlu0.b32.cont [12/16] %v1040, 128
      %1093 = vxpose.xlu0.b32.cont [13/16] %v1042, 128
      %1094 = vxpose.xlu0.b32.cont [14/16] %v1044, 128
      %1095 = vxpose.xlu0.b32.cont [15/16] %v1046, 128
      %1096 = vxpose.xlu0.b32.end [16/16] %v1048, 128
      %v1097 = vpop.trf.xlu0
      %v1098 = vpop.trf.xlu0
      %v1099 = vpop.trf.xlu0
      %v1100 = vpop.trf.xlu0
      %v1101 = vpop.trf.xlu0
      %v1102 = vpop.trf.xlu0
      %v1103 = vpop.trf.xlu0
      %v1104 = vpop.trf.xlu0
      %v1105 = vpop.trf.xlu0
      %v1106 = vpop.trf.xlu0
      %v1107 = vpop.trf.xlu0
      %v1108 = vpop.trf.xlu0
      %v1109 = vpop.trf.xlu0
      %v1110 = vpop.trf.xlu0
      %v1111 = vpop.trf.xlu0
      %v1112 = vpop.trf.xlu0
      %1145 = vrot.lane.b32.xlu0 %v1065, 6
      %v1146 = vpop.permute.xlu0 %1145
      %1147 = vrot.lane.b32.xlu0 %v1066, 6
      %v1148 = vpop.permute.xlu0 %1147
      %1149 = vrot.lane.b32.xlu0 %v1067, 6
      %v1150 = vpop.permute.xlu0 %1149
      %1151 = vrot.lane.b32.xlu0 %v1068, 6
      %v1152 = vpop.permute.xlu0 %1151
      %1153 = vrot.lane.b32.xlu0 %v1069, 6
      %v1154 = vpop.permute.xlu0 %1153
      %1155 = vrot.lane.b32.xlu0 %v1070, 6
      %v1156 = vpop.permute.xlu0 %1155
      %1157 = vrot.lane.b32.xlu0 %v1071, 6
      %v1158 = vpop.permute.xlu0 %1157
      %1159 = vrot.lane.b32.xlu0 %v1072, 6
      %v1160 = vpop.permute.xlu0 %1159
      %1161 = vrot.lane.b32.xlu0 %v1073, 6
      %v1162 = vpop.permute.xlu0 %1161
      %1163 = vrot.lane.b32.xlu0 %v1074, 6
      %v1164 = vpop.permute.xlu0 %1163
      %1165 = vrot.lane.b32.xlu0 %v1075, 6
      %v1166 = vpop.permute.xlu0 %1165
      %1167 = vrot.lane.b32.xlu0 %v1076, 6
      %v1168 = vpop.permute.xlu0 %1167
      %1169 = vrot.lane.b32.xlu0 %v1077, 6
      %v1170 = vpop.permute.xlu0 %1169
      %1171 = vrot.lane.b32.xlu0 %v1078, 6
      %v1172 = vpop.permute.xlu0 %1171
      %1173 = vrot.lane.b32.xlu0 %v1079, 6
      %v1174 = vpop.permute.xlu0 %1173
      %1175 = vrot.lane.b32.xlu0 %v1080, 6
      %v1176 = vpop.permute.xlu0 %1175
      %1177 = vrot.lane.b32.xlu0 %v1097, 6
      %v1178 = vpop.permute.xlu0 %1177
      %1179 = vrot.lane.b32.xlu0 %v1098, 6
      %v1180 = vpop.permute.xlu0 %1179
      %1181 = vrot.lane.b32.xlu0 %v1099, 6
      %v1182 = vpop.permute.xlu0 %1181
      %1183 = vrot.lane.b32.xlu0 %v1100, 6
      %v1184 = vpop.permute.xlu0 %1183
      %1185 = vrot.lane.b32.xlu0 %v1101, 6
      %v1186 = vpop.permute.xlu0 %1185
      %1187 = vrot.lane.b32.xlu0 %v1102, 6
      %v1188 = vpop.permute.xlu0 %1187
      %1189 = vrot.lane.b32.xlu0 %v1103, 6
      %v1190 = vpop.permute.xlu0 %1189
      %1191 = vrot.lane.b32.xlu0 %v1104, 6
      %v1192 = vpop.permute.xlu0 %1191
      %1193 = vrot.lane.b32.xlu0 %v1105, 6
      %v1194 = vpop.permute.xlu0 %1193
      %1195 = vrot.lane.b32.xlu0 %v1106, 6
      %v1196 = vpop.permute.xlu0 %1195
      %1197 = vrot.lane.b32.xlu0 %v1107, 6
      %v1198 = vpop.permute.xlu0 %1197
      %1199 = vrot.lane.b32.xlu0 %v1108, 6
      %v1200 = vpop.permute.xlu0 %1199
      %1201 = vrot.lane.b32.xlu0 %v1109, 6
      %v1202 = vpop.permute.xlu0 %1201
      %1203 = vrot.lane.b32.xlu0 %v1110, 6
      %v1204 = vpop.permute.xlu0 %1203
      %1205 = vrot.lane.b32.xlu0 %v1111, 6
      %v1206 = vpop.permute.xlu0 %1205
      %1207 = vrot.lane.b32.xlu0 %v1112, 6
      %v1208 = vpop.permute.xlu0 %1207
      %vm1241 = vcmask 1047600
      %1242 = vst.msk [vmem:[%s156] sm:$0xff] %vm1241, %v1146
      %1243 = vst.msk [vmem:[%s156 + $0x8] sm:$0xff] %vm390, %v1146
      %1244 = vst.msk [vmem:[%s156 + $0x28] sm:$0xff] %vm1241, %v1148
      %1245 = vst.msk [vmem:[%s156 + $0x30] sm:$0xff] %vm390, %v1148
      %1246 = vst.msk [vmem:[%s156 + $0x50] sm:$0xff] %vm1241, %v1150
      %1247 = vst.msk [vmem:[%s156 + $0x58] sm:$0xff] %vm390, %v1150
      %1248 = vst.msk [vmem:[%s156 + $0x78] sm:$0xff] %vm1241, %v1152
      %1249 = vst.msk [vmem:[%s156 + $0x80] sm:$0xff] %vm390, %v1152
      %1250 = vst.msk [vmem:[%s156 + $0xa0] sm:$0xff] %vm1241, %v1154
      %1251 = vst.msk [vmem:[%s156 + $0xa8] sm:$0xff] %vm390, %v1154
      %1252 = vst.msk [vmem:[%s156 + $0xc8] sm:$0xff] %vm1241, %v1156
      %1253 = vst.msk [vmem:[%s156 + $0xd0] sm:$0xff] %vm390, %v1156
      %1254 = vst.msk [vmem:[%s156 + $0xf0] sm:$0xff] %vm1241, %v1158
      %1255 = vst.msk [vmem:[%s156 + $0xf8] sm:$0xff] %vm390, %v1158
      %1256 = vst.msk [vmem:[%s156 + $0x118] sm:$0xff] %vm1241, %v1160
      %1257 = vst.msk [vmem:[%s156 + $0x120] sm:$0xff] %vm390, %v1160
      %1258 = vst.msk [vmem:[%s156 + $0x140] sm:$0xff] %vm1241, %v1162
      %1259 = vst.msk [vmem:[%s156 + $0x148] sm:$0xff] %vm390, %v1162
      %1260 = vst.msk [vmem:[%s156 + $0x168] sm:$0xff] %vm1241, %v1164
      %1261 = vst.msk [vmem:[%s156 + $0x170] sm:$0xff] %vm390, %v1164
      %1262 = vst.msk [vmem:[%s156 + $0x190] sm:$0xff] %vm1241, %v1166
      %1263 = vst.msk [vmem:[%s156 + $0x198] sm:$0xff] %vm390, %v1166
      %1264 = vst.msk [vmem:[%s156 + $0x1b8] sm:$0xff] %vm1241, %v1168
      %1265 = vst.msk [vmem:[%s156 + $0x1c0] sm:$0xff] %vm390, %v1168
      %1266 = vst.msk [vmem:[%s156 + $0x1e0] sm:$0xff] %vm1241, %v1170
      %1267 = vst.msk [vmem:[%s156 + $0x1e8] sm:$0xff] %vm390, %v1170
      %1268 = vst.msk [vmem:[%s156 + $0x208] sm:$0xff] %vm1241, %v1172
      %1269 = vst.msk [vmem:[%s156 + $0x210] sm:$0xff] %vm390, %v1172
      %1270 = vst.msk [vmem:[%s156 + $0x230] sm:$0xff] %vm1241, %v1174
      %1271 = vst.msk [vmem:[%s156 + $0x238] sm:$0xff] %vm390, %v1174
      %1272 = vst.msk [vmem:[%s156 + $0x258] sm:$0xff] %vm1241, %v1176
      %1273 = vst.msk [vmem:[%s156 + $0x260] sm:$0xff] %vm390, %v1176
      %1274 = vst.msk [vmem:[%s156 + $0x280] sm:$0xff] %vm1241, %v1178
      %1275 = vst.msk [vmem:[%s156 + $0x288] sm:$0xff] %vm390, %v1178
      %1276 = vst.msk [vmem:[%s156 + $0x2a8] sm:$0xff] %vm1241, %v1180
      %1277 = vst.msk [vmem:[%s156 + $0x2b0] sm:$0xff] %vm390, %v1180
      %1278 = vst.msk [vmem:[%s156 + $0x2d0] sm:$0xff] %vm1241, %v1182
      %1279 = vst.msk [vmem:[%s156 + $0x2d8] sm:$0xff] %vm390, %v1182
      %1280 = vst.msk [vmem:[%s156 + $0x2f8] sm:$0xff] %vm1241, %v1184
      %1281 = vst.msk [vmem:[%s156 + $0x300] sm:$0xff] %vm390, %v1184
      %1282 = vst.msk [vmem:[%s156 + $0x320] sm:$0xff] %vm1241, %v1186
      %1283 = vst.msk [vmem:[%s156 + $0x328] sm:$0xff] %vm390, %v1186
      %1284 = vst.msk [vmem:[%s156 + $0x348] sm:$0xff] %vm1241, %v1188
      %1285 = vst.msk [vmem:[%s156 + $0x350] sm:$0xff] %vm390, %v1188
      %1286 = vst.msk [vmem:[%s156 + $0x370] sm:$0xff] %vm1241, %v1190
      %1287 = vst.msk [vmem:[%s156 + $0x378] sm:$0xff] %vm390, %v1190
      %1288 = vst.msk [vmem:[%s156 + $0x398] sm:$0xff] %vm1241, %v1192
      %1289 = vst.msk [vmem:[%s156 + $0x3a0] sm:$0xff] %vm390, %v1192
      %1290 = vst.msk [vmem:[%s156 + $0x3c0] sm:$0xff] %vm1241, %v1194
      %1291 = vst.msk [vmem:[%s156 + $0x3c8] sm:$0xff] %vm390, %v1194
      %1292 = vst.msk [vmem:[%s156 + $0x3e8] sm:$0xff] %vm1241, %v1196
      %1293 = vst.msk [vmem:[%s156 + $0x3f0] sm:$0xff] %vm390, %v1196
      %1294 = vst.msk [vmem:[%s156 + $0x410] sm:$0xff] %vm1241, %v1198
      %1295 = vst.msk [vmem:[%s156 + $0x418] sm:$0xff] %vm390, %v1198
      %1296 = vst.msk [vmem:[%s156 + $0x438] sm:$0xff] %vm1241, %v1200
      %1297 = vst.msk [vmem:[%s156 + $0x440] sm:$0xff] %vm390, %v1200
      %1298 = vst.msk [vmem:[%s156 + $0x460] sm:$0xff] %vm1241, %v1202
      %1299 = vst.msk [vmem:[%s156 + $0x468] sm:$0xff] %vm390, %v1202
      %1300 = vst.msk [vmem:[%s156 + $0x488] sm:$0xff] %vm1241, %v1204
      %1301 = vst.msk [vmem:[%s156 + $0x490] sm:$0xff] %vm390, %v1204
      %1302 = vst.msk [vmem:[%s156 + $0x4b0] sm:$0xff] %vm1241, %v1206
      %1303 = vst.msk [vmem:[%s156 + $0x4b8] sm:$0xff] %vm390, %v1206
      %1304 = vst.msk [vmem:[%s156 + $0x4d8] sm:$0xff] %vm1241, %v1208
      %1305 = vst.msk [vmem:[%s156 + $0x4e0] sm:$0xff] %vm390, %v1208
      %1306 = vst.msk [vmem:[%s588] sm:$0xff] %vm1241, %v1146
      %1307 = vst.msk [vmem:[%s588 + $0x8] sm:$0xff] %vm390, %v1146
      %1308 = vst.msk [vmem:[%s588 + $0x28] sm:$0xff] %vm1241, %v1148
      %1309 = vst.msk [vmem:[%s588 + $0x30] sm:$0xff] %vm390, %v1148
      %1310 = vst.msk [vmem:[%s588 + $0x50] sm:$0xff] %vm1241, %v1150
      %1311 = vst.msk [vmem:[%s588 + $0x58] sm:$0xff] %vm390, %v1150
      %1312 = vst.msk [vmem:[%s588 + $0x78] sm:$0xff] %vm1241, %v1152
      %1313 = vst.msk [vmem:[%s588 + $0x80] sm:$0xff] %vm390, %v1152
      %1314 = vst.msk [vmem:[%s588 + $0xa0] sm:$0xff] %vm1241, %v1154
      %1315 = vst.msk [vmem:[%s588 + $0xa8] sm:$0xff] %vm390, %v1154
      %1316 = vst.msk [vmem:[%s588 + $0xc8] sm:$0xff] %vm1241, %v1156
      %1317 = vst.msk [vmem:[%s588 + $0xd0] sm:$0xff] %vm390, %v1156
      %1318 = vst.msk [vmem:[%s588 + $0xf0] sm:$0xff] %vm1241, %v1158
      %1319 = vst.msk [vmem:[%s588 + $0xf8] sm:$0xff] %vm390, %v1158
      %1320 = vst.msk [vmem:[%s588 + $0x118] sm:$0xff] %vm1241, %v1160
      %1321 = vst.msk [vmem:[%s588 + $0x120] sm:$0xff] %vm390, %v1160
      %1322 = vst.msk [vmem:[%s588 + $0x140] sm:$0xff] %vm1241, %v1162
      %1323 = vst.msk [vmem:[%s588 + $0x148] sm:$0xff] %vm390, %v1162
      %1324 = vst.msk [vmem:[%s588 + $0x168] sm:$0xff] %vm1241, %v1164
      %1325 = vst.msk [vmem:[%s588 + $0x170] sm:$0xff] %vm390, %v1164
      %1326 = vst.msk [vmem:[%s588 + $0x190] sm:$0xff] %vm1241, %v1166
      %1327 = vst.msk [vmem:[%s588 + $0x198] sm:$0xff] %vm390, %v1166
      %1328 = vst.msk [vmem:[%s588 + $0x1b8] sm:$0xff] %vm1241, %v1168
      %1329 = vst.msk [vmem:[%s588 + $0x1c0] sm:$0xff] %vm390, %v1168
      %1330 = vst.msk [vmem:[%s588 + $0x1e0] sm:$0xff] %vm1241, %v1170
      %1331 = vst.msk [vmem:[%s588 + $0x1e8] sm:$0xff] %vm390, %v1170
      %1332 = vst.msk [vmem:[%s588 + $0x208] sm:$0xff] %vm1241, %v1172
      %1333 = vst.msk [vmem:[%s588 + $0x210] sm:$0xff] %vm390, %v1172
      %1334 = vst.msk [vmem:[%s588 + $0x230] sm:$0xff] %vm1241, %v1174
      %1335 = vst.msk [vmem:[%s588 + $0x238] sm:$0xff] %vm390, %v1174
      %1336 = vst.msk [vmem:[%s588 + $0x258] sm:$0xff] %vm1241, %v1176
      %1337 = vst.msk [vmem:[%s588 + $0x260] sm:$0xff] %vm390, %v1176
      %1338 = vst.msk [vmem:[%s588 + $0x280] sm:$0xff] %vm1241, %v1178
      %1339 = vst.msk [vmem:[%s588 + $0x288] sm:$0xff] %vm390, %v1178
      %1340 = vst.msk [vmem:[%s588 + $0x2a8] sm:$0xff] %vm1241, %v1180
      %1341 = vst.msk [vmem:[%s588 + $0x2b0] sm:$0xff] %vm390, %v1180
      %1342 = vst.msk [vmem:[%s588 + $0x2d0] sm:$0xff] %vm1241, %v1182
      %1343 = vst.msk [vmem:[%s588 + $0x2d8] sm:$0xff] %vm390, %v1182
      %1344 = vst.msk [vmem:[%s588 + $0x2f8] sm:$0xff] %vm1241, %v1184
      %1345 = vst.msk [vmem:[%s588 + $0x300] sm:$0xff] %vm390, %v1184
      %1346 = vst.msk [vmem:[%s588 + $0x320] sm:$0xff] %vm1241, %v1186
      %1347 = vst.msk [vmem:[%s588 + $0x328] sm:$0xff] %vm390, %v1186
      %1348 = vst.msk [vmem:[%s588 + $0x348] sm:$0xff] %vm1241, %v1188
      %1349 = vst.msk [vmem:[%s588 + $0x350] sm:$0xff] %vm390, %v1188
      %1350 = vst.msk [vmem:[%s588 + $0x370] sm:$0xff] %vm1241, %v1190
      %1351 = vst.msk [vmem:[%s588 + $0x378] sm:$0xff] %vm390, %v1190
      %1352 = vst.msk [vmem:[%s588 + $0x398] sm:$0xff] %vm1241, %v1192
      %1353 = vst.msk [vmem:[%s588 + $0x3a0] sm:$0xff] %vm390, %v1192
      %1354 = vst.msk [vmem:[%s588 + $0x3c0] sm:$0xff] %vm1241, %v1194
      %1355 = vst.msk [vmem:[%s588 + $0x3c8] sm:$0xff] %vm390, %v1194
      %1356 = vst.msk [vmem:[%s588 + $0x3e8] sm:$0xff] %vm1241, %v1196
      %1357 = vst.msk [vmem:[%s588 + $0x3f0] sm:$0xff] %vm390, %v1196
      %1358 = vst.msk [vmem:[%s588 + $0x410] sm:$0xff] %vm1241, %v1198
      %1359 = vst.msk [vmem:[%s588 + $0x418] sm:$0xff] %vm390, %v1198
      %1360 = vst.msk [vmem:[%s588 + $0x438] sm:$0xff] %vm1241, %v1200
      %1361 = vst.msk [vmem:[%s588 + $0x440] sm:$0xff] %vm390, %v1200
      %1362 = vst.msk [vmem:[%s588 + $0x460] sm:$0xff] %vm1241, %v1202
      %1363 = vst.msk [vmem:[%s588 + $0x468] sm:$0xff] %vm390, %v1202
      %1364 = vst.msk [vmem:[%s588 + $0x488] sm:$0xff] %vm1241, %v1204
      %1365 = vst.msk [vmem:[%s588 + $0x490] sm:$0xff] %vm390, %v1204
      %1366 = vst.msk [vmem:[%s588 + $0x4b0] sm:$0xff] %vm1241, %v1206
      %1367 = vst.msk [vmem:[%s588 + $0x4b8] sm:$0xff] %vm390, %v1206
      %1368 = vst.msk [vmem:[%s588 + $0x4d8] sm:$0xff] %vm1241, %v1208
      %1369 = vst.msk [vmem:[%s588 + $0x4e0] sm:$0xff] %vm390, %v1208
      %1370 = vst.msk [vmem:[%s786] sm:$0xff] %vm1241, %v1146
      %1371 = vst.msk [vmem:[%s786 + $0x8] sm:$0xff] %vm390, %v1146
      %1372 = vst.msk [vmem:[%s786 + $0x28] sm:$0xff] %vm1241, %v1148
      %1373 = vst.msk [vmem:[%s786 + $0x30] sm:$0xff] %vm390, %v1148
      %1374 = vst.msk [vmem:[%s786 + $0x50] sm:$0xff] %vm1241, %v1150
      %1375 = vst.msk [vmem:[%s786 + $0x58] sm:$0xff] %vm390, %v1150
      %1376 = vst.msk [vmem:[%s786 + $0x78] sm:$0xff] %vm1241, %v1152
      %1377 = vst.msk [vmem:[%s786 + $0x80] sm:$0xff] %vm390, %v1152
      %1378 = vst.msk [vmem:[%s786 + $0xa0] sm:$0xff] %vm1241, %v1154
      %1379 = vst.msk [vmem:[%s786 + $0xa8] sm:$0xff] %vm390, %v1154
      %1380 = vst.msk [vmem:[%s786 + $0xc8] sm:$0xff] %vm1241, %v1156
      %1381 = vst.msk [vmem:[%s786 + $0xd0] sm:$0xff] %vm390, %v1156
      %1382 = vst.msk [vmem:[%s786 + $0xf0] sm:$0xff] %vm1241, %v1158
      %1383 = vst.msk [vmem:[%s786 + $0xf8] sm:$0xff] %vm390, %v1158
      %1384 = vst.msk [vmem:[%s786 + $0x118] sm:$0xff] %vm1241, %v1160
      %1385 = vst.msk [vmem:[%s786 + $0x120] sm:$0xff] %vm390, %v1160
      %1386 = vst.msk [vmem:[%s786 + $0x140] sm:$0xff] %vm1241, %v1162
      %1387 = vst.msk [vmem:[%s786 + $0x148] sm:$0xff] %vm390, %v1162
      %1388 = vst.msk [vmem:[%s786 + $0x168] sm:$0xff] %vm1241, %v1164
      %1389 = vst.msk [vmem:[%s786 + $0x170] sm:$0xff] %vm390, %v1164
      %1390 = vst.msk [vmem:[%s786 + $0x190] sm:$0xff] %vm1241, %v1166
      %1391 = vst.msk [vmem:[%s786 + $0x198] sm:$0xff] %vm390, %v1166
      %1392 = vst.msk [vmem:[%s786 + $0x1b8] sm:$0xff] %vm1241, %v1168
      %1393 = vst.msk [vmem:[%s786 + $0x1c0] sm:$0xff] %vm390, %v1168
      %1394 = vst.msk [vmem:[%s786 + $0x1e0] sm:$0xff] %vm1241, %v1170
      %1395 = vst.msk [vmem:[%s786 + $0x1e8] sm:$0xff] %vm390, %v1170
      %1396 = vst.msk [vmem:[%s786 + $0x208] sm:$0xff] %vm1241, %v1172
      %1397 = vst.msk [vmem:[%s786 + $0x210] sm:$0xff] %vm390, %v1172
      %1398 = vst.msk [vmem:[%s786 + $0x230] sm:$0xff] %vm1241, %v1174
      %1399 = vst.msk [vmem:[%s786 + $0x238] sm:$0xff] %vm390, %v1174
      %1400 = vst.msk [vmem:[%s786 + $0x258] sm:$0xff] %vm1241, %v1176
      %1401 = vst.msk [vmem:[%s786 + $0x260] sm:$0xff] %vm390, %v1176
      %1402 = vst.msk [vmem:[%s786 + $0x280] sm:$0xff] %vm1241, %v1178
      %1403 = vst.msk [vmem:[%s786 + $0x288] sm:$0xff] %vm390, %v1178
      %1404 = vst.msk [vmem:[%s786 + $0x2a8] sm:$0xff] %vm1241, %v1180
      %1405 = vst.msk [vmem:[%s786 + $0x2b0] sm:$0xff] %vm390, %v1180
      %1406 = vst.msk [vmem:[%s786 + $0x2d0] sm:$0xff] %vm1241, %v1182
      %1407 = vst.msk [vmem:[%s786 + $0x2d8] sm:$0xff] %vm390, %v1182
      %1408 = vst.msk [vmem:[%s786 + $0x2f8] sm:$0xff] %vm1241, %v1184
      %1409 = vst.msk [vmem:[%s786 + $0x300] sm:$0xff] %vm390, %v1184
      %1410 = vst.msk [vmem:[%s786 + $0x320] sm:$0xff] %vm1241, %v1186
      %1411 = vst.msk [vmem:[%s786 + $0x328] sm:$0xff] %vm390, %v1186
      %1412 = vst.msk [vmem:[%s786 + $0x348] sm:$0xff] %vm1241, %v1188
      %1413 = vst.msk [vmem:[%s786 + $0x350] sm:$0xff] %vm390, %v1188
      %1414 = vst.msk [vmem:[%s786 + $0x370] sm:$0xff] %vm1241, %v1190
      %1415 = vst.msk [vmem:[%s786 + $0x378] sm:$0xff] %vm390, %v1190
      %1416 = vst.msk [vmem:[%s786 + $0x398] sm:$0xff] %vm1241, %v1192
      %1417 = vst.msk [vmem:[%s786 + $0x3a0] sm:$0xff] %vm390, %v1192
      %1418 = vst.msk [vmem:[%s786 + $0x3c0] sm:$0xff] %vm1241, %v1194
      %1419 = vst.msk [vmem:[%s786 + $0x3c8] sm:$0xff] %vm390, %v1194
      %1420 = vst.msk [vmem:[%s786 + $0x3e8] sm:$0xff] %vm1241, %v1196
      %1421 = vst.msk [vmem:[%s786 + $0x3f0] sm:$0xff] %vm390, %v1196
      %1422 = vst.msk [vmem:[%s786 + $0x410] sm:$0xff] %vm1241, %v1198
      %1423 = vst.msk [vmem:[%s786 + $0x418] sm:$0xff] %vm390, %v1198
      %1424 = vst.msk [vmem:[%s786 + $0x438] sm:$0xff] %vm1241, %v1200
      %1425 = vst.msk [vmem:[%s786 + $0x440] sm:$0xff] %vm390, %v1200
      %1426 = vst.msk [vmem:[%s786 + $0x460] sm:$0xff] %vm1241, %v1202
      %1427 = vst.msk [vmem:[%s786 + $0x468] sm:$0xff] %vm390, %v1202
      %1428 = vst.msk [vmem:[%s786 + $0x488] sm:$0xff] %vm1241, %v1204
      %1429 = vst.msk [vmem:[%s786 + $0x490] sm:$0xff] %vm390, %v1204
      %1430 = vst.msk [vmem:[%s786 + $0x4b0] sm:$0xff] %vm1241, %v1206
      %1431 = vst.msk [vmem:[%s786 + $0x4b8] sm:$0xff] %vm390, %v1206
      %1432 = vst.msk [vmem:[%s786 + $0x4d8] sm:$0xff] %vm1241, %v1208
      %1433 = vst.msk [vmem:[%s786 + $0x4e0] sm:$0xff] %vm390, %v1208
      %1434 = vst.msk [vmem:[%s984] sm:$0xff] %vm1241, %v1146
      %1435 = vst.msk [vmem:[%s984 + $0x8] sm:$0xff] %vm390, %v1146
      %1436 = vst.msk [vmem:[%s984 + $0x28] sm:$0xff] %vm1241, %v1148
      %1437 = vst.msk [vmem:[%s984 + $0x30] sm:$0xff] %vm390, %v1148
      %1438 = vst.msk [vmem:[%s984 + $0x50] sm:$0xff] %vm1241, %v1150
      %1439 = vst.msk [vmem:[%s984 + $0x58] sm:$0xff] %vm390, %v1150
      %1440 = vst.msk [vmem:[%s984 + $0x78] sm:$0xff] %vm1241, %v1152
      %1441 = vst.msk [vmem:[%s984 + $0x80] sm:$0xff] %vm390, %v1152
      %1442 = vst.msk [vmem:[%s984 + $0xa0] sm:$0xff] %vm1241, %v1154
      %1443 = vst.msk [vmem:[%s984 + $0xa8] sm:$0xff] %vm390, %v1154
      %1444 = vst.msk [vmem:[%s984 + $0xc8] sm:$0xff] %vm1241, %v1156
      %1445 = vst.msk [vmem:[%s984 + $0xd0] sm:$0xff] %vm390, %v1156
      %1446 = vst.msk [vmem:[%s984 + $0xf0] sm:$0xff] %vm1241, %v1158
      %1447 = vst.msk [vmem:[%s984 + $0xf8] sm:$0xff] %vm390, %v1158
      %1448 = vst.msk [vmem:[%s984 + $0x118] sm:$0xff] %vm1241, %v1160
      %1449 = vst.msk [vmem:[%s984 + $0x120] sm:$0xff] %vm390, %v1160
      %1450 = vst.msk [vmem:[%s984 + $0x140] sm:$0xff] %vm1241, %v1162
      %1451 = vst.msk [vmem:[%s984 + $0x148] sm:$0xff] %vm390, %v1162
      %1452 = vst.msk [vmem:[%s984 + $0x168] sm:$0xff] %vm1241, %v1164
      %1453 = vst.msk [vmem:[%s984 + $0x170] sm:$0xff] %vm390, %v1164
      %1454 = vst.msk [vmem:[%s984 + $0x190] sm:$0xff] %vm1241, %v1166
      %1455 = vst.msk [vmem:[%s984 + $0x198] sm:$0xff] %vm390, %v1166
      %1456 = vst.msk [vmem:[%s984 + $0x1b8] sm:$0xff] %vm1241, %v1168
      %1457 = vst.msk [vmem:[%s984 + $0x1c0] sm:$0xff] %vm390, %v1168
      %1458 = vst.msk [vmem:[%s984 + $0x1e0] sm:$0xff] %vm1241, %v1170
      %1459 = vst.msk [vmem:[%s984 + $0x1e8] sm:$0xff] %vm390, %v1170
      %1460 = vst.msk [vmem:[%s984 + $0x208] sm:$0xff] %vm1241, %v1172
      %1461 = vst.msk [vmem:[%s984 + $0x210] sm:$0xff] %vm390, %v1172
      %1462 = vst.msk [vmem:[%s984 + $0x230] sm:$0xff] %vm1241, %v1174
      %1463 = vst.msk [vmem:[%s984 + $0x238] sm:$0xff] %vm390, %v1174
      %1464 = vst.msk [vmem:[%s984 + $0x258] sm:$0xff] %vm1241, %v1176
      %1465 = vst.msk [vmem:[%s984 + $0x260] sm:$0xff] %vm390, %v1176
      %1466 = vst.msk [vmem:[%s984 + $0x280] sm:$0xff] %vm1241, %v1178
      %1467 = vst.msk [vmem:[%s984 + $0x288] sm:$0xff] %vm390, %v1178
      %1468 = vst.msk [vmem:[%s984 + $0x2a8] sm:$0xff] %vm1241, %v1180
      %1469 = vst.msk [vmem:[%s984 + $0x2b0] sm:$0xff] %vm390, %v1180
      %1470 = vst.msk [vmem:[%s984 + $0x2d0] sm:$0xff] %vm1241, %v1182
      %1471 = vst.msk [vmem:[%s984 + $0x2d8] sm:$0xff] %vm390, %v1182
      %1472 = vst.msk [vmem:[%s984 + $0x2f8] sm:$0xff] %vm1241, %v1184
      %1473 = vst.msk [vmem:[%s984 + $0x300] sm:$0xff] %vm390, %v1184
      %1474 = vst.msk [vmem:[%s984 + $0x320] sm:$0xff] %vm1241, %v1186
      %1475 = vst.msk [vmem:[%s984 + $0x328] sm:$0xff] %vm390, %v1186
      %1476 = vst.msk [vmem:[%s984 + $0x348] sm:$0xff] %vm1241, %v1188
      %1477 = vst.msk [vmem:[%s984 + $0x350] sm:$0xff] %vm390, %v1188
      %1478 = vst.msk [vmem:[%s984 + $0x370] sm:$0xff] %vm1241, %v1190
      %1479 = vst.msk [vmem:[%s984 + $0x378] sm:$0xff] %vm390, %v1190
      %1480 = vst.msk [vmem:[%s984 + $0x398] sm:$0xff] %vm1241, %v1192
      %1481 = vst.msk [vmem:[%s984 + $0x3a0] sm:$0xff] %vm390, %v1192
      %1482 = vst.msk [vmem:[%s984 + $0x3c0] sm:$0xff] %vm1241, %v1194
      %1483 = vst.msk [vmem:[%s984 + $0x3c8] sm:$0xff] %vm390, %v1194
      %1484 = vst.msk [vmem:[%s984 + $0x3e8] sm:$0xff] %vm1241, %v1196
      %1485 = vst.msk [vmem:[%s984 + $0x3f0] sm:$0xff] %vm390, %v1196
      %1486 = vst.msk [vmem:[%s984 + $0x410] sm:$0xff] %vm1241, %v1198
      %1487 = vst.msk [vmem:[%s984 + $0x418] sm:$0xff] %vm390, %v1198
      %1488 = vst.msk [vmem:[%s984 + $0x438] sm:$0xff] %vm1241, %v1200
      %1489 = vst.msk [vmem:[%s984 + $0x440] sm:$0xff] %vm390, %v1200
      %1490 = vst.msk [vmem:[%s984 + $0x460] sm:$0xff] %vm1241, %v1202
      %1491 = vst.msk [vmem:[%s984 + $0x468] sm:$0xff] %vm390, %v1202
      %1492 = vst.msk [vmem:[%s984 + $0x488] sm:$0xff] %vm1241, %v1204
      %1493 = vst.msk [vmem:[%s984 + $0x490] sm:$0xff] %vm390, %v1204
      %1494 = vst.msk [vmem:[%s984 + $0x4b0] sm:$0xff] %vm1241, %v1206
      %1495 = vst.msk [vmem:[%s984 + $0x4b8] sm:$0xff] %vm390, %v1206
      %1496 = vst.msk [vmem:[%s984 + $0x4d8] sm:$0xff] %vm1241, %v1208
      %1497 = vst.msk [vmem:[%s984 + $0x4e0] sm:$0xff] %vm390, %v1208
      %v1498 = vld [vmem:[%s145 + $0x130] sm:$0xff]
      %v1499 = vld [vmem:[%s145 + $0x138] sm:$0xff]
      %v1500 = vld [vmem:[%s145 + $0x140] sm:$0xff]
      %v1501 = vld [vmem:[%s145 + $0x148] sm:$0xff]
      %v1502 = vld [vmem:[%s145 + $0x150] sm:$0xff]
      %v1503 = vld [vmem:[%s145 + $0x158] sm:$0xff]
      %v1504 = vld [vmem:[%s145 + $0x160] sm:$0xff]
      %v1505 = vld [vmem:[%s145 + $0x168] sm:$0xff]
      %v1506 = vld [vmem:[%s145 + $0x170] sm:$0xff]
      %v1507 = vld [vmem:[%s145 + $0x178] sm:$0xff]
      %v1508 = vld [vmem:[%s145 + $0x180] sm:$0xff]
      %v1509 = vld [vmem:[%s145 + $0x188] sm:$0xff]
      %v1510 = vld [vmem:[%s145 + $0x190] sm:$0xff]
      %v1511 = vld [vmem:[%s145 + $0x198] sm:$0xff]
      %v1512 = vld [vmem:[%s145 + $0x1a0] sm:$0xff]
      %v1513 = vld [vmem:[%s145 + $0x1a8] sm:$0xff]
      %v1514 = vld [vmem:[%s145 + $0x1b0] sm:$0xff]
      %v1515 = vld [vmem:[%s145 + $0x1b8] sm:$0xff]
      %v1516 = vld [vmem:[%s145 + $0x1c0] sm:$0xff]
      %v1517 = vld [vmem:[%s145 + $0x1c8] sm:$0xff]
      %v1518 = vld [vmem:[%s145 + $0x1d0] sm:$0xff]
      %v1519 = vld [vmem:[%s145 + $0x1d8] sm:$0xff]
      %v1520 = vld [vmem:[%s145 + $0x1e0] sm:$0xff]
      %v1521 = vld [vmem:[%s145 + $0x1e8] sm:$0xff]
      %v1522 = vld [vmem:[%s145 + $0x1f0] sm:$0xff]
      %v1523 = vld [vmem:[%s145 + $0x1f8] sm:$0xff]
      %v1524 = vld [vmem:[%s145 + $0x200] sm:$0xff]
      %v1525 = vld [vmem:[%s145 + $0x208] sm:$0xff]
      %v1526 = vld [vmem:[%s145 + $0x210] sm:$0xff]
      %v1527 = vld [vmem:[%s145 + $0x218] sm:$0xff]
      %v1528 = vld [vmem:[%s145 + $0x220] sm:$0xff]
      %v1529 = vld [vmem:[%s145 + $0x228] sm:$0xff]
      %1530 = vxpose.xlu0.b32.start [1/16] %v1498, 128
      %1531 = vxpose.xlu0.b32.cont [2/16] %v1500, 128
      %1532 = vxpose.xlu0.b32.cont [3/16] %v1502, 128
      %1533 = vxpose.xlu0.b32.cont [4/16] %v1504, 128
      %1534 = vxpose.xlu0.b32.cont [5/16] %v1506, 128
      %1535 = vxpose.xlu0.b32.cont [6/16] %v1508, 128
      %1536 = vxpose.xlu0.b32.cont [7/16] %v1510, 128
      %1537 = vxpose.xlu0.b32.cont [8/16] %v1512, 128
      %1538 = vxpose.xlu0.b32.cont [9/16] %v1514, 128
      %1539 = vxpose.xlu0.b32.cont [10/16] %v1516, 128
      %1540 = vxpose.xlu0.b32.cont [11/16] %v1518, 128
      %1541 = vxpose.xlu0.b32.cont [12/16] %v1520, 128
      %1542 = vxpose.xlu0.b32.cont [13/16] %v1522, 128
      %1543 = vxpose.xlu0.b32.cont [14/16] %v1524, 128
      %1544 = vxpose.xlu0.b32.cont [15/16] %v1526, 128
      %1545 = vxpose.xlu0.b32.end [16/16] %v1528, 128
      %v1546 = vpop.trf.xlu0
      %v1547 = vpop.trf.xlu0
      %v1548 = vpop.trf.xlu0
      %v1549 = vpop.trf.xlu0
      %v1550 = vpop.trf.xlu0
      %v1551 = vpop.trf.xlu0
      %v1552 = vpop.trf.xlu0
      %v1553 = vpop.trf.xlu0
      %v1554 = vpop.trf.xlu0
      %v1555 = vpop.trf.xlu0
      %v1556 = vpop.trf.xlu0
      %v1557 = vpop.trf.xlu0
      %v1558 = vpop.trf.xlu0
      %v1559 = vpop.trf.xlu0
      %v1560 = vpop.trf.xlu0
      %v1561 = vpop.trf.xlu0
      %1562 = vxpose.xlu0.b32.start [1/16] %v1499, 128
      %1563 = vxpose.xlu0.b32.cont [2/16] %v1501, 128
      %1564 = vxpose.xlu0.b32.cont [3/16] %v1503, 128
      %1565 = vxpose.xlu0.b32.cont [4/16] %v1505, 128
      %1566 = vxpose.xlu0.b32.cont [5/16] %v1507, 128
      %1567 = vxpose.xlu0.b32.cont [6/16] %v1509, 128
      %1568 = vxpose.xlu0.b32.cont [7/16] %v1511, 128
      %1569 = vxpose.xlu0.b32.cont [8/16] %v1513, 128
      %1570 = vxpose.xlu0.b32.cont [9/16] %v1515, 128
      %1571 = vxpose.xlu0.b32.cont [10/16] %v1517, 128
      %1572 = vxpose.xlu0.b32.cont [11/16] %v1519, 128
      %1573 = vxpose.xlu0.b32.cont [12/16] %v1521, 128
      %1574 = vxpose.xlu0.b32.cont [13/16] %v1523, 128
      %1575 = vxpose.xlu0.b32.cont [14/16] %v1525, 128
      %1576 = vxpose.xlu0.b32.cont [15/16] %v1527, 128
      %1577 = vxpose.xlu0.b32.end [16/16] %v1529, 128
      %v1578 = vpop.trf.xlu0
      %v1579 = vpop.trf.xlu0
      %v1580 = vpop.trf.xlu0
      %v1581 = vpop.trf.xlu0
      %v1582 = vpop.trf.xlu0
      %v1583 = vpop.trf.xlu0
      %v1584 = vpop.trf.xlu0
      %v1585 = vpop.trf.xlu0
      %v1586 = vpop.trf.xlu0
      %v1587 = vpop.trf.xlu0
      %v1588 = vpop.trf.xlu0
      %v1589 = vpop.trf.xlu0
      %v1590 = vpop.trf.xlu0
      %v1591 = vpop.trf.xlu0
      %v1592 = vpop.trf.xlu0
      %v1593 = vpop.trf.xlu0
      %1626 = vrot.lane.b32.xlu0 %v1546, 6
      %v1627 = vpop.permute.xlu0 %1626
      %1628 = vrot.lane.b32.xlu0 %v1547, 6
      %v1629 = vpop.permute.xlu0 %1628
      %1630 = vrot.lane.b32.xlu0 %v1548, 6
      %v1631 = vpop.permute.xlu0 %1630
      %1632 = vrot.lane.b32.xlu0 %v1549, 6
      %v1633 = vpop.permute.xlu0 %1632
      %1634 = vrot.lane.b32.xlu0 %v1550, 6
      %v1635 = vpop.permute.xlu0 %1634
      %1636 = vrot.lane.b32.xlu0 %v1551, 6
      %v1637 = vpop.permute.xlu0 %1636
      %1638 = vrot.lane.b32.xlu0 %v1552, 6
      %v1639 = vpop.permute.xlu0 %1638
      %1640 = vrot.lane.b32.xlu0 %v1553, 6
      %v1641 = vpop.permute.xlu0 %1640
      %1642 = vrot.lane.b32.xlu0 %v1554, 6
      %v1643 = vpop.permute.xlu0 %1642
      %1644 = vrot.lane.b32.xlu0 %v1555, 6
      %v1645 = vpop.permute.xlu0 %1644
      %1646 = vrot.lane.b32.xlu0 %v1556, 6
      %v1647 = vpop.permute.xlu0 %1646
      %1648 = vrot.lane.b32.xlu0 %v1557, 6
      %v1649 = vpop.permute.xlu0 %1648
      %1650 = vrot.lane.b32.xlu0 %v1558, 6
      %v1651 = vpop.permute.xlu0 %1650
      %1652 = vrot.lane.b32.xlu0 %v1559, 6
      %v1653 = vpop.permute.xlu0 %1652
      %1654 = vrot.lane.b32.xlu0 %v1560, 6
      %v1655 = vpop.permute.xlu0 %1654
      %1656 = vrot.lane.b32.xlu0 %v1561, 6
      %v1657 = vpop.permute.xlu0 %1656
      %1658 = vrot.lane.b32.xlu0 %v1578, 6
      %v1659 = vpop.permute.xlu0 %1658
      %1660 = vrot.lane.b32.xlu0 %v1579, 6
      %v1661 = vpop.permute.xlu0 %1660
      %1662 = vrot.lane.b32.xlu0 %v1580, 6
      %v1663 = vpop.permute.xlu0 %1662
      %1664 = vrot.lane.b32.xlu0 %v1581, 6
      %v1665 = vpop.permute.xlu0 %1664
      %1666 = vrot.lane.b32.xlu0 %v1582, 6
      %v1667 = vpop.permute.xlu0 %1666
      %1668 = vrot.lane.b32.xlu0 %v1583, 6
      %v1669 = vpop.permute.xlu0 %1668
      %1670 = vrot.lane.b32.xlu0 %v1584, 6
      %v1671 = vpop.permute.xlu0 %1670
      %1672 = vrot.lane.b32.xlu0 %v1585, 6
      %v1673 = vpop.permute.xlu0 %1672
      %1674 = vrot.lane.b32.xlu0 %v1586, 6
      %v1675 = vpop.permute.xlu0 %1674
      %1676 = vrot.lane.b32.xlu0 %v1587, 6
      %v1677 = vpop.permute.xlu0 %1676
      %1678 = vrot.lane.b32.xlu0 %v1588, 6
      %v1679 = vpop.permute.xlu0 %1678
      %1680 = vrot.lane.b32.xlu0 %v1589, 6
      %v1681 = vpop.permute.xlu0 %1680
      %1682 = vrot.lane.b32.xlu0 %v1590, 6
      %v1683 = vpop.permute.xlu0 %1682
      %1684 = vrot.lane.b32.xlu0 %v1591, 6
      %v1685 = vpop.permute.xlu0 %1684
      %1686 = vrot.lane.b32.xlu0 %v1592, 6
      %v1687 = vpop.permute.xlu0 %1686
      %1688 = vrot.lane.b32.xlu0 %v1593, 6
      %v1689 = vpop.permute.xlu0 %1688
      %1722 = vst.msk [vmem:[%s156 + $0x8] sm:$0xff] %vm1241, %v1627
      %1723 = vst.msk [vmem:[%s156 + $0x10] sm:$0xff] %vm390, %v1627
      %1724 = vst.msk [vmem:[%s156 + $0x30] sm:$0xff] %vm1241, %v1629
      %1725 = vst.msk [vmem:[%s156 + $0x38] sm:$0xff] %vm390, %v1629
      %1726 = vst.msk [vmem:[%s156 + $0x58] sm:$0xff] %vm1241, %v1631
      %1727 = vst.msk [vmem:[%s156 + $0x60] sm:$0xff] %vm390, %v1631
      %1728 = vst.msk [vmem:[%s156 + $0x80] sm:$0xff] %vm1241, %v1633
      %1729 = vst.msk [vmem:[%s156 + $0x88] sm:$0xff] %vm390, %v1633
      %1730 = vst.msk [vmem:[%s156 + $0xa8] sm:$0xff] %vm1241, %v1635
      %1731 = vst.msk [vmem:[%s156 + $0xb0] sm:$0xff] %vm390, %v1635
      %1732 = vst.msk [vmem:[%s156 + $0xd0] sm:$0xff] %vm1241, %v1637
      %1733 = vst.msk [vmem:[%s156 + $0xd8] sm:$0xff] %vm390, %v1637
      %1734 = vst.msk [vmem:[%s156 + $0xf8] sm:$0xff] %vm1241, %v1639
      %1735 = vst.msk [vmem:[%s156 + $0x100] sm:$0xff] %vm390, %v1639
      %1736 = vst.msk [vmem:[%s156 + $0x120] sm:$0xff] %vm1241, %v1641
      %1737 = vst.msk [vmem:[%s156 + $0x128] sm:$0xff] %vm390, %v1641
      %1738 = vst.msk [vmem:[%s156 + $0x148] sm:$0xff] %vm1241, %v1643
      %1739 = vst.msk [vmem:[%s156 + $0x150] sm:$0xff] %vm390, %v1643
      %1740 = vst.msk [vmem:[%s156 + $0x170] sm:$0xff] %vm1241, %v1645
      %1741 = vst.msk [vmem:[%s156 + $0x178] sm:$0xff] %vm390, %v1645
      %1742 = vst.msk [vmem:[%s156 + $0x198] sm:$0xff] %vm1241, %v1647
      %1743 = vst.msk [vmem:[%s156 + $0x1a0] sm:$0xff] %vm390, %v1647
      %1744 = vst.msk [vmem:[%s156 + $0x1c0] sm:$0xff] %vm1241, %v1649
      %1745 = vst.msk [vmem:[%s156 + $0x1c8] sm:$0xff] %vm390, %v1649
      %1746 = vst.msk [vmem:[%s156 + $0x1e8] sm:$0xff] %vm1241, %v1651
      %1747 = vst.msk [vmem:[%s156 + $0x1f0] sm:$0xff] %vm390, %v1651
      %1748 = vst.msk [vmem:[%s156 + $0x210] sm:$0xff] %vm1241, %v1653
      %1749 = vst.msk [vmem:[%s156 + $0x218] sm:$0xff] %vm390, %v1653
      %1750 = vst.msk [vmem:[%s156 + $0x238] sm:$0xff] %vm1241, %v1655
      %1751 = vst.msk [vmem:[%s156 + $0x240] sm:$0xff] %vm390, %v1655
      %1752 = vst.msk [vmem:[%s156 + $0x260] sm:$0xff] %vm1241, %v1657
      %1753 = vst.msk [vmem:[%s156 + $0x268] sm:$0xff] %vm390, %v1657
      %1754 = vst.msk [vmem:[%s156 + $0x288] sm:$0xff] %vm1241, %v1659
      %1755 = vst.msk [vmem:[%s156 + $0x290] sm:$0xff] %vm390, %v1659
      %1756 = vst.msk [vmem:[%s156 + $0x2b0] sm:$0xff] %vm1241, %v1661
      %1757 = vst.msk [vmem:[%s156 + $0x2b8] sm:$0xff] %vm390, %v1661
      %1758 = vst.msk [vmem:[%s156 + $0x2d8] sm:$0xff] %vm1241, %v1663
      %1759 = vst.msk [vmem:[%s156 + $0x2e0] sm:$0xff] %vm390, %v1663
      %1760 = vst.msk [vmem:[%s156 + $0x300] sm:$0xff] %vm1241, %v1665
      %1761 = vst.msk [vmem:[%s156 + $0x308] sm:$0xff] %vm390, %v1665
      %1762 = vst.msk [vmem:[%s156 + $0x328] sm:$0xff] %vm1241, %v1667
      %1763 = vst.msk [vmem:[%s156 + $0x330] sm:$0xff] %vm390, %v1667
      %1764 = vst.msk [vmem:[%s156 + $0x350] sm:$0xff] %vm1241, %v1669
      %1765 = vst.msk [vmem:[%s156 + $0x358] sm:$0xff] %vm390, %v1669
      %1766 = vst.msk [vmem:[%s156 + $0x378] sm:$0xff] %vm1241, %v1671
      %1767 = vst.msk [vmem:[%s156 + $0x380] sm:$0xff] %vm390, %v1671
      %1768 = vst.msk [vmem:[%s156 + $0x3a0] sm:$0xff] %vm1241, %v1673
      %1769 = vst.msk [vmem:[%s156 + $0x3a8] sm:$0xff] %vm390, %v1673
      %1770 = vst.msk [vmem:[%s156 + $0x3c8] sm:$0xff] %vm1241, %v1675
      %1771 = vst.msk [vmem:[%s156 + $0x3d0] sm:$0xff] %vm390, %v1675
      %1772 = vst.msk [vmem:[%s156 + $0x3f0] sm:$0xff] %vm1241, %v1677
      %1773 = vst.msk [vmem:[%s156 + $0x3f8] sm:$0xff] %vm390, %v1677
      %1774 = vst.msk [vmem:[%s156 + $0x418] sm:$0xff] %vm1241, %v1679
      %1775 = vst.msk [vmem:[%s156 + $0x420] sm:$0xff] %vm390, %v1679
      %1776 = vst.msk [vmem:[%s156 + $0x440] sm:$0xff] %vm1241, %v1681
      %1777 = vst.msk [vmem:[%s156 + $0x448] sm:$0xff] %vm390, %v1681
      %1778 = vst.msk [vmem:[%s156 + $0x468] sm:$0xff] %vm1241, %v1683
      %1779 = vst.msk [vmem:[%s156 + $0x470] sm:$0xff] %vm390, %v1683
      %1780 = vst.msk [vmem:[%s156 + $0x490] sm:$0xff] %vm1241, %v1685
      %1781 = vst.msk [vmem:[%s156 + $0x498] sm:$0xff] %vm390, %v1685
      %1782 = vst.msk [vmem:[%s156 + $0x4b8] sm:$0xff] %vm1241, %v1687
      %1783 = vst.msk [vmem:[%s156 + $0x4c0] sm:$0xff] %vm390, %v1687
      %1784 = vst.msk [vmem:[%s156 + $0x4e0] sm:$0xff] %vm1241, %v1689
      %1785 = vst.msk [vmem:[%s156 + $0x4e8] sm:$0xff] %vm390, %v1689
      %1786 = vst.msk [vmem:[%s588 + $0x8] sm:$0xff] %vm1241, %v1627
      %1787 = vst.msk [vmem:[%s588 + $0x10] sm:$0xff] %vm390, %v1627
      %1788 = vst.msk [vmem:[%s588 + $0x30] sm:$0xff] %vm1241, %v1629
      %1789 = vst.msk [vmem:[%s588 + $0x38] sm:$0xff] %vm390, %v1629
      %1790 = vst.msk [vmem:[%s588 + $0x58] sm:$0xff] %vm1241, %v1631
      %1791 = vst.msk [vmem:[%s588 + $0x60] sm:$0xff] %vm390, %v1631
      %1792 = vst.msk [vmem:[%s588 + $0x80] sm:$0xff] %vm1241, %v1633
      %1793 = vst.msk [vmem:[%s588 + $0x88] sm:$0xff] %vm390, %v1633
      %1794 = vst.msk [vmem:[%s588 + $0xa8] sm:$0xff] %vm1241, %v1635
      %1795 = vst.msk [vmem:[%s588 + $0xb0] sm:$0xff] %vm390, %v1635
      %1796 = vst.msk [vmem:[%s588 + $0xd0] sm:$0xff] %vm1241, %v1637
      %1797 = vst.msk [vmem:[%s588 + $0xd8] sm:$0xff] %vm390, %v1637
      %1798 = vst.msk [vmem:[%s588 + $0xf8] sm:$0xff] %vm1241, %v1639
      %1799 = vst.msk [vmem:[%s588 + $0x100] sm:$0xff] %vm390, %v1639
      %1800 = vst.msk [vmem:[%s588 + $0x120] sm:$0xff] %vm1241, %v1641
      %1801 = vst.msk [vmem:[%s588 + $0x128] sm:$0xff] %vm390, %v1641
      %1802 = vst.msk [vmem:[%s588 + $0x148] sm:$0xff] %vm1241, %v1643
      %1803 = vst.msk [vmem:[%s588 + $0x150] sm:$0xff] %vm390, %v1643
      %1804 = vst.msk [vmem:[%s588 + $0x170] sm:$0xff] %vm1241, %v1645
      %1805 = vst.msk [vmem:[%s588 + $0x178] sm:$0xff] %vm390, %v1645
      %1806 = vst.msk [vmem:[%s588 + $0x198] sm:$0xff] %vm1241, %v1647
      %1807 = vst.msk [vmem:[%s588 + $0x1a0] sm:$0xff] %vm390, %v1647
      %1808 = vst.msk [vmem:[%s588 + $0x1c0] sm:$0xff] %vm1241, %v1649
      %1809 = vst.msk [vmem:[%s588 + $0x1c8] sm:$0xff] %vm390, %v1649
      %1810 = vst.msk [vmem:[%s588 + $0x1e8] sm:$0xff] %vm1241, %v1651
      %1811 = vst.msk [vmem:[%s588 + $0x1f0] sm:$0xff] %vm390, %v1651
      %1812 = vst.msk [vmem:[%s588 + $0x210] sm:$0xff] %vm1241, %v1653
      %1813 = vst.msk [vmem:[%s588 + $0x218] sm:$0xff] %vm390, %v1653
      %1814 = vst.msk [vmem:[%s588 + $0x238] sm:$0xff] %vm1241, %v1655
      %1815 = vst.msk [vmem:[%s588 + $0x240] sm:$0xff] %vm390, %v1655
      %1816 = vst.msk [vmem:[%s588 + $0x260] sm:$0xff] %vm1241, %v1657
      %1817 = vst.msk [vmem:[%s588 + $0x268] sm:$0xff] %vm390, %v1657
      %1818 = vst.msk [vmem:[%s588 + $0x288] sm:$0xff] %vm1241, %v1659
      %1819 = vst.msk [vmem:[%s588 + $0x290] sm:$0xff] %vm390, %v1659
      %1820 = vst.msk [vmem:[%s588 + $0x2b0] sm:$0xff] %vm1241, %v1661
      %1821 = vst.msk [vmem:[%s588 + $0x2b8] sm:$0xff] %vm390, %v1661
      %1822 = vst.msk [vmem:[%s588 + $0x2d8] sm:$0xff] %vm1241, %v1663
      %1823 = vst.msk [vmem:[%s588 + $0x2e0] sm:$0xff] %vm390, %v1663
      %1824 = vst.msk [vmem:[%s588 + $0x300] sm:$0xff] %vm1241, %v1665
      %1825 = vst.msk [vmem:[%s588 + $0x308] sm:$0xff] %vm390, %v1665
      %1826 = vst.msk [vmem:[%s588 + $0x328] sm:$0xff] %vm1241, %v1667
      %1827 = vst.msk [vmem:[%s588 + $0x330] sm:$0xff] %vm390, %v1667
      %1828 = vst.msk [vmem:[%s588 + $0x350] sm:$0xff] %vm1241, %v1669
      %1829 = vst.msk [vmem:[%s588 + $0x358] sm:$0xff] %vm390, %v1669
      %1830 = vst.msk [vmem:[%s588 + $0x378] sm:$0xff] %vm1241, %v1671
      %1831 = vst.msk [vmem:[%s588 + $0x380] sm:$0xff] %vm390, %v1671
      %1832 = vst.msk [vmem:[%s588 + $0x3a0] sm:$0xff] %vm1241, %v1673
      %1833 = vst.msk [vmem:[%s588 + $0x3a8] sm:$0xff] %vm390, %v1673
      %1834 = vst.msk [vmem:[%s588 + $0x3c8] sm:$0xff] %vm1241, %v1675
      %1835 = vst.msk [vmem:[%s588 + $0x3d0] sm:$0xff] %vm390, %v1675
      %1836 = vst.msk [vmem:[%s588 + $0x3f0] sm:$0xff] %vm1241, %v1677
      %1837 = vst.msk [vmem:[%s588 + $0x3f8] sm:$0xff] %vm390, %v1677
      %1838 = vst.msk [vmem:[%s588 + $0x418] sm:$0xff] %vm1241, %v1679
      %1839 = vst.msk [vmem:[%s588 + $0x420] sm:$0xff] %vm390, %v1679
      %1840 = vst.msk [vmem:[%s588 + $0x440] sm:$0xff] %vm1241, %v1681
      %1841 = vst.msk [vmem:[%s588 + $0x448] sm:$0xff] %vm390, %v1681
      %1842 = vst.msk [vmem:[%s588 + $0x468] sm:$0xff] %vm1241, %v1683
      %1843 = vst.msk [vmem:[%s588 + $0x470] sm:$0xff] %vm390, %v1683
      %1844 = vst.msk [vmem:[%s588 + $0x490] sm:$0xff] %vm1241, %v1685
      %1845 = vst.msk [vmem:[%s588 + $0x498] sm:$0xff] %vm390, %v1685
      %1846 = vst.msk [vmem:[%s588 + $0x4b8] sm:$0xff] %vm1241, %v1687
      %1847 = vst.msk [vmem:[%s588 + $0x4c0] sm:$0xff] %vm390, %v1687
      %1848 = vst.msk [vmem:[%s588 + $0x4e0] sm:$0xff] %vm1241, %v1689
      %1849 = vst.msk [vmem:[%s588 + $0x4e8] sm:$0xff] %vm390, %v1689
      %1850 = vst.msk [vmem:[%s786 + $0x8] sm:$0xff] %vm1241, %v1627
      %1851 = vst.msk [vmem:[%s786 + $0x10] sm:$0xff] %vm390, %v1627
      %1852 = vst.msk [vmem:[%s786 + $0x30] sm:$0xff] %vm1241, %v1629
      %1853 = vst.msk [vmem:[%s786 + $0x38] sm:$0xff] %vm390, %v1629
      %1854 = vst.msk [vmem:[%s786 + $0x58] sm:$0xff] %vm1241, %v1631
      %1855 = vst.msk [vmem:[%s786 + $0x60] sm:$0xff] %vm390, %v1631
      %1856 = vst.msk [vmem:[%s786 + $0x80] sm:$0xff] %vm1241, %v1633
      %1857 = vst.msk [vmem:[%s786 + $0x88] sm:$0xff] %vm390, %v1633
      %1858 = vst.msk [vmem:[%s786 + $0xa8] sm:$0xff] %vm1241, %v1635
      %1859 = vst.msk [vmem:[%s786 + $0xb0] sm:$0xff] %vm390, %v1635
      %1860 = vst.msk [vmem:[%s786 + $0xd0] sm:$0xff] %vm1241, %v1637
      %1861 = vst.msk [vmem:[%s786 + $0xd8] sm:$0xff] %vm390, %v1637
      %1862 = vst.msk [vmem:[%s786 + $0xf8] sm:$0xff] %vm1241, %v1639
      %1863 = vst.msk [vmem:[%s786 + $0x100] sm:$0xff] %vm390, %v1639
      %1864 = vst.msk [vmem:[%s786 + $0x120] sm:$0xff] %vm1241, %v1641
      %1865 = vst.msk [vmem:[%s786 + $0x128] sm:$0xff] %vm390, %v1641
      %1866 = vst.msk [vmem:[%s786 + $0x148] sm:$0xff] %vm1241, %v1643
      %1867 = vst.msk [vmem:[%s786 + $0x150] sm:$0xff] %vm390, %v1643
      %1868 = vst.msk [vmem:[%s786 + $0x170] sm:$0xff] %vm1241, %v1645
      %1869 = vst.msk [vmem:[%s786 + $0x178] sm:$0xff] %vm390, %v1645
      %1870 = vst.msk [vmem:[%s786 + $0x198] sm:$0xff] %vm1241, %v1647
      %1871 = vst.msk [vmem:[%s786 + $0x1a0] sm:$0xff] %vm390, %v1647
      %1872 = vst.msk [vmem:[%s786 + $0x1c0] sm:$0xff] %vm1241, %v1649
      %1873 = vst.msk [vmem:[%s786 + $0x1c8] sm:$0xff] %vm390, %v1649
      %1874 = vst.msk [vmem:[%s786 + $0x1e8] sm:$0xff] %vm1241, %v1651
      %1875 = vst.msk [vmem:[%s786 + $0x1f0] sm:$0xff] %vm390, %v1651
      %1876 = vst.msk [vmem:[%s786 + $0x210] sm:$0xff] %vm1241, %v1653
      %1877 = vst.msk [vmem:[%s786 + $0x218] sm:$0xff] %vm390, %v1653
      %1878 = vst.msk [vmem:[%s786 + $0x238] sm:$0xff] %vm1241, %v1655
      %1879 = vst.msk [vmem:[%s786 + $0x240] sm:$0xff] %vm390, %v1655
      %1880 = vst.msk [vmem:[%s786 + $0x260] sm:$0xff] %vm1241, %v1657
      %1881 = vst.msk [vmem:[%s786 + $0x268] sm:$0xff] %vm390, %v1657
      %1882 = vst.msk [vmem:[%s786 + $0x288] sm:$0xff] %vm1241, %v1659
      %1883 = vst.msk [vmem:[%s786 + $0x290] sm:$0xff] %vm390, %v1659
      %1884 = vst.msk [vmem:[%s786 + $0x2b0] sm:$0xff] %vm1241, %v1661
      %1885 = vst.msk [vmem:[%s786 + $0x2b8] sm:$0xff] %vm390, %v1661
      %1886 = vst.msk [vmem:[%s786 + $0x2d8] sm:$0xff] %vm1241, %v1663
      %1887 = vst.msk [vmem:[%s786 + $0x2e0] sm:$0xff] %vm390, %v1663
      %1888 = vst.msk [vmem:[%s786 + $0x300] sm:$0xff] %vm1241, %v1665
      %1889 = vst.msk [vmem:[%s786 + $0x308] sm:$0xff] %vm390, %v1665
      %1890 = vst.msk [vmem:[%s786 + $0x328] sm:$0xff] %vm1241, %v1667
      %1891 = vst.msk [vmem:[%s786 + $0x330] sm:$0xff] %vm390, %v1667
      %1892 = vst.msk [vmem:[%s786 + $0x350] sm:$0xff] %vm1241, %v1669
      %1893 = vst.msk [vmem:[%s786 + $0x358] sm:$0xff] %vm390, %v1669
      %1894 = vst.msk [vmem:[%s786 + $0x378] sm:$0xff] %vm1241, %v1671
      %1895 = vst.msk [vmem:[%s786 + $0x380] sm:$0xff] %vm390, %v1671
      %1896 = vst.msk [vmem:[%s786 + $0x3a0] sm:$0xff] %vm1241, %v1673
      %1897 = vst.msk [vmem:[%s786 + $0x3a8] sm:$0xff] %vm390, %v1673
      %1898 = vst.msk [vmem:[%s786 + $0x3c8] sm:$0xff] %vm1241, %v1675
      %1899 = vst.msk [vmem:[%s786 + $0x3d0] sm:$0xff] %vm390, %v1675
      %1900 = vst.msk [vmem:[%s786 + $0x3f0] sm:$0xff] %vm1241, %v1677
      %1901 = vst.msk [vmem:[%s786 + $0x3f8] sm:$0xff] %vm390, %v1677
      %1902 = vst.msk [vmem:[%s786 + $0x418] sm:$0xff] %vm1241, %v1679
      %1903 = vst.msk [vmem:[%s786 + $0x420] sm:$0xff] %vm390, %v1679
      %1904 = vst.msk [vmem:[%s786 + $0x440] sm:$0xff] %vm1241, %v1681
      %1905 = vst.msk [vmem:[%s786 + $0x448] sm:$0xff] %vm390, %v1681
      %1906 = vst.msk [vmem:[%s786 + $0x468] sm:$0xff] %vm1241, %v1683
      %1907 = vst.msk [vmem:[%s786 + $0x470] sm:$0xff] %vm390, %v1683
      %1908 = vst.msk [vmem:[%s786 + $0x490] sm:$0xff] %vm1241, %v1685
      %1909 = vst.msk [vmem:[%s786 + $0x498] sm:$0xff] %vm390, %v1685
      %1910 = vst.msk [vmem:[%s786 + $0x4b8] sm:$0xff] %vm1241, %v1687
      %1911 = vst.msk [vmem:[%s786 + $0x4c0] sm:$0xff] %vm390, %v1687
      %1912 = vst.msk [vmem:[%s786 + $0x4e0] sm:$0xff] %vm1241, %v1689
      %1913 = vst.msk [vmem:[%s786 + $0x4e8] sm:$0xff] %vm390, %v1689
      %1914 = vst.msk [vmem:[%s984 + $0x8] sm:$0xff] %vm1241, %v1627
      %1915 = vst.msk [vmem:[%s984 + $0x10] sm:$0xff] %vm390, %v1627
      %1916 = vst.msk [vmem:[%s984 + $0x30] sm:$0xff] %vm1241, %v1629
      %1917 = vst.msk [vmem:[%s984 + $0x38] sm:$0xff] %vm390, %v1629
      %1918 = vst.msk [vmem:[%s984 + $0x58] sm:$0xff] %vm1241, %v1631
      %1919 = vst.msk [vmem:[%s984 + $0x60] sm:$0xff] %vm390, %v1631
      %1920 = vst.msk [vmem:[%s984 + $0x80] sm:$0xff] %vm1241, %v1633
      %1921 = vst.msk [vmem:[%s984 + $0x88] sm:$0xff] %vm390, %v1633
      %1922 = vst.msk [vmem:[%s984 + $0xa8] sm:$0xff] %vm1241, %v1635
      %1923 = vst.msk [vmem:[%s984 + $0xb0] sm:$0xff] %vm390, %v1635
      %1924 = vst.msk [vmem:[%s984 + $0xd0] sm:$0xff] %vm1241, %v1637
      %1925 = vst.msk [vmem:[%s984 + $0xd8] sm:$0xff] %vm390, %v1637
      %1926 = vst.msk [vmem:[%s984 + $0xf8] sm:$0xff] %vm1241, %v1639
      %1927 = vst.msk [vmem:[%s984 + $0x100] sm:$0xff] %vm390, %v1639
      %1928 = vst.msk [vmem:[%s984 + $0x120] sm:$0xff] %vm1241, %v1641
      %1929 = vst.msk [vmem:[%s984 + $0x128] sm:$0xff] %vm390, %v1641
      %1930 = vst.msk [vmem:[%s984 + $0x148] sm:$0xff] %vm1241, %v1643
      %1931 = vst.msk [vmem:[%s984 + $0x150] sm:$0xff] %vm390, %v1643
      %1932 = vst.msk [vmem:[%s984 + $0x170] sm:$0xff] %vm1241, %v1645
      %1933 = vst.msk [vmem:[%s984 + $0x178] sm:$0xff] %vm390, %v1645
      %1934 = vst.msk [vmem:[%s984 + $0x198] sm:$0xff] %vm1241, %v1647
      %1935 = vst.msk [vmem:[%s984 + $0x1a0] sm:$0xff] %vm390, %v1647
      %1936 = vst.msk [vmem:[%s984 + $0x1c0] sm:$0xff] %vm1241, %v1649
      %1937 = vst.msk [vmem:[%s984 + $0x1c8] sm:$0xff] %vm390, %v1649
      %1938 = vst.msk [vmem:[%s984 + $0x1e8] sm:$0xff] %vm1241, %v1651
      %1939 = vst.msk [vmem:[%s984 + $0x1f0] sm:$0xff] %vm390, %v1651
      %1940 = vst.msk [vmem:[%s984 + $0x210] sm:$0xff] %vm1241, %v1653
      %1941 = vst.msk [vmem:[%s984 + $0x218] sm:$0xff] %vm390, %v1653
      %1942 = vst.msk [vmem:[%s984 + $0x238] sm:$0xff] %vm1241, %v1655
      %1943 = vst.msk [vmem:[%s984 + $0x240] sm:$0xff] %vm390, %v1655
      %1944 = vst.msk [vmem:[%s984 + $0x260] sm:$0xff] %vm1241, %v1657
      %1945 = vst.msk [vmem:[%s984 + $0x268] sm:$0xff] %vm390, %v1657
      %1946 = vst.msk [vmem:[%s984 + $0x288] sm:$0xff] %vm1241, %v1659
      %1947 = vst.msk [vmem:[%s984 + $0x290] sm:$0xff] %vm390, %v1659
      %1948 = vst.msk [vmem:[%s984 + $0x2b0] sm:$0xff] %vm1241, %v1661
      %1949 = vst.msk [vmem:[%s984 + $0x2b8] sm:$0xff] %vm390, %v1661
      %1950 = vst.msk [vmem:[%s984 + $0x2d8] sm:$0xff] %vm1241, %v1663
      %1951 = vst.msk [vmem:[%s984 + $0x2e0] sm:$0xff] %vm390, %v1663
      %1952 = vst.msk [vmem:[%s984 + $0x300] sm:$0xff] %vm1241, %v1665
      %1953 = vst.msk [vmem:[%s984 + $0x308] sm:$0xff] %vm390, %v1665
      %1954 = vst.msk [vmem:[%s984 + $0x328] sm:$0xff] %vm1241, %v1667
      %1955 = vst.msk [vmem:[%s984 + $0x330] sm:$0xff] %vm390, %v1667
      %1956 = vst.msk [vmem:[%s984 + $0x350] sm:$0xff] %vm1241, %v1669
      %1957 = vst.msk [vmem:[%s984 + $0x358] sm:$0xff] %vm390, %v1669
      %1958 = vst.msk [vmem:[%s984 + $0x378] sm:$0xff] %vm1241, %v1671
      %1959 = vst.msk [vmem:[%s984 + $0x380] sm:$0xff] %vm390, %v1671
      %1960 = vst.msk [vmem:[%s984 + $0x3a0] sm:$0xff] %vm1241, %v1673
      %1961 = vst.msk [vmem:[%s984 + $0x3a8] sm:$0xff] %vm390, %v1673
      %1962 = vst.msk [vmem:[%s984 + $0x3c8] sm:$0xff] %vm1241, %v1675
      %1963 = vst.msk [vmem:[%s984 + $0x3d0] sm:$0xff] %vm390, %v1675
      %1964 = vst.msk [vmem:[%s984 + $0x3f0] sm:$0xff] %vm1241, %v1677
      %1965 = vst.msk [vmem:[%s984 + $0x3f8] sm:$0xff] %vm390, %v1677
      %1966 = vst.msk [vmem:[%s984 + $0x418] sm:$0xff] %vm1241, %v1679
      %1967 = vst.msk [vmem:[%s984 + $0x420] sm:$0xff] %vm390, %v1679
      %1968 = vst.msk [vmem:[%s984 + $0x440] sm:$0xff] %vm1241, %v1681
      %1969 = vst.msk [vmem:[%s984 + $0x448] sm:$0xff] %vm390, %v1681
      %1970 = vst.msk [vmem:[%s984 + $0x468] sm:$0xff] %vm1241, %v1683
      %1971 = vst.msk [vmem:[%s984 + $0x470] sm:$0xff] %vm390, %v1683
      %1972 = vst.msk [vmem:[%s984 + $0x490] sm:$0xff] %vm1241, %v1685
      %1973 = vst.msk [vmem:[%s984 + $0x498] sm:$0xff] %vm390, %v1685
      %1974 = vst.msk [vmem:[%s984 + $0x4b8] sm:$0xff] %vm1241, %v1687
      %1975 = vst.msk [vmem:[%s984 + $0x4c0] sm:$0xff] %vm390, %v1687
      %1976 = vst.msk [vmem:[%s984 + $0x4e0] sm:$0xff] %vm1241, %v1689
      %1977 = vst.msk [vmem:[%s984 + $0x4e8] sm:$0xff] %vm390, %v1689
      %v1978 = vld [vmem:[%s145 + $0x230] sm:$0xff]
      %v1979 = vld [vmem:[%s145 + $0x238] sm:$0xff]
      %v1980 = vld [vmem:[%s145 + $0x240] sm:$0xff]
      %v1981 = vld [vmem:[%s145 + $0x248] sm:$0xff]
      %v1982 = vld [vmem:[%s145 + $0x250] sm:$0xff]
      %v1983 = vld [vmem:[%s145 + $0x258] sm:$0xff]
      %v1984 = vld [vmem:[%s145 + $0x260] sm:$0xff]
      %v1985 = vld [vmem:[%s145 + $0x268] sm:$0xff]
      %v1986 = vld [vmem:[%s145 + $0x270] sm:$0xff]
      %v1987 = vld [vmem:[%s145 + $0x278] sm:$0xff]
      %v1988 = vld [vmem:[%s145 + $0x280] sm:$0xff]
      %v1989 = vld [vmem:[%s145 + $0x288] sm:$0xff]
      %v1990 = vld [vmem:[%s145 + $0x290] sm:$0xff]
      %v1991 = vld [vmem:[%s145 + $0x298] sm:$0xff]
      %v1992 = vld [vmem:[%s145 + $0x2a0] sm:$0xff]
      %v1993 = vld [vmem:[%s145 + $0x2a8] sm:$0xff]
      %v1994 = vld [vmem:[%s145 + $0x2b0] sm:$0xff]
      %v1995 = vld [vmem:[%s145 + $0x2b8] sm:$0xff]
      %v1996 = vld [vmem:[%s145 + $0x2c0] sm:$0xff]
      %v1997 = vld [vmem:[%s145 + $0x2c8] sm:$0xff]
      %v1998 = vld [vmem:[%s145 + $0x2d0] sm:$0xff]
      %v1999 = vld [vmem:[%s145 + $0x2d8] sm:$0xff]
      %v2000 = vld [vmem:[%s145 + $0x2e0] sm:$0xff]
      %v2001 = vld [vmem:[%s145 + $0x2e8] sm:$0xff]
      %v2002 = vld [vmem:[%s145 + $0x2f0] sm:$0xff]
      %v2003 = vld [vmem:[%s145 + $0x2f8] sm:$0xff]
      %v2004 = vld [vmem:[%s145 + $0x300] sm:$0xff]
      %v2005 = vld [vmem:[%s145 + $0x308] sm:$0xff]
      %v2006 = vld [vmem:[%s145 + $0x310] sm:$0xff]
      %v2007 = vld [vmem:[%s145 + $0x318] sm:$0xff]
      %v2008 = vld [vmem:[%s145 + $0x320] sm:$0xff]
      %v2009 = vld [vmem:[%s145 + $0x328] sm:$0xff]
      %2010 = vxpose.xlu0.b32.start [1/16] %v1978, 128
      %2011 = vxpose.xlu0.b32.cont [2/16] %v1980, 128
      %2012 = vxpose.xlu0.b32.cont [3/16] %v1982, 128
      %2013 = vxpose.xlu0.b32.cont [4/16] %v1984, 128
      %2014 = vxpose.xlu0.b32.cont [5/16] %v1986, 128
      %2015 = vxpose.xlu0.b32.cont [6/16] %v1988, 128
      %2016 = vxpose.xlu0.b32.cont [7/16] %v1990, 128
      %2017 = vxpose.xlu0.b32.cont [8/16] %v1992, 128
      %2018 = vxpose.xlu0.b32.cont [9/16] %v1994, 128
      %2019 = vxpose.xlu0.b32.cont [10/16] %v1996, 128
      %2020 = vxpose.xlu0.b32.cont [11/16] %v1998, 128
      %2021 = vxpose.xlu0.b32.cont [12/16] %v2000, 128
      %2022 = vxpose.xlu0.b32.cont [13/16] %v2002, 128
      %2023 = vxpose.xlu0.b32.cont [14/16] %v2004, 128
      %2024 = vxpose.xlu0.b32.cont [15/16] %v2006, 128
      %2025 = vxpose.xlu0.b32.end [16/16] %v2008, 128
      %v2026 = vpop.trf.xlu0
      %v2027 = vpop.trf.xlu0
      %v2028 = vpop.trf.xlu0
      %v2029 = vpop.trf.xlu0
      %v2030 = vpop.trf.xlu0
      %v2031 = vpop.trf.xlu0
      %v2032 = vpop.trf.xlu0
      %v2033 = vpop.trf.xlu0
      %v2034 = vpop.trf.xlu0
      %v2035 = vpop.trf.xlu0
      %v2036 = vpop.trf.xlu0
      %v2037 = vpop.trf.xlu0
      %v2038 = vpop.trf.xlu0
      %v2039 = vpop.trf.xlu0
      %v2040 = vpop.trf.xlu0
      %v2041 = vpop.trf.xlu0
      %2042 = vxpose.xlu0.b32.start [1/16] %v1979, 128
      %2043 = vxpose.xlu0.b32.cont [2/16] %v1981, 128
      %2044 = vxpose.xlu0.b32.cont [3/16] %v1983, 128
      %2045 = vxpose.xlu0.b32.cont [4/16] %v1985, 128
      %2046 = vxpose.xlu0.b32.cont [5/16] %v1987, 128
      %2047 = vxpose.xlu0.b32.cont [6/16] %v1989, 128
      %2048 = vxpose.xlu0.b32.cont [7/16] %v1991, 128
      %2049 = vxpose.xlu0.b32.cont [8/16] %v1993, 128
      %2050 = vxpose.xlu0.b32.cont [9/16] %v1995, 128
      %2051 = vxpose.xlu0.b32.cont [10/16] %v1997, 128
      %2052 = vxpose.xlu0.b32.cont [11/16] %v1999, 128
      %2053 = vxpose.xlu0.b32.cont [12/16] %v2001, 128
      %2054 = vxpose.xlu0.b32.cont [13/16] %v2003, 128
      %2055 = vxpose.xlu0.b32.cont [14/16] %v2005, 128
      %2056 = vxpose.xlu0.b32.cont [15/16] %v2007, 128
      %2057 = vxpose.xlu0.b32.end [16/16] %v2009, 128
      %v2058 = vpop.trf.xlu0
      %v2059 = vpop.trf.xlu0
      %v2060 = vpop.trf.xlu0
      %v2061 = vpop.trf.xlu0
      %v2062 = vpop.trf.xlu0
      %v2063 = vpop.trf.xlu0
      %v2064 = vpop.trf.xlu0
      %v2065 = vpop.trf.xlu0
      %v2066 = vpop.trf.xlu0
      %v2067 = vpop.trf.xlu0
      %v2068 = vpop.trf.xlu0
      %v2069 = vpop.trf.xlu0
      %v2070 = vpop.trf.xlu0
      %v2071 = vpop.trf.xlu0
      %v2072 = vpop.trf.xlu0
      %v2073 = vpop.trf.xlu0
      %2106 = vrot.lane.b32.xlu0 %v2026, 6
      %v2107 = vpop.permute.xlu0 %2106
      %2108 = vrot.lane.b32.xlu0 %v2027, 6
      %v2109 = vpop.permute.xlu0 %2108
      %2110 = vrot.lane.b32.xlu0 %v2028, 6
      %v2111 = vpop.permute.xlu0 %2110
      %2112 = vrot.lane.b32.xlu0 %v2029, 6
      %v2113 = vpop.permute.xlu0 %2112
      %2114 = vrot.lane.b32.xlu0 %v2030, 6
      %v2115 = vpop.permute.xlu0 %2114
      %2116 = vrot.lane.b32.xlu0 %v2031, 6
      %v2117 = vpop.permute.xlu0 %2116
      %2118 = vrot.lane.b32.xlu0 %v2032, 6
      %v2119 = vpop.permute.xlu0 %2118
      %2120 = vrot.lane.b32.xlu0 %v2033, 6
      %v2121 = vpop.permute.xlu0 %2120
      %2122 = vrot.lane.b32.xlu0 %v2034, 6
      %v2123 = vpop.permute.xlu0 %2122
      %2124 = vrot.lane.b32.xlu0 %v2035, 6
      %v2125 = vpop.permute.xlu0 %2124
      %2126 = vrot.lane.b32.xlu0 %v2036, 6
      %v2127 = vpop.permute.xlu0 %2126
      %2128 = vrot.lane.b32.xlu0 %v2037, 6
      %v2129 = vpop.permute.xlu0 %2128
      %2130 = vrot.lane.b32.xlu0 %v2038, 6
      %v2131 = vpop.permute.xlu0 %2130
      %2132 = vrot.lane.b32.xlu0 %v2039, 6
      %v2133 = vpop.permute.xlu0 %2132
      %2134 = vrot.lane.b32.xlu0 %v2040, 6
      %v2135 = vpop.permute.xlu0 %2134
      %2136 = vrot.lane.b32.xlu0 %v2041, 6
      %v2137 = vpop.permute.xlu0 %2136
      %2138 = vrot.lane.b32.xlu0 %v2058, 6
      %v2139 = vpop.permute.xlu0 %2138
      %2140 = vrot.lane.b32.xlu0 %v2059, 6
      %v2141 = vpop.permute.xlu0 %2140
      %2142 = vrot.lane.b32.xlu0 %v2060, 6
      %v2143 = vpop.permute.xlu0 %2142
      %2144 = vrot.lane.b32.xlu0 %v2061, 6
      %v2145 = vpop.permute.xlu0 %2144
      %2146 = vrot.lane.b32.xlu0 %v2062, 6
      %v2147 = vpop.permute.xlu0 %2146
      %2148 = vrot.lane.b32.xlu0 %v2063, 6
      %v2149 = vpop.permute.xlu0 %2148
      %2150 = vrot.lane.b32.xlu0 %v2064, 6
      %v2151 = vpop.permute.xlu0 %2150
      %2152 = vrot.lane.b32.xlu0 %v2065, 6
      %v2153 = vpop.permute.xlu0 %2152
      %2154 = vrot.lane.b32.xlu0 %v2066, 6
      %v2155 = vpop.permute.xlu0 %2154
      %2156 = vrot.lane.b32.xlu0 %v2067, 6
      %v2157 = vpop.permute.xlu0 %2156
      %2158 = vrot.lane.b32.xlu0 %v2068, 6
      %v2159 = vpop.permute.xlu0 %2158
      %2160 = vrot.lane.b32.xlu0 %v2069, 6
      %v2161 = vpop.permute.xlu0 %2160
      %2162 = vrot.lane.b32.xlu0 %v2070, 6
      %v2163 = vpop.permute.xlu0 %2162
      %2164 = vrot.lane.b32.xlu0 %v2071, 6
      %v2165 = vpop.permute.xlu0 %2164
      %2166 = vrot.lane.b32.xlu0 %v2072, 6
      %v2167 = vpop.permute.xlu0 %2166
      %2168 = vrot.lane.b32.xlu0 %v2073, 6
      %v2169 = vpop.permute.xlu0 %2168
      %2202 = vst.msk [vmem:[%s156 + $0x10] sm:$0xff] %vm1241, %v2107
      %2203 = vst.msk [vmem:[%s156 + $0x18] sm:$0xff] %vm390, %v2107
      %2204 = vst.msk [vmem:[%s156 + $0x38] sm:$0xff] %vm1241, %v2109
      %2205 = vst.msk [vmem:[%s156 + $0x40] sm:$0xff] %vm390, %v2109
      %2206 = vst.msk [vmem:[%s156 + $0x60] sm:$0xff] %vm1241, %v2111
      %2207 = vst.msk [vmem:[%s156 + $0x68] sm:$0xff] %vm390, %v2111
      %2208 = vst.msk [vmem:[%s156 + $0x88] sm:$0xff] %vm1241, %v2113
      %2209 = vst.msk [vmem:[%s156 + $0x90] sm:$0xff] %vm390, %v2113
      %2210 = vst.msk [vmem:[%s156 + $0xb0] sm:$0xff] %vm1241, %v2115
      %2211 = vst.msk [vmem:[%s156 + $0xb8] sm:$0xff] %vm390, %v2115
      %2212 = vst.msk [vmem:[%s156 + $0xd8] sm:$0xff] %vm1241, %v2117
      %2213 = vst.msk [vmem:[%s156 + $0xe0] sm:$0xff] %vm390, %v2117
      %2214 = vst.msk [vmem:[%s156 + $0x100] sm:$0xff] %vm1241, %v2119
      %2215 = vst.msk [vmem:[%s156 + $0x108] sm:$0xff] %vm390, %v2119
      %2216 = vst.msk [vmem:[%s156 + $0x128] sm:$0xff] %vm1241, %v2121
      %2217 = vst.msk [vmem:[%s156 + $0x130] sm:$0xff] %vm390, %v2121
      %2218 = vst.msk [vmem:[%s156 + $0x150] sm:$0xff] %vm1241, %v2123
      %2219 = vst.msk [vmem:[%s156 + $0x158] sm:$0xff] %vm390, %v2123
      %2220 = vst.msk [vmem:[%s156 + $0x178] sm:$0xff] %vm1241, %v2125
      %2221 = vst.msk [vmem:[%s156 + $0x180] sm:$0xff] %vm390, %v2125
      %2222 = vst.msk [vmem:[%s156 + $0x1a0] sm:$0xff] %vm1241, %v2127
      %2223 = vst.msk [vmem:[%s156 + $0x1a8] sm:$0xff] %vm390, %v2127
      %2224 = vst.msk [vmem:[%s156 + $0x1c8] sm:$0xff] %vm1241, %v2129
      %2225 = vst.msk [vmem:[%s156 + $0x1d0] sm:$0xff] %vm390, %v2129
      %2226 = vst.msk [vmem:[%s156 + $0x1f0] sm:$0xff] %vm1241, %v2131
      %2227 = vst.msk [vmem:[%s156 + $0x1f8] sm:$0xff] %vm390, %v2131
      %2228 = vst.msk [vmem:[%s156 + $0x218] sm:$0xff] %vm1241, %v2133
      %2229 = vst.msk [vmem:[%s156 + $0x220] sm:$0xff] %vm390, %v2133
      %2230 = vst.msk [vmem:[%s156 + $0x240] sm:$0xff] %vm1241, %v2135
      %2231 = vst.msk [vmem:[%s156 + $0x248] sm:$0xff] %vm390, %v2135
      %2232 = vst.msk [vmem:[%s156 + $0x268] sm:$0xff] %vm1241, %v2137
      %2233 = vst.msk [vmem:[%s156 + $0x270] sm:$0xff] %vm390, %v2137
      %2234 = vst.msk [vmem:[%s156 + $0x290] sm:$0xff] %vm1241, %v2139
      %2235 = vst.msk [vmem:[%s156 + $0x298] sm:$0xff] %vm390, %v2139
      %2236 = vst.msk [vmem:[%s156 + $0x2b8] sm:$0xff] %vm1241, %v2141
      %2237 = vst.msk [vmem:[%s156 + $0x2c0] sm:$0xff] %vm390, %v2141
      %2238 = vst.msk [vmem:[%s156 + $0x2e0] sm:$0xff] %vm1241, %v2143
      %2239 = vst.msk [vmem:[%s156 + $0x2e8] sm:$0xff] %vm390, %v2143
      %2240 = vst.msk [vmem:[%s156 + $0x308] sm:$0xff] %vm1241, %v2145
      %2241 = vst.msk [vmem:[%s156 + $0x310] sm:$0xff] %vm390, %v2145
      %2242 = vst.msk [vmem:[%s156 + $0x330] sm:$0xff] %vm1241, %v2147
      %2243 = vst.msk [vmem:[%s156 + $0x338] sm:$0xff] %vm390, %v2147
      %2244 = vst.msk [vmem:[%s156 + $0x358] sm:$0xff] %vm1241, %v2149
      %2245 = vst.msk [vmem:[%s156 + $0x360] sm:$0xff] %vm390, %v2149
      %2246 = vst.msk [vmem:[%s156 + $0x380] sm:$0xff] %vm1241, %v2151
      %2247 = vst.msk [vmem:[%s156 + $0x388] sm:$0xff] %vm390, %v2151
      %2248 = vst.msk [vmem:[%s156 + $0x3a8] sm:$0xff] %vm1241, %v2153
      %2249 = vst.msk [vmem:[%s156 + $0x3b0] sm:$0xff] %vm390, %v2153
      %2250 = vst.msk [vmem:[%s156 + $0x3d0] sm:$0xff] %vm1241, %v2155
      %2251 = vst.msk [vmem:[%s156 + $0x3d8] sm:$0xff] %vm390, %v2155
      %2252 = vst.msk [vmem:[%s156 + $0x3f8] sm:$0xff] %vm1241, %v2157
      %2253 = vst.msk [vmem:[%s156 + $0x400] sm:$0xff] %vm390, %v2157
      %2254 = vst.msk [vmem:[%s156 + $0x420] sm:$0xff] %vm1241, %v2159
      %2255 = vst.msk [vmem:[%s156 + $0x428] sm:$0xff] %vm390, %v2159
      %2256 = vst.msk [vmem:[%s156 + $0x448] sm:$0xff] %vm1241, %v2161
      %2257 = vst.msk [vmem:[%s156 + $0x450] sm:$0xff] %vm390, %v2161
      %2258 = vst.msk [vmem:[%s156 + $0x470] sm:$0xff] %vm1241, %v2163
      %2259 = vst.msk [vmem:[%s156 + $0x478] sm:$0xff] %vm390, %v2163
      %2260 = vst.msk [vmem:[%s156 + $0x498] sm:$0xff] %vm1241, %v2165
      %2261 = vst.msk [vmem:[%s156 + $0x4a0] sm:$0xff] %vm390, %v2165
      %2262 = vst.msk [vmem:[%s156 + $0x4c0] sm:$0xff] %vm1241, %v2167
      %2263 = vst.msk [vmem:[%s156 + $0x4c8] sm:$0xff] %vm390, %v2167
      %2264 = vst.msk [vmem:[%s156 + $0x4e8] sm:$0xff] %vm1241, %v2169
      %2265 = vst.msk [vmem:[%s156 + $0x4f0] sm:$0xff] %vm390, %v2169
      %2266 = vst.msk [vmem:[%s588 + $0x10] sm:$0xff] %vm1241, %v2107
      %2267 = vst.msk [vmem:[%s588 + $0x18] sm:$0xff] %vm390, %v2107
      %2268 = vst.msk [vmem:[%s588 + $0x38] sm:$0xff] %vm1241, %v2109
      %2269 = vst.msk [vmem:[%s588 + $0x40] sm:$0xff] %vm390, %v2109
      %2270 = vst.msk [vmem:[%s588 + $0x60] sm:$0xff] %vm1241, %v2111
      %2271 = vst.msk [vmem:[%s588 + $0x68] sm:$0xff] %vm390, %v2111
      %2272 = vst.msk [vmem:[%s588 + $0x88] sm:$0xff] %vm1241, %v2113
      %2273 = vst.msk [vmem:[%s588 + $0x90] sm:$0xff] %vm390, %v2113
      %2274 = vst.msk [vmem:[%s588 + $0xb0] sm:$0xff] %vm1241, %v2115
      %2275 = vst.msk [vmem:[%s588 + $0xb8] sm:$0xff] %vm390, %v2115
      %2276 = vst.msk [vmem:[%s588 + $0xd8] sm:$0xff] %vm1241, %v2117
      %2277 = vst.msk [vmem:[%s588 + $0xe0] sm:$0xff] %vm390, %v2117
      %2278 = vst.msk [vmem:[%s588 + $0x100] sm:$0xff] %vm1241, %v2119
      %2279 = vst.msk [vmem:[%s588 + $0x108] sm:$0xff] %vm390, %v2119
      %2280 = vst.msk [vmem:[%s588 + $0x128] sm:$0xff] %vm1241, %v2121
      %2281 = vst.msk [vmem:[%s588 + $0x130] sm:$0xff] %vm390, %v2121
      %2282 = vst.msk [vmem:[%s588 + $0x150] sm:$0xff] %vm1241, %v2123
      %2283 = vst.msk [vmem:[%s588 + $0x158] sm:$0xff] %vm390, %v2123
      %2284 = vst.msk [vmem:[%s588 + $0x178] sm:$0xff] %vm1241, %v2125
      %2285 = vst.msk [vmem:[%s588 + $0x180] sm:$0xff] %vm390, %v2125
      %2286 = vst.msk [vmem:[%s588 + $0x1a0] sm:$0xff] %vm1241, %v2127
      %2287 = vst.msk [vmem:[%s588 + $0x1a8] sm:$0xff] %vm390, %v2127
      %2288 = vst.msk [vmem:[%s588 + $0x1c8] sm:$0xff] %vm1241, %v2129
      %2289 = vst.msk [vmem:[%s588 + $0x1d0] sm:$0xff] %vm390, %v2129
      %2290 = vst.msk [vmem:[%s588 + $0x1f0] sm:$0xff] %vm1241, %v2131
      %2291 = vst.msk [vmem:[%s588 + $0x1f8] sm:$0xff] %vm390, %v2131
      %2292 = vst.msk [vmem:[%s588 + $0x218] sm:$0xff] %vm1241, %v2133
      %2293 = vst.msk [vmem:[%s588 + $0x220] sm:$0xff] %vm390, %v2133
      %2294 = vst.msk [vmem:[%s588 + $0x240] sm:$0xff] %vm1241, %v2135
      %2295 = vst.msk [vmem:[%s588 + $0x248] sm:$0xff] %vm390, %v2135
      %2296 = vst.msk [vmem:[%s588 + $0x268] sm:$0xff] %vm1241, %v2137
      %2297 = vst.msk [vmem:[%s588 + $0x270] sm:$0xff] %vm390, %v2137
      %2298 = vst.msk [vmem:[%s588 + $0x290] sm:$0xff] %vm1241, %v2139
      %2299 = vst.msk [vmem:[%s588 + $0x298] sm:$0xff] %vm390, %v2139
      %2300 = vst.msk [vmem:[%s588 + $0x2b8] sm:$0xff] %vm1241, %v2141
      %2301 = vst.msk [vmem:[%s588 + $0x2c0] sm:$0xff] %vm390, %v2141
      %2302 = vst.msk [vmem:[%s588 + $0x2e0] sm:$0xff] %vm1241, %v2143
      %2303 = vst.msk [vmem:[%s588 + $0x2e8] sm:$0xff] %vm390, %v2143
      %2304 = vst.msk [vmem:[%s588 + $0x308] sm:$0xff] %vm1241, %v2145
      %2305 = vst.msk [vmem:[%s588 + $0x310] sm:$0xff] %vm390, %v2145
      %2306 = vst.msk [vmem:[%s588 + $0x330] sm:$0xff] %vm1241, %v2147
      %2307 = vst.msk [vmem:[%s588 + $0x338] sm:$0xff] %vm390, %v2147
      %2308 = vst.msk [vmem:[%s588 + $0x358] sm:$0xff] %vm1241, %v2149
      %2309 = vst.msk [vmem:[%s588 + $0x360] sm:$0xff] %vm390, %v2149
      %2310 = vst.msk [vmem:[%s588 + $0x380] sm:$0xff] %vm1241, %v2151
      %2311 = vst.msk [vmem:[%s588 + $0x388] sm:$0xff] %vm390, %v2151
      %2312 = vst.msk [vmem:[%s588 + $0x3a8] sm:$0xff] %vm1241, %v2153
      %2313 = vst.msk [vmem:[%s588 + $0x3b0] sm:$0xff] %vm390, %v2153
      %2314 = vst.msk [vmem:[%s588 + $0x3d0] sm:$0xff] %vm1241, %v2155
      %2315 = vst.msk [vmem:[%s588 + $0x3d8] sm:$0xff] %vm390, %v2155
      %2316 = vst.msk [vmem:[%s588 + $0x3f8] sm:$0xff] %vm1241, %v2157
      %2317 = vst.msk [vmem:[%s588 + $0x400] sm:$0xff] %vm390, %v2157
      %2318 = vst.msk [vmem:[%s588 + $0x420] sm:$0xff] %vm1241, %v2159
      %2319 = vst.msk [vmem:[%s588 + $0x428] sm:$0xff] %vm390, %v2159
      %2320 = vst.msk [vmem:[%s588 + $0x448] sm:$0xff] %vm1241, %v2161
      %2321 = vst.msk [vmem:[%s588 + $0x450] sm:$0xff] %vm390, %v2161
      %2322 = vst.msk [vmem:[%s588 + $0x470] sm:$0xff] %vm1241, %v2163
      %2323 = vst.msk [vmem:[%s588 + $0x478] sm:$0xff] %vm390, %v2163
      %2324 = vst.msk [vmem:[%s588 + $0x498] sm:$0xff] %vm1241, %v2165
      %2325 = vst.msk [vmem:[%s588 + $0x4a0] sm:$0xff] %vm390, %v2165
      %2326 = vst.msk [vmem:[%s588 + $0x4c0] sm:$0xff] %vm1241, %v2167
      %2327 = vst.msk [vmem:[%s588 + $0x4c8] sm:$0xff] %vm390, %v2167
      %2328 = vst.msk [vmem:[%s588 + $0x4e8] sm:$0xff] %vm1241, %v2169
      %2329 = vst.msk [vmem:[%s588 + $0x4f0] sm:$0xff] %vm390, %v2169
      %2330 = vst.msk [vmem:[%s786 + $0x10] sm:$0xff] %vm1241, %v2107
      %2331 = vst.msk [vmem:[%s786 + $0x18] sm:$0xff] %vm390, %v2107
      %2332 = vst.msk [vmem:[%s786 + $0x38] sm:$0xff] %vm1241, %v2109
      %2333 = vst.msk [vmem:[%s786 + $0x40] sm:$0xff] %vm390, %v2109
      %2334 = vst.msk [vmem:[%s786 + $0x60] sm:$0xff] %vm1241, %v2111
      %2335 = vst.msk [vmem:[%s786 + $0x68] sm:$0xff] %vm390, %v2111
      %2336 = vst.msk [vmem:[%s786 + $0x88] sm:$0xff] %vm1241, %v2113
      %2337 = vst.msk [vmem:[%s786 + $0x90] sm:$0xff] %vm390, %v2113
      %2338 = vst.msk [vmem:[%s786 + $0xb0] sm:$0xff] %vm1241, %v2115
      %2339 = vst.msk [vmem:[%s786 + $0xb8] sm:$0xff] %vm390, %v2115
      %2340 = vst.msk [vmem:[%s786 + $0xd8] sm:$0xff] %vm1241, %v2117
      %2341 = vst.msk [vmem:[%s786 + $0xe0] sm:$0xff] %vm390, %v2117
      %2342 = vst.msk [vmem:[%s786 + $0x100] sm:$0xff] %vm1241, %v2119
      %2343 = vst.msk [vmem:[%s786 + $0x108] sm:$0xff] %vm390, %v2119
      %2344 = vst.msk [vmem:[%s786 + $0x128] sm:$0xff] %vm1241, %v2121
      %2345 = vst.msk [vmem:[%s786 + $0x130] sm:$0xff] %vm390, %v2121
      %2346 = vst.msk [vmem:[%s786 + $0x150] sm:$0xff] %vm1241, %v2123
      %2347 = vst.msk [vmem:[%s786 + $0x158] sm:$0xff] %vm390, %v2123
      %2348 = vst.msk [vmem:[%s786 + $0x178] sm:$0xff] %vm1241, %v2125
      %2349 = vst.msk [vmem:[%s786 + $0x180] sm:$0xff] %vm390, %v2125
      %2350 = vst.msk [vmem:[%s786 + $0x1a0] sm:$0xff] %vm1241, %v2127
      %2351 = vst.msk [vmem:[%s786 + $0x1a8] sm:$0xff] %vm390, %v2127
      %2352 = vst.msk [vmem:[%s786 + $0x1c8] sm:$0xff] %vm1241, %v2129
      %2353 = vst.msk [vmem:[%s786 + $0x1d0] sm:$0xff] %vm390, %v2129
      %2354 = vst.msk [vmem:[%s786 + $0x1f0] sm:$0xff] %vm1241, %v2131
      %2355 = vst.msk [vmem:[%s786 + $0x1f8] sm:$0xff] %vm390, %v2131
      %2356 = vst.msk [vmem:[%s786 + $0x218] sm:$0xff] %vm1241, %v2133
      %2357 = vst.msk [vmem:[%s786 + $0x220] sm:$0xff] %vm390, %v2133
      %2358 = vst.msk [vmem:[%s786 + $0x240] sm:$0xff] %vm1241, %v2135
      %2359 = vst.msk [vmem:[%s786 + $0x248] sm:$0xff] %vm390, %v2135
      %2360 = vst.msk [vmem:[%s786 + $0x268] sm:$0xff] %vm1241, %v2137
      %2361 = vst.msk [vmem:[%s786 + $0x270] sm:$0xff] %vm390, %v2137
      %2362 = vst.msk [vmem:[%s786 + $0x290] sm:$0xff] %vm1241, %v2139
      %2363 = vst.msk [vmem:[%s786 + $0x298] sm:$0xff] %vm390, %v2139
      %2364 = vst.msk [vmem:[%s786 + $0x2b8] sm:$0xff] %vm1241, %v2141
      %2365 = vst.msk [vmem:[%s786 + $0x2c0] sm:$0xff] %vm390, %v2141
      %2366 = vst.msk [vmem:[%s786 + $0x2e0] sm:$0xff] %vm1241, %v2143
      %2367 = vst.msk [vmem:[%s786 + $0x2e8] sm:$0xff] %vm390, %v2143
      %2368 = vst.msk [vmem:[%s786 + $0x308] sm:$0xff] %vm1241, %v2145
      %2369 = vst.msk [vmem:[%s786 + $0x310] sm:$0xff] %vm390, %v2145
      %2370 = vst.msk [vmem:[%s786 + $0x330] sm:$0xff] %vm1241, %v2147
      %2371 = vst.msk [vmem:[%s786 + $0x338] sm:$0xff] %vm390, %v2147
      %2372 = vst.msk [vmem:[%s786 + $0x358] sm:$0xff] %vm1241, %v2149
      %2373 = vst.msk [vmem:[%s786 + $0x360] sm:$0xff] %vm390, %v2149
      %2374 = vst.msk [vmem:[%s786 + $0x380] sm:$0xff] %vm1241, %v2151
      %2375 = vst.msk [vmem:[%s786 + $0x388] sm:$0xff] %vm390, %v2151
      %2376 = vst.msk [vmem:[%s786 + $0x3a8] sm:$0xff] %vm1241, %v2153
      %2377 = vst.msk [vmem:[%s786 + $0x3b0] sm:$0xff] %vm390, %v2153
      %2378 = vst.msk [vmem:[%s786 + $0x3d0] sm:$0xff] %vm1241, %v2155
      %2379 = vst.msk [vmem:[%s786 + $0x3d8] sm:$0xff] %vm390, %v2155
      %2380 = vst.msk [vmem:[%s786 + $0x3f8] sm:$0xff] %vm1241, %v2157
      %2381 = vst.msk [vmem:[%s786 + $0x400] sm:$0xff] %vm390, %v2157
      %2382 = vst.msk [vmem:[%s786 + $0x420] sm:$0xff] %vm1241, %v2159
      %2383 = vst.msk [vmem:[%s786 + $0x428] sm:$0xff] %vm390, %v2159
      %2384 = vst.msk [vmem:[%s786 + $0x448] sm:$0xff] %vm1241, %v2161
      %2385 = vst.msk [vmem:[%s786 + $0x450] sm:$0xff] %vm390, %v2161
      %2386 = vst.msk [vmem:[%s786 + $0x470] sm:$0xff] %vm1241, %v2163
      %2387 = vst.msk [vmem:[%s786 + $0x478] sm:$0xff] %vm390, %v2163
      %2388 = vst.msk [vmem:[%s786 + $0x498] sm:$0xff] %vm1241, %v2165
      %2389 = vst.msk [vmem:[%s786 + $0x4a0] sm:$0xff] %vm390, %v2165
      %2390 = vst.msk [vmem:[%s786 + $0x4c0] sm:$0xff] %vm1241, %v2167
      %2391 = vst.msk [vmem:[%s786 + $0x4c8] sm:$0xff] %vm390, %v2167
      %2392 = vst.msk [vmem:[%s786 + $0x4e8] sm:$0xff] %vm1241, %v2169
      %2393 = vst.msk [vmem:[%s786 + $0x4f0] sm:$0xff] %vm390, %v2169
      %2394 = vst.msk [vmem:[%s984 + $0x10] sm:$0xff] %vm1241, %v2107
      %2395 = vst.msk [vmem:[%s984 + $0x18] sm:$0xff] %vm390, %v2107
      %2396 = vst.msk [vmem:[%s984 + $0x38] sm:$0xff] %vm1241, %v2109
      %2397 = vst.msk [vmem:[%s984 + $0x40] sm:$0xff] %vm390, %v2109
      %2398 = vst.msk [vmem:[%s984 + $0x60] sm:$0xff] %vm1241, %v2111
      %2399 = vst.msk [vmem:[%s984 + $0x68] sm:$0xff] %vm390, %v2111
      %2400 = vst.msk [vmem:[%s984 + $0x88] sm:$0xff] %vm1241, %v2113
      %2401 = vst.msk [vmem:[%s984 + $0x90] sm:$0xff] %vm390, %v2113
      %2402 = vst.msk [vmem:[%s984 + $0xb0] sm:$0xff] %vm1241, %v2115
      %2403 = vst.msk [vmem:[%s984 + $0xb8] sm:$0xff] %vm390, %v2115
      %2404 = vst.msk [vmem:[%s984 + $0xd8] sm:$0xff] %vm1241, %v2117
      %2405 = vst.msk [vmem:[%s984 + $0xe0] sm:$0xff] %vm390, %v2117
      %2406 = vst.msk [vmem:[%s984 + $0x100] sm:$0xff] %vm1241, %v2119
      %2407 = vst.msk [vmem:[%s984 + $0x108] sm:$0xff] %vm390, %v2119
      %2408 = vst.msk [vmem:[%s984 + $0x128] sm:$0xff] %vm1241, %v2121
      %2409 = vst.msk [vmem:[%s984 + $0x130] sm:$0xff] %vm390, %v2121
      %2410 = vst.msk [vmem:[%s984 + $0x150] sm:$0xff] %vm1241, %v2123
      %2411 = vst.msk [vmem:[%s984 + $0x158] sm:$0xff] %vm390, %v2123
      %2412 = vst.msk [vmem:[%s984 + $0x178] sm:$0xff] %vm1241, %v2125
      %2413 = vst.msk [vmem:[%s984 + $0x180] sm:$0xff] %vm390, %v2125
      %2414 = vst.msk [vmem:[%s984 + $0x1a0] sm:$0xff] %vm1241, %v2127
      %2415 = vst.msk [vmem:[%s984 + $0x1a8] sm:$0xff] %vm390, %v2127
      %2416 = vst.msk [vmem:[%s984 + $0x1c8] sm:$0xff] %vm1241, %v2129
      %2417 = vst.msk [vmem:[%s984 + $0x1d0] sm:$0xff] %vm390, %v2129
      %2418 = vst.msk [vmem:[%s984 + $0x1f0] sm:$0xff] %vm1241, %v2131
      %2419 = vst.msk [vmem:[%s984 + $0x1f8] sm:$0xff] %vm390, %v2131
      %2420 = vst.msk [vmem:[%s984 + $0x218] sm:$0xff] %vm1241, %v2133
      %2421 = vst.msk [vmem:[%s984 + $0x220] sm:$0xff] %vm390, %v2133
      %2422 = vst.msk [vmem:[%s984 + $0x240] sm:$0xff] %vm1241, %v2135
      %2423 = vst.msk [vmem:[%s984 + $0x248] sm:$0xff] %vm390, %v2135
      %2424 = vst.msk [vmem:[%s984 + $0x268] sm:$0xff] %vm1241, %v2137
      %2425 = vst.msk [vmem:[%s984 + $0x270] sm:$0xff] %vm390, %v2137
      %2426 = vst.msk [vmem:[%s984 + $0x290] sm:$0xff] %vm1241, %v2139
      %2427 = vst.msk [vmem:[%s984 + $0x298] sm:$0xff] %vm390, %v2139
      %2428 = vst.msk [vmem:[%s984 + $0x2b8] sm:$0xff] %vm1241, %v2141
      %2429 = vst.msk [vmem:[%s984 + $0x2c0] sm:$0xff] %vm390, %v2141
      %2430 = vst.msk [vmem:[%s984 + $0x2e0] sm:$0xff] %vm1241, %v2143
      %2431 = vst.msk [vmem:[%s984 + $0x2e8] sm:$0xff] %vm390, %v2143
      %2432 = vst.msk [vmem:[%s984 + $0x308] sm:$0xff] %vm1241, %v2145
      %2433 = vst.msk [vmem:[%s984 + $0x310] sm:$0xff] %vm390, %v2145
      %2434 = vst.msk [vmem:[%s984 + $0x330] sm:$0xff] %vm1241, %v2147
      %2435 = vst.msk [vmem:[%s984 + $0x338] sm:$0xff] %vm390, %v2147
      %2436 = vst.msk [vmem:[%s984 + $0x358] sm:$0xff] %vm1241, %v2149
      %2437 = vst.msk [vmem:[%s984 + $0x360] sm:$0xff] %vm390, %v2149
      %2438 = vst.msk [vmem:[%s984 + $0x380] sm:$0xff] %vm1241, %v2151
      %2439 = vst.msk [vmem:[%s984 + $0x388] sm:$0xff] %vm390, %v2151
      %2440 = vst.msk [vmem:[%s984 + $0x3a8] sm:$0xff] %vm1241, %v2153
      %2441 = vst.msk [vmem:[%s984 + $0x3b0] sm:$0xff] %vm390, %v2153
      %2442 = vst.msk [vmem:[%s984 + $0x3d0] sm:$0xff] %vm1241, %v2155
      %2443 = vst.msk [vmem:[%s984 + $0x3d8] sm:$0xff] %vm390, %v2155
      %2444 = vst.msk [vmem:[%s984 + $0x3f8] sm:$0xff] %vm1241, %v2157
      %2445 = vst.msk [vmem:[%s984 + $0x400] sm:$0xff] %vm390, %v2157
      %2446 = vst.msk [vmem:[%s984 + $0x420] sm:$0xff] %vm1241, %v2159
      %2447 = vst.msk [vmem:[%s984 + $0x428] sm:$0xff] %vm390, %v2159
      %2448 = vst.msk [vmem:[%s984 + $0x448] sm:$0xff] %vm1241, %v2161
      %2449 = vst.msk [vmem:[%s984 + $0x450] sm:$0xff] %vm390, %v2161
      %2450 = vst.msk [vmem:[%s984 + $0x470] sm:$0xff] %vm1241, %v2163
      %2451 = vst.msk [vmem:[%s984 + $0x478] sm:$0xff] %vm390, %v2163
      %2452 = vst.msk [vmem:[%s984 + $0x498] sm:$0xff] %vm1241, %v2165
      %2453 = vst.msk [vmem:[%s984 + $0x4a0] sm:$0xff] %vm390, %v2165
      %2454 = vst.msk [vmem:[%s984 + $0x4c0] sm:$0xff] %vm1241, %v2167
      %2455 = vst.msk [vmem:[%s984 + $0x4c8] sm:$0xff] %vm390, %v2167
      %2456 = vst.msk [vmem:[%s984 + $0x4e8] sm:$0xff] %vm1241, %v2169
      %2457 = vst.msk [vmem:[%s984 + $0x4f0] sm:$0xff] %vm390, %v2169
      %v2458 = vld [vmem:[%s145 + $0x330] sm:$0xff]
      %v2459 = vld [vmem:[%s145 + $0x338] sm:$0xff]
      %v2460 = vld [vmem:[%s145 + $0x340] sm:$0xff]
      %v2461 = vld [vmem:[%s145 + $0x348] sm:$0xff]
      %v2462 = vld [vmem:[%s145 + $0x350] sm:$0xff]
      %v2463 = vld [vmem:[%s145 + $0x358] sm:$0xff]
      %v2464 = vld [vmem:[%s145 + $0x360] sm:$0xff]
      %v2465 = vld [vmem:[%s145 + $0x368] sm:$0xff]
      %v2466 = vld [vmem:[%s145 + $0x370] sm:$0xff]
      %v2467 = vld [vmem:[%s145 + $0x378] sm:$0xff]
      %v2468 = vld [vmem:[%s145 + $0x380] sm:$0xff]
      %v2469 = vld [vmem:[%s145 + $0x388] sm:$0xff]
      %v2470 = vld [vmem:[%s145 + $0x390] sm:$0xff]
      %v2471 = vld [vmem:[%s145 + $0x398] sm:$0xff]
      %v2472 = vld [vmem:[%s145 + $0x3a0] sm:$0xff]
      %v2473 = vld [vmem:[%s145 + $0x3a8] sm:$0xff]
      %v2474 = vld [vmem:[%s145 + $0x3b0] sm:$0xff]
      %v2475 = vld [vmem:[%s145 + $0x3b8] sm:$0xff]
      %v2476 = vld [vmem:[%s145 + $0x3c0] sm:$0xff]
      %v2477 = vld [vmem:[%s145 + $0x3c8] sm:$0xff]
      %v2478 = vld [vmem:[%s145 + $0x3d0] sm:$0xff]
      %v2479 = vld [vmem:[%s145 + $0x3d8] sm:$0xff]
      %v2480 = vld [vmem:[%s145 + $0x3e0] sm:$0xff]
      %v2481 = vld [vmem:[%s145 + $0x3e8] sm:$0xff]
      %v2482 = vld [vmem:[%s145 + $0x3f0] sm:$0xff]
      %v2483 = vld [vmem:[%s145 + $0x3f8] sm:$0xff]
      %v2484 = vld [vmem:[%s145 + $0x400] sm:$0xff]
      %v2485 = vld [vmem:[%s145 + $0x408] sm:$0xff]
      %v2486 = vld [vmem:[%s145 + $0x410] sm:$0xff]
      %v2487 = vld [vmem:[%s145 + $0x418] sm:$0xff]
      %v2488 = vld [vmem:[%s145 + $0x420] sm:$0xff]
      %v2489 = vld [vmem:[%s145 + $0x428] sm:$0xff]
      %2490 = vxpose.xlu0.b32.start [1/16] %v2458, 128
      %2491 = vxpose.xlu0.b32.cont [2/16] %v2460, 128
      %2492 = vxpose.xlu0.b32.cont [3/16] %v2462, 128
      %2493 = vxpose.xlu0.b32.cont [4/16] %v2464, 128
      %2494 = vxpose.xlu0.b32.cont [5/16] %v2466, 128
      %2495 = vxpose.xlu0.b32.cont [6/16] %v2468, 128
      %2496 = vxpose.xlu0.b32.cont [7/16] %v2470, 128
      %2497 = vxpose.xlu0.b32.cont [8/16] %v2472, 128
      %2498 = vxpose.xlu0.b32.cont [9/16] %v2474, 128
      %2499 = vxpose.xlu0.b32.cont [10/16] %v2476, 128
      %2500 = vxpose.xlu0.b32.cont [11/16] %v2478, 128
      %2501 = vxpose.xlu0.b32.cont [12/16] %v2480, 128
      %2502 = vxpose.xlu0.b32.cont [13/16] %v2482, 128
      %2503 = vxpose.xlu0.b32.cont [14/16] %v2484, 128
      %2504 = vxpose.xlu0.b32.cont [15/16] %v2486, 128
      %2505 = vxpose.xlu0.b32.end [16/16] %v2488, 128
      %v2506 = vpop.trf.xlu0
      %v2507 = vpop.trf.xlu0
      %v2508 = vpop.trf.xlu0
      %v2509 = vpop.trf.xlu0
      %v2510 = vpop.trf.xlu0
      %v2511 = vpop.trf.xlu0
      %v2512 = vpop.trf.xlu0
      %v2513 = vpop.trf.xlu0
      %v2514 = vpop.trf.xlu0
      %v2515 = vpop.trf.xlu0
      %v2516 = vpop.trf.xlu0
      %v2517 = vpop.trf.xlu0
      %v2518 = vpop.trf.xlu0
      %v2519 = vpop.trf.xlu0
      %v2520 = vpop.trf.xlu0
      %v2521 = vpop.trf.xlu0
      %2522 = vxpose.xlu0.b32.start [1/16] %v2459, 128
      %2523 = vxpose.xlu0.b32.cont [2/16] %v2461, 128
      %2524 = vxpose.xlu0.b32.cont [3/16] %v2463, 128
      %2525 = vxpose.xlu0.b32.cont [4/16] %v2465, 128
      %2526 = vxpose.xlu0.b32.cont [5/16] %v2467, 128
      %2527 = vxpose.xlu0.b32.cont [6/16] %v2469, 128
      %2528 = vxpose.xlu0.b32.cont [7/16] %v2471, 128
      %2529 = vxpose.xlu0.b32.cont [8/16] %v2473, 128
      %2530 = vxpose.xlu0.b32.cont [9/16] %v2475, 128
      %2531 = vxpose.xlu0.b32.cont [10/16] %v2477, 128
      %2532 = vxpose.xlu0.b32.cont [11/16] %v2479, 128
      %2533 = vxpose.xlu0.b32.cont [12/16] %v2481, 128
      %2534 = vxpose.xlu0.b32.cont [13/16] %v2483, 128
      %2535 = vxpose.xlu0.b32.cont [14/16] %v2485, 128
      %2536 = vxpose.xlu0.b32.cont [15/16] %v2487, 128
      %2537 = vxpose.xlu0.b32.end [16/16] %v2489, 128
      %v2538 = vpop.trf.xlu0
      %v2539 = vpop.trf.xlu0
      %v2540 = vpop.trf.xlu0
      %v2541 = vpop.trf.xlu0
      %v2542 = vpop.trf.xlu0
      %v2543 = vpop.trf.xlu0
      %v2544 = vpop.trf.xlu0
      %v2545 = vpop.trf.xlu0
      %v2546 = vpop.trf.xlu0
      %v2547 = vpop.trf.xlu0
      %v2548 = vpop.trf.xlu0
      %v2549 = vpop.trf.xlu0
      %v2550 = vpop.trf.xlu0
      %v2551 = vpop.trf.xlu0
      %v2552 = vpop.trf.xlu0
      %v2553 = vpop.trf.xlu0
      %2586 = vrot.lane.b32.xlu0 %v2506, 6
      %v2587 = vpop.permute.xlu0 %2586
      %2588 = vrot.lane.b32.xlu0 %v2507, 6
      %v2589 = vpop.permute.xlu0 %2588
      %2590 = vrot.lane.b32.xlu0 %v2508, 6
      %v2591 = vpop.permute.xlu0 %2590
      %2592 = vrot.lane.b32.xlu0 %v2509, 6
      %v2593 = vpop.permute.xlu0 %2592
      %2594 = vrot.lane.b32.xlu0 %v2510, 6
      %v2595 = vpop.permute.xlu0 %2594
      %2596 = vrot.lane.b32.xlu0 %v2511, 6
      %v2597 = vpop.permute.xlu0 %2596
      %2598 = vrot.lane.b32.xlu0 %v2512, 6
      %v2599 = vpop.permute.xlu0 %2598
      %2600 = vrot.lane.b32.xlu0 %v2513, 6
      %v2601 = vpop.permute.xlu0 %2600
      %2602 = vrot.lane.b32.xlu0 %v2514, 6
      %v2603 = vpop.permute.xlu0 %2602
      %2604 = vrot.lane.b32.xlu0 %v2515, 6
      %v2605 = vpop.permute.xlu0 %2604
      %2606 = vrot.lane.b32.xlu0 %v2516, 6
      %v2607 = vpop.permute.xlu0 %2606
      %2608 = vrot.lane.b32.xlu0 %v2517, 6
      %v2609 = vpop.permute.xlu0 %2608
      %2610 = vrot.lane.b32.xlu0 %v2518, 6
      %v2611 = vpop.permute.xlu0 %2610
      %2612 = vrot.lane.b32.xlu0 %v2519, 6
      %v2613 = vpop.permute.xlu0 %2612
      %2614 = vrot.lane.b32.xlu0 %v2520, 6
      %v2615 = vpop.permute.xlu0 %2614
      %2616 = vrot.lane.b32.xlu0 %v2521, 6
      %v2617 = vpop.permute.xlu0 %2616
      %2618 = vrot.lane.b32.xlu0 %v2538, 6
      %v2619 = vpop.permute.xlu0 %2618
      %2620 = vrot.lane.b32.xlu0 %v2539, 6
      %v2621 = vpop.permute.xlu0 %2620
      %2622 = vrot.lane.b32.xlu0 %v2540, 6
      %v2623 = vpop.permute.xlu0 %2622
      %2624 = vrot.lane.b32.xlu0 %v2541, 6
      %v2625 = vpop.permute.xlu0 %2624
      %2626 = vrot.lane.b32.xlu0 %v2542, 6
      %v2627 = vpop.permute.xlu0 %2626
      %2628 = vrot.lane.b32.xlu0 %v2543, 6
      %v2629 = vpop.permute.xlu0 %2628
      %2630 = vrot.lane.b32.xlu0 %v2544, 6
      %v2631 = vpop.permute.xlu0 %2630
      %2632 = vrot.lane.b32.xlu0 %v2545, 6
      %v2633 = vpop.permute.xlu0 %2632
      %2634 = vrot.lane.b32.xlu0 %v2546, 6
      %v2635 = vpop.permute.xlu0 %2634
      %2636 = vrot.lane.b32.xlu0 %v2547, 6
      %v2637 = vpop.permute.xlu0 %2636
      %2638 = vrot.lane.b32.xlu0 %v2548, 6
      %v2639 = vpop.permute.xlu0 %2638
      %2640 = vrot.lane.b32.xlu0 %v2549, 6
      %v2641 = vpop.permute.xlu0 %2640
      %2642 = vrot.lane.b32.xlu0 %v2550, 6
      %v2643 = vpop.permute.xlu0 %2642
      %2644 = vrot.lane.b32.xlu0 %v2551, 6
      %v2645 = vpop.permute.xlu0 %2644
      %2646 = vrot.lane.b32.xlu0 %v2552, 6
      %v2647 = vpop.permute.xlu0 %2646
      %2648 = vrot.lane.b32.xlu0 %v2553, 6
      %v2649 = vpop.permute.xlu0 %2648
      %2682 = vst.msk [vmem:[%s156 + $0x18] sm:$0xff] %vm1241, %v2587
      %2683 = vst.msk [vmem:[%s156 + $0x20] sm:$0xff] %vm390, %v2587
      %2684 = vst.msk [vmem:[%s156 + $0x40] sm:$0xff] %vm1241, %v2589
      %2685 = vst.msk [vmem:[%s156 + $0x48] sm:$0xff] %vm390, %v2589
      %2686 = vst.msk [vmem:[%s156 + $0x68] sm:$0xff] %vm1241, %v2591
      %2687 = vst.msk [vmem:[%s156 + $0x70] sm:$0xff] %vm390, %v2591
      %2688 = vst.msk [vmem:[%s156 + $0x90] sm:$0xff] %vm1241, %v2593
      %2689 = vst.msk [vmem:[%s156 + $0x98] sm:$0xff] %vm390, %v2593
      %2690 = vst.msk [vmem:[%s156 + $0xb8] sm:$0xff] %vm1241, %v2595
      %2691 = vst.msk [vmem:[%s156 + $0xc0] sm:$0xff] %vm390, %v2595
      %2692 = vst.msk [vmem:[%s156 + $0xe0] sm:$0xff] %vm1241, %v2597
      %2693 = vst.msk [vmem:[%s156 + $0xe8] sm:$0xff] %vm390, %v2597
      %2694 = vst.msk [vmem:[%s156 + $0x108] sm:$0xff] %vm1241, %v2599
      %2695 = vst.msk [vmem:[%s156 + $0x110] sm:$0xff] %vm390, %v2599
      %2696 = vst.msk [vmem:[%s156 + $0x130] sm:$0xff] %vm1241, %v2601
      %2697 = vst.msk [vmem:[%s156 + $0x138] sm:$0xff] %vm390, %v2601
      %2698 = vst.msk [vmem:[%s156 + $0x158] sm:$0xff] %vm1241, %v2603
      %2699 = vst.msk [vmem:[%s156 + $0x160] sm:$0xff] %vm390, %v2603
      %2700 = vst.msk [vmem:[%s156 + $0x180] sm:$0xff] %vm1241, %v2605
      %2701 = vst.msk [vmem:[%s156 + $0x188] sm:$0xff] %vm390, %v2605
      %2702 = vst.msk [vmem:[%s156 + $0x1a8] sm:$0xff] %vm1241, %v2607
      %2703 = vst.msk [vmem:[%s156 + $0x1b0] sm:$0xff] %vm390, %v2607
      %2704 = vst.msk [vmem:[%s156 + $0x1d0] sm:$0xff] %vm1241, %v2609
      %2705 = vst.msk [vmem:[%s156 + $0x1d8] sm:$0xff] %vm390, %v2609
      %2706 = vst.msk [vmem:[%s156 + $0x1f8] sm:$0xff] %vm1241, %v2611
      %2707 = vst.msk [vmem:[%s156 + $0x200] sm:$0xff] %vm390, %v2611
      %2708 = vst.msk [vmem:[%s156 + $0x220] sm:$0xff] %vm1241, %v2613
      %2709 = vst.msk [vmem:[%s156 + $0x228] sm:$0xff] %vm390, %v2613
      %2710 = vst.msk [vmem:[%s156 + $0x248] sm:$0xff] %vm1241, %v2615
      %2711 = vst.msk [vmem:[%s156 + $0x250] sm:$0xff] %vm390, %v2615
      %2712 = vst.msk [vmem:[%s156 + $0x270] sm:$0xff] %vm1241, %v2617
      %2713 = vst.msk [vmem:[%s156 + $0x278] sm:$0xff] %vm390, %v2617
      %2714 = vst.msk [vmem:[%s156 + $0x298] sm:$0xff] %vm1241, %v2619
      %2715 = vst.msk [vmem:[%s156 + $0x2a0] sm:$0xff] %vm390, %v2619
      %2716 = vst.msk [vmem:[%s156 + $0x2c0] sm:$0xff] %vm1241, %v2621
      %2717 = vst.msk [vmem:[%s156 + $0x2c8] sm:$0xff] %vm390, %v2621
      %2718 = vst.msk [vmem:[%s156 + $0x2e8] sm:$0xff] %vm1241, %v2623
      %2719 = vst.msk [vmem:[%s156 + $0x2f0] sm:$0xff] %vm390, %v2623
      %2720 = vst.msk [vmem:[%s156 + $0x310] sm:$0xff] %vm1241, %v2625
      %2721 = vst.msk [vmem:[%s156 + $0x318] sm:$0xff] %vm390, %v2625
      %2722 = vst.msk [vmem:[%s156 + $0x338] sm:$0xff] %vm1241, %v2627
      %2723 = vst.msk [vmem:[%s156 + $0x340] sm:$0xff] %vm390, %v2627
      %2724 = vst.msk [vmem:[%s156 + $0x360] sm:$0xff] %vm1241, %v2629
      %2725 = vst.msk [vmem:[%s156 + $0x368] sm:$0xff] %vm390, %v2629
      %2726 = vst.msk [vmem:[%s156 + $0x388] sm:$0xff] %vm1241, %v2631
      %2727 = vst.msk [vmem:[%s156 + $0x390] sm:$0xff] %vm390, %v2631
      %2728 = vst.msk [vmem:[%s156 + $0x3b0] sm:$0xff] %vm1241, %v2633
      %2729 = vst.msk [vmem:[%s156 + $0x3b8] sm:$0xff] %vm390, %v2633
      %2730 = vst.msk [vmem:[%s156 + $0x3d8] sm:$0xff] %vm1241, %v2635
      %2731 = vst.msk [vmem:[%s156 + $0x3e0] sm:$0xff] %vm390, %v2635
      %2732 = vst.msk [vmem:[%s156 + $0x400] sm:$0xff] %vm1241, %v2637
      %2733 = vst.msk [vmem:[%s156 + $0x408] sm:$0xff] %vm390, %v2637
      %2734 = vst.msk [vmem:[%s156 + $0x428] sm:$0xff] %vm1241, %v2639
      %2735 = vst.msk [vmem:[%s156 + $0x430] sm:$0xff] %vm390, %v2639
      %2736 = vst.msk [vmem:[%s156 + $0x450] sm:$0xff] %vm1241, %v2641
      %2737 = vst.msk [vmem:[%s156 + $0x458] sm:$0xff] %vm390, %v2641
      %2738 = vst.msk [vmem:[%s156 + $0x478] sm:$0xff] %vm1241, %v2643
      %2739 = vst.msk [vmem:[%s156 + $0x480] sm:$0xff] %vm390, %v2643
      %2740 = vst.msk [vmem:[%s156 + $0x4a0] sm:$0xff] %vm1241, %v2645
      %2741 = vst.msk [vmem:[%s156 + $0x4a8] sm:$0xff] %vm390, %v2645
      %2742 = vst.msk [vmem:[%s156 + $0x4c8] sm:$0xff] %vm1241, %v2647
      %2743 = vst.msk [vmem:[%s156 + $0x4d0] sm:$0xff] %vm390, %v2647
      %2744 = vst.msk [vmem:[%s156 + $0x4f0] sm:$0xff] %vm1241, %v2649
      %2745 = vst.msk [vmem:[%s156 + $0x4f8] sm:$0xff] %vm390, %v2649
      %2746 = vst.msk [vmem:[%s588 + $0x18] sm:$0xff] %vm1241, %v2587
      %2747 = vst.msk [vmem:[%s588 + $0x20] sm:$0xff] %vm390, %v2587
      %2748 = vst.msk [vmem:[%s588 + $0x40] sm:$0xff] %vm1241, %v2589
      %2749 = vst.msk [vmem:[%s588 + $0x48] sm:$0xff] %vm390, %v2589
      %2750 = vst.msk [vmem:[%s588 + $0x68] sm:$0xff] %vm1241, %v2591
      %2751 = vst.msk [vmem:[%s588 + $0x70] sm:$0xff] %vm390, %v2591
      %2752 = vst.msk [vmem:[%s588 + $0x90] sm:$0xff] %vm1241, %v2593
      %2753 = vst.msk [vmem:[%s588 + $0x98] sm:$0xff] %vm390, %v2593
      %2754 = vst.msk [vmem:[%s588 + $0xb8] sm:$0xff] %vm1241, %v2595
      %2755 = vst.msk [vmem:[%s588 + $0xc0] sm:$0xff] %vm390, %v2595
      %2756 = vst.msk [vmem:[%s588 + $0xe0] sm:$0xff] %vm1241, %v2597
      %2757 = vst.msk [vmem:[%s588 + $0xe8] sm:$0xff] %vm390, %v2597
      %2758 = vst.msk [vmem:[%s588 + $0x108] sm:$0xff] %vm1241, %v2599
      %2759 = vst.msk [vmem:[%s588 + $0x110] sm:$0xff] %vm390, %v2599
      %2760 = vst.msk [vmem:[%s588 + $0x130] sm:$0xff] %vm1241, %v2601
      %2761 = vst.msk [vmem:[%s588 + $0x138] sm:$0xff] %vm390, %v2601
      %2762 = vst.msk [vmem:[%s588 + $0x158] sm:$0xff] %vm1241, %v2603
      %2763 = vst.msk [vmem:[%s588 + $0x160] sm:$0xff] %vm390, %v2603
      %2764 = vst.msk [vmem:[%s588 + $0x180] sm:$0xff] %vm1241, %v2605
      %2765 = vst.msk [vmem:[%s588 + $0x188] sm:$0xff] %vm390, %v2605
      %2766 = vst.msk [vmem:[%s588 + $0x1a8] sm:$0xff] %vm1241, %v2607
      %2767 = vst.msk [vmem:[%s588 + $0x1b0] sm:$0xff] %vm390, %v2607
      %2768 = vst.msk [vmem:[%s588 + $0x1d0] sm:$0xff] %vm1241, %v2609
      %2769 = vst.msk [vmem:[%s588 + $0x1d8] sm:$0xff] %vm390, %v2609
      %2770 = vst.msk [vmem:[%s588 + $0x1f8] sm:$0xff] %vm1241, %v2611
      %2771 = vst.msk [vmem:[%s588 + $0x200] sm:$0xff] %vm390, %v2611
      %2772 = vst.msk [vmem:[%s588 + $0x220] sm:$0xff] %vm1241, %v2613
      %2773 = vst.msk [vmem:[%s588 + $0x228] sm:$0xff] %vm390, %v2613
      %2774 = vst.msk [vmem:[%s588 + $0x248] sm:$0xff] %vm1241, %v2615
      %2775 = vst.msk [vmem:[%s588 + $0x250] sm:$0xff] %vm390, %v2615
      %2776 = vst.msk [vmem:[%s588 + $0x270] sm:$0xff] %vm1241, %v2617
      %2777 = vst.msk [vmem:[%s588 + $0x278] sm:$0xff] %vm390, %v2617
      %2778 = vst.msk [vmem:[%s588 + $0x298] sm:$0xff] %vm1241, %v2619
      %2779 = vst.msk [vmem:[%s588 + $0x2a0] sm:$0xff] %vm390, %v2619
      %2780 = vst.msk [vmem:[%s588 + $0x2c0] sm:$0xff] %vm1241, %v2621
      %2781 = vst.msk [vmem:[%s588 + $0x2c8] sm:$0xff] %vm390, %v2621
      %2782 = vst.msk [vmem:[%s588 + $0x2e8] sm:$0xff] %vm1241, %v2623
      %2783 = vst.msk [vmem:[%s588 + $0x2f0] sm:$0xff] %vm390, %v2623
      %2784 = vst.msk [vmem:[%s588 + $0x310] sm:$0xff] %vm1241, %v2625
      %2785 = vst.msk [vmem:[%s588 + $0x318] sm:$0xff] %vm390, %v2625
      %2786 = vst.msk [vmem:[%s588 + $0x338] sm:$0xff] %vm1241, %v2627
      %2787 = vst.msk [vmem:[%s588 + $0x340] sm:$0xff] %vm390, %v2627
      %2788 = vst.msk [vmem:[%s588 + $0x360] sm:$0xff] %vm1241, %v2629
      %2789 = vst.msk [vmem:[%s588 + $0x368] sm:$0xff] %vm390, %v2629
      %2790 = vst.msk [vmem:[%s588 + $0x388] sm:$0xff] %vm1241, %v2631
      %2791 = vst.msk [vmem:[%s588 + $0x390] sm:$0xff] %vm390, %v2631
      %2792 = vst.msk [vmem:[%s588 + $0x3b0] sm:$0xff] %vm1241, %v2633
      %2793 = vst.msk [vmem:[%s588 + $0x3b8] sm:$0xff] %vm390, %v2633
      %2794 = vst.msk [vmem:[%s588 + $0x3d8] sm:$0xff] %vm1241, %v2635
      %2795 = vst.msk [vmem:[%s588 + $0x3e0] sm:$0xff] %vm390, %v2635
      %2796 = vst.msk [vmem:[%s588 + $0x400] sm:$0xff] %vm1241, %v2637
      %2797 = vst.msk [vmem:[%s588 + $0x408] sm:$0xff] %vm390, %v2637
      %2798 = vst.msk [vmem:[%s588 + $0x428] sm:$0xff] %vm1241, %v2639
      %2799 = vst.msk [vmem:[%s588 + $0x430] sm:$0xff] %vm390, %v2639
      %2800 = vst.msk [vmem:[%s588 + $0x450] sm:$0xff] %vm1241, %v2641
      %2801 = vst.msk [vmem:[%s588 + $0x458] sm:$0xff] %vm390, %v2641
      %2802 = vst.msk [vmem:[%s588 + $0x478] sm:$0xff] %vm1241, %v2643
      %2803 = vst.msk [vmem:[%s588 + $0x480] sm:$0xff] %vm390, %v2643
      %2804 = vst.msk [vmem:[%s588 + $0x4a0] sm:$0xff] %vm1241, %v2645
      %2805 = vst.msk [vmem:[%s588 + $0x4a8] sm:$0xff] %vm390, %v2645
      %2806 = vst.msk [vmem:[%s588 + $0x4c8] sm:$0xff] %vm1241, %v2647
      %2807 = vst.msk [vmem:[%s588 + $0x4d0] sm:$0xff] %vm390, %v2647
      %2808 = vst.msk [vmem:[%s588 + $0x4f0] sm:$0xff] %vm1241, %v2649
      %2809 = vst.msk [vmem:[%s588 + $0x4f8] sm:$0xff] %vm390, %v2649
      %2810 = vst.msk [vmem:[%s786 + $0x18] sm:$0xff] %vm1241, %v2587
      %2811 = vst.msk [vmem:[%s786 + $0x20] sm:$0xff] %vm390, %v2587
      %2812 = vst.msk [vmem:[%s786 + $0x40] sm:$0xff] %vm1241, %v2589
      %2813 = vst.msk [vmem:[%s786 + $0x48] sm:$0xff] %vm390, %v2589
      %2814 = vst.msk [vmem:[%s786 + $0x68] sm:$0xff] %vm1241, %v2591
      %2815 = vst.msk [vmem:[%s786 + $0x70] sm:$0xff] %vm390, %v2591
      %2816 = vst.msk [vmem:[%s786 + $0x90] sm:$0xff] %vm1241, %v2593
      %2817 = vst.msk [vmem:[%s786 + $0x98] sm:$0xff] %vm390, %v2593
      %2818 = vst.msk [vmem:[%s786 + $0xb8] sm:$0xff] %vm1241, %v2595
      %2819 = vst.msk [vmem:[%s786 + $0xc0] sm:$0xff] %vm390, %v2595
      %2820 = vst.msk [vmem:[%s786 + $0xe0] sm:$0xff] %vm1241, %v2597
      %2821 = vst.msk [vmem:[%s786 + $0xe8] sm:$0xff] %vm390, %v2597
      %2822 = vst.msk [vmem:[%s786 + $0x108] sm:$0xff] %vm1241, %v2599
      %2823 = vst.msk [vmem:[%s786 + $0x110] sm:$0xff] %vm390, %v2599
      %2824 = vst.msk [vmem:[%s786 + $0x130] sm:$0xff] %vm1241, %v2601
      %2825 = vst.msk [vmem:[%s786 + $0x138] sm:$0xff] %vm390, %v2601
      %2826 = vst.msk [vmem:[%s786 + $0x158] sm:$0xff] %vm1241, %v2603
      %2827 = vst.msk [vmem:[%s786 + $0x160] sm:$0xff] %vm390, %v2603
      %2828 = vst.msk [vmem:[%s786 + $0x180] sm:$0xff] %vm1241, %v2605
      %2829 = vst.msk [vmem:[%s786 + $0x188] sm:$0xff] %vm390, %v2605
      %2830 = vst.msk [vmem:[%s786 + $0x1a8] sm:$0xff] %vm1241, %v2607
      %2831 = vst.msk [vmem:[%s786 + $0x1b0] sm:$0xff] %vm390, %v2607
      %2832 = vst.msk [vmem:[%s786 + $0x1d0] sm:$0xff] %vm1241, %v2609
      %2833 = vst.msk [vmem:[%s786 + $0x1d8] sm:$0xff] %vm390, %v2609
      %2834 = vst.msk [vmem:[%s786 + $0x1f8] sm:$0xff] %vm1241, %v2611
      %2835 = vst.msk [vmem:[%s786 + $0x200] sm:$0xff] %vm390, %v2611
      %2836 = vst.msk [vmem:[%s786 + $0x220] sm:$0xff] %vm1241, %v2613
      %2837 = vst.msk [vmem:[%s786 + $0x228] sm:$0xff] %vm390, %v2613
      %2838 = vst.msk [vmem:[%s786 + $0x248] sm:$0xff] %vm1241, %v2615
      %2839 = vst.msk [vmem:[%s786 + $0x250] sm:$0xff] %vm390, %v2615
      %2840 = vst.msk [vmem:[%s786 + $0x270] sm:$0xff] %vm1241, %v2617
      %2841 = vst.msk [vmem:[%s786 + $0x278] sm:$0xff] %vm390, %v2617
      %2842 = vst.msk [vmem:[%s786 + $0x298] sm:$0xff] %vm1241, %v2619
      %2843 = vst.msk [vmem:[%s786 + $0x2a0] sm:$0xff] %vm390, %v2619
      %2844 = vst.msk [vmem:[%s786 + $0x2c0] sm:$0xff] %vm1241, %v2621
      %2845 = vst.msk [vmem:[%s786 + $0x2c8] sm:$0xff] %vm390, %v2621
      %2846 = vst.msk [vmem:[%s786 + $0x2e8] sm:$0xff] %vm1241, %v2623
      %2847 = vst.msk [vmem:[%s786 + $0x2f0] sm:$0xff] %vm390, %v2623
      %2848 = vst.msk [vmem:[%s786 + $0x310] sm:$0xff] %vm1241, %v2625
      %2849 = vst.msk [vmem:[%s786 + $0x318] sm:$0xff] %vm390, %v2625
      %2850 = vst.msk [vmem:[%s786 + $0x338] sm:$0xff] %vm1241, %v2627
      %2851 = vst.msk [vmem:[%s786 + $0x340] sm:$0xff] %vm390, %v2627
      %2852 = vst.msk [vmem:[%s786 + $0x360] sm:$0xff] %vm1241, %v2629
      %2853 = vst.msk [vmem:[%s786 + $0x368] sm:$0xff] %vm390, %v2629
      %2854 = vst.msk [vmem:[%s786 + $0x388] sm:$0xff] %vm1241, %v2631
      %2855 = vst.msk [vmem:[%s786 + $0x390] sm:$0xff] %vm390, %v2631
      %2856 = vst.msk [vmem:[%s786 + $0x3b0] sm:$0xff] %vm1241, %v2633
      %2857 = vst.msk [vmem:[%s786 + $0x3b8] sm:$0xff] %vm390, %v2633
      %2858 = vst.msk [vmem:[%s786 + $0x3d8] sm:$0xff] %vm1241, %v2635
      %2859 = vst.msk [vmem:[%s786 + $0x3e0] sm:$0xff] %vm390, %v2635
      %2860 = vst.msk [vmem:[%s786 + $0x400] sm:$0xff] %vm1241, %v2637
      %2861 = vst.msk [vmem:[%s786 + $0x408] sm:$0xff] %vm390, %v2637
      %2862 = vst.msk [vmem:[%s786 + $0x428] sm:$0xff] %vm1241, %v2639
      %2863 = vst.msk [vmem:[%s786 + $0x430] sm:$0xff] %vm390, %v2639
      %2864 = vst.msk [vmem:[%s786 + $0x450] sm:$0xff] %vm1241, %v2641
      %2865 = vst.msk [vmem:[%s786 + $0x458] sm:$0xff] %vm390, %v2641
      %2866 = vst.msk [vmem:[%s786 + $0x478] sm:$0xff] %vm1241, %v2643
      %2867 = vst.msk [vmem:[%s786 + $0x480] sm:$0xff] %vm390, %v2643
      %2868 = vst.msk [vmem:[%s786 + $0x4a0] sm:$0xff] %vm1241, %v2645
      %2869 = vst.msk [vmem:[%s786 + $0x4a8] sm:$0xff] %vm390, %v2645
      %2870 = vst.msk [vmem:[%s786 + $0x4c8] sm:$0xff] %vm1241, %v2647
      %2871 = vst.msk [vmem:[%s786 + $0x4d0] sm:$0xff] %vm390, %v2647
      %2872 = vst.msk [vmem:[%s786 + $0x4f0] sm:$0xff] %vm1241, %v2649
      %2873 = vst.msk [vmem:[%s786 + $0x4f8] sm:$0xff] %vm390, %v2649
      %2874 = vst.msk [vmem:[%s984 + $0x18] sm:$0xff] %vm1241, %v2587
      %2875 = vst.msk [vmem:[%s984 + $0x20] sm:$0xff] %vm390, %v2587
      %2876 = vst.msk [vmem:[%s984 + $0x40] sm:$0xff] %vm1241, %v2589
      %2877 = vst.msk [vmem:[%s984 + $0x48] sm:$0xff] %vm390, %v2589
      %2878 = vst.msk [vmem:[%s984 + $0x68] sm:$0xff] %vm1241, %v2591
      %2879 = vst.msk [vmem:[%s984 + $0x70] sm:$0xff] %vm390, %v2591
      %2880 = vst.msk [vmem:[%s984 + $0x90] sm:$0xff] %vm1241, %v2593
      %2881 = vst.msk [vmem:[%s984 + $0x98] sm:$0xff] %vm390, %v2593
      %2882 = vst.msk [vmem:[%s984 + $0xb8] sm:$0xff] %vm1241, %v2595
      %2883 = vst.msk [vmem:[%s984 + $0xc0] sm:$0xff] %vm390, %v2595
      %2884 = vst.msk [vmem:[%s984 + $0xe0] sm:$0xff] %vm1241, %v2597
      %2885 = vst.msk [vmem:[%s984 + $0xe8] sm:$0xff] %vm390, %v2597
      %2886 = vst.msk [vmem:[%s984 + $0x108] sm:$0xff] %vm1241, %v2599
      %2887 = vst.msk [vmem:[%s984 + $0x110] sm:$0xff] %vm390, %v2599
      %2888 = vst.msk [vmem:[%s984 + $0x130] sm:$0xff] %vm1241, %v2601
      %2889 = vst.msk [vmem:[%s984 + $0x138] sm:$0xff] %vm390, %v2601
      %2890 = vst.msk [vmem:[%s984 + $0x158] sm:$0xff] %vm1241, %v2603
      %2891 = vst.msk [vmem:[%s984 + $0x160] sm:$0xff] %vm390, %v2603
      %2892 = vst.msk [vmem:[%s984 + $0x180] sm:$0xff] %vm1241, %v2605
      %2893 = vst.msk [vmem:[%s984 + $0x188] sm:$0xff] %vm390, %v2605
      %2894 = vst.msk [vmem:[%s984 + $0x1a8] sm:$0xff] %vm1241, %v2607
      %2895 = vst.msk [vmem:[%s984 + $0x1b0] sm:$0xff] %vm390, %v2607
      %2896 = vst.msk [vmem:[%s984 + $0x1d0] sm:$0xff] %vm1241, %v2609
      %2897 = vst.msk [vmem:[%s984 + $0x1d8] sm:$0xff] %vm390, %v2609
      %2898 = vst.msk [vmem:[%s984 + $0x1f8] sm:$0xff] %vm1241, %v2611
      %2899 = vst.msk [vmem:[%s984 + $0x200] sm:$0xff] %vm390, %v2611
      %2900 = vst.msk [vmem:[%s984 + $0x220] sm:$0xff] %vm1241, %v2613
      %2901 = vst.msk [vmem:[%s984 + $0x228] sm:$0xff] %vm390, %v2613
      %2902 = vst.msk [vmem:[%s984 + $0x248] sm:$0xff] %vm1241, %v2615
      %2903 = vst.msk [vmem:[%s984 + $0x250] sm:$0xff] %vm390, %v2615
      %2904 = vst.msk [vmem:[%s984 + $0x270] sm:$0xff] %vm1241, %v2617
      %2905 = vst.msk [vmem:[%s984 + $0x278] sm:$0xff] %vm390, %v2617
      %2906 = vst.msk [vmem:[%s984 + $0x298] sm:$0xff] %vm1241, %v2619
      %2907 = vst.msk [vmem:[%s984 + $0x2a0] sm:$0xff] %vm390, %v2619
      %2908 = vst.msk [vmem:[%s984 + $0x2c0] sm:$0xff] %vm1241, %v2621
      %2909 = vst.msk [vmem:[%s984 + $0x2c8] sm:$0xff] %vm390, %v2621
      %2910 = vst.msk [vmem:[%s984 + $0x2e8] sm:$0xff] %vm1241, %v2623
      %2911 = vst.msk [vmem:[%s984 + $0x2f0] sm:$0xff] %vm390, %v2623
      %2912 = vst.msk [vmem:[%s984 + $0x310] sm:$0xff] %vm1241, %v2625
      %2913 = vst.msk [vmem:[%s984 + $0x318] sm:$0xff] %vm390, %v2625
      %2914 = vst.msk [vmem:[%s984 + $0x338] sm:$0xff] %vm1241, %v2627
      %2915 = vst.msk [vmem:[%s984 + $0x340] sm:$0xff] %vm390, %v2627
      %2916 = vst.msk [vmem:[%s984 + $0x360] sm:$0xff] %vm1241, %v2629
      %2917 = vst.msk [vmem:[%s984 + $0x368] sm:$0xff] %vm390, %v2629
      %2918 = vst.msk [vmem:[%s984 + $0x388] sm:$0xff] %vm1241, %v2631
      %2919 = vst.msk [vmem:[%s984 + $0x390] sm:$0xff] %vm390, %v2631
      %2920 = vst.msk [vmem:[%s984 + $0x3b0] sm:$0xff] %vm1241, %v2633
      %2921 = vst.msk [vmem:[%s984 + $0x3b8] sm:$0xff] %vm390, %v2633
      %2922 = vst.msk [vmem:[%s984 + $0x3d8] sm:$0xff] %vm1241, %v2635
      %2923 = vst.msk [vmem:[%s984 + $0x3e0] sm:$0xff] %vm390, %v2635
      %2924 = vst.msk [vmem:[%s984 + $0x400] sm:$0xff] %vm1241, %v2637
      %2925 = vst.msk [vmem:[%s984 + $0x408] sm:$0xff] %vm390, %v2637
      %2926 = vst.msk [vmem:[%s984 + $0x428] sm:$0xff] %vm1241, %v2639
      %2927 = vst.msk [vmem:[%s984 + $0x430] sm:$0xff] %vm390, %v2639
      %2928 = vst.msk [vmem:[%s984 + $0x450] sm:$0xff] %vm1241, %v2641
      %2929 = vst.msk [vmem:[%s984 + $0x458] sm:$0xff] %vm390, %v2641
      %2930 = vst.msk [vmem:[%s984 + $0x478] sm:$0xff] %vm1241, %v2643
      %2931 = vst.msk [vmem:[%s984 + $0x480] sm:$0xff] %vm390, %v2643
      %2932 = vst.msk [vmem:[%s984 + $0x4a0] sm:$0xff] %vm1241, %v2645
      %2933 = vst.msk [vmem:[%s984 + $0x4a8] sm:$0xff] %vm390, %v2645
      %2934 = vst.msk [vmem:[%s984 + $0x4c8] sm:$0xff] %vm1241, %v2647
      %2935 = vst.msk [vmem:[%s984 + $0x4d0] sm:$0xff] %vm390, %v2647
      %2936 = vst.msk [vmem:[%s984 + $0x4f0] sm:$0xff] %vm1241, %v2649
      %2937 = vst.msk [vmem:[%s984 + $0x4f8] sm:$0xff] %vm390, %v2649
      %s2938 = smul.u32 32, %s17
      %p2939 = scmp.lt.s32.totalorder %s16, 1
      %s2940 = scalar_select %p2939, %s16, 1
      %p2941 = scmp.lt.s32.totalorder %s2938, 31
      %s2942 = scalar_select %p2941, %s2938, 31
      %s2943 = smul.addr %s2942, 5
      %s2944 = smul.addr %s2940, 640
      %s2945 = sadd.s32 %s2943, %s2944
      %s2946 = smul.addr %s2945, 8
      %s2947 = scalar_lea.vmem %s1, %s2946
      // Predicated region
      $region25: #{yolo_layer_forward.1} parent=23 // pred_check
        %p2948 = pneg %p72
      $region26: #{yolo_layer_forward.1} parent=23 // pred_check_branch
        %2950 = sbr.rel (%p2948) target = $region28
      $region27: #{yolo_layer_forward.1} parent=23 // pred_region
        %s2951 = smul.u32 32, %s17
      $region28: #{yolo_layer_forward.1} parent=23 // pred_fallthru
        _
    $region24: #{yolo_layer_forward.1} parent=5 // pred_fallthru
      _
    %p2952 = scmp.le.s32.totalorder 2, %s7
    // Predicated region
    $region29: #{yolo_layer_forward.1} parent=5 // pred_check
      %p2953 = pneg %p2952
    $region30: #{yolo_layer_forward.1} parent=5 // pred_check_branch
      %2955 = sbr.rel (%p2953) target = $region32
    $region31: #{yolo_layer_forward.1} parent=5 // pred_region
      %s2956 = ssub.s32 %s7, 2
      // Predicated region
      $region33: #{yolo_layer_forward.1} parent=31 // pred_check
        %p2957 = pneg %p78
      $region34: #{yolo_layer_forward.1} parent=31 // pred_check_branch
        %2959 = sbr.rel (%p2957) target = $region36
      $region35: #{yolo_layer_forward.1} parent=31 // pred_region
        %s2960 = smul.u32 32, %s19
        %p2961 = scmp.lt.s32.totalorder %s18, 1
        %s2962 = scalar_select %p2961, %s18, 1
        %p2963 = scmp.lt.s32.totalorder %s2960, 31
        %s2964 = scalar_select %p2963, %s2960, 31
        %s2965 = smul.addr %s2964, 5
        %s2966 = smul.addr %s2962, 640
        %s2967 = sadd.s32 %s2965, %s2966
        %s2968 = smul.addr %s2967, 8
        %s2969 = scalar_lea.vmem %s1, %s2968
      $region36: #{yolo_layer_forward.1} parent=31 // pred_fallthru
        _
    $region32: #{yolo_layer_forward.1} parent=5 // pred_fallthru
      _
  $region6: #{yolo_layer_forward.1} parent=0 // loop_footer
    %s11 = sadd.s32 1, %s7
  $region7: #{yolo_layer_forward.1} parent=0 // loop_footer_branch
    %6 = sbr.rel target = $region3
  $region8: #{yolo_layer_forward.1} parent=0 // loop_exit
    _

</llo_original>
